<compile_context>
chip_gen: v5e
topology: v5e:2x2
jax: 0.10.0
libtpu: 0.0.40
codegen_flags: <defaults>
</compile_context>

<pallas_src>
import functools

import jax
import jax.numpy as jnp
from jax.experimental import pallas as pl
from jax.experimental.pallas import tpu as pltpu

LANE = 128          # feature dims are zero-padded up to the 128-wide lane axis
NEG_BIG = -1e30     # mask value for padded softmax columns
F32 = jnp.float32
BF16 = jnp.bfloat16


# ------------------------------ small helpers ------------------------------ #

def _round_up(v, m):
    return (v + m - 1) // m * m


def _row_tile(n):
    """Node-row tile: a multiple of 128 so adj tiles are lane-dense."""
    if n <= 256:
        return 128
    if n <= 4096:
        return 256
    # TODO(synk): for very large graphs, stream the kv axis of the non-local
    # attention (online softmax over kv blocks) instead of holding a whole
    # [tile, N] score row in VMEM.
    return 128


def _vmem_limit_bytes():
    cap = 128 << 20
    try:
        cap = int(pltpu.get_tpu_info().vmem_capacity_bytes)
    except Exception:
        pass
    # leave headroom: ~54 MiB on 64 MiB parts (v7x), 100 MiB on 128 MiB parts.
    return min(int(cap * 0.85), 100 << 20)


def _cparams(n_axes):
    return pltpu.CompilerParams(
        dimension_semantics=("parallel",) * n_axes,   # megacore-shardable
        vmem_limit_bytes=_vmem_limit_bytes())


def _pad2(x, rows, cols):
    return jnp.pad(x, ((0, rows - x.shape[0]), (0, cols - x.shape[1])))


# -------------------------------- kernels ---------------------------------- #

def _gcn_kernel(a_ref, h_ref, w_ref, o_ref, *, act, nout):
    """One row block of act((A_hat @ H) @ W); act is relu or masked softmax."""
    ah = jnp.dot(a_ref[...], h_ref[...], preferred_element_type=F32)
    hw = jnp.dot(ah.astype(BF16), w_ref[...], preferred_element_type=F32)
    if act == "relu":
        o_ref[...] = jnp.maximum(hw, 0.0).astype(o_ref.dtype)
    else:  # row softmax over the true `nout` feature columns
        if nout < hw.shape[1]:
            col = jax.lax.broadcasted_iota(jnp.int32, hw.shape, 1)
            hw = jnp.where(col < nout, hw, NEG_BIG)
        hw = hw - jnp.max(hw, axis=1, keepdims=True)
        e = jnp.exp(hw)
        inv = 1.0 / jnp.sum(e, axis=1, keepdims=True)   # exact [tile,1] divide
        o_ref[...] = (e * inv).astype(o_ref.dtype)


def _gcn_tpg_kernel(a_ref, h_ref, w_ref, wtpg_ref, btpg_ref, h2_ref, tpg_ref):
    """conv2 row block + fused theta/phi/g projection (one [128,384] matmul)."""
    ah = jnp.dot(a_ref[...], h_ref[...], preferred_element_type=F32)
    h2 = jnp.maximum(jnp.dot(ah.astype(BF16), w_ref[...],
                             preferred_element_type=F32), 0.0)
    h2b = h2.astype(BF16)
    h2_ref[...] = h2b
    tpg = jnp.dot(h2b, wtpg_ref[...], preferred_element_type=F32) + btpg_ref[...]
    tpg_ref[...] = tpg.astype(BF16)


def _nonlocal_dense_kernel(h2_ref, tpg_blk_ref, tpg_all_ref,
                           d1w_ref, d1b_ref, d2w_ref, d2b_ref,
                           h3_ref, d2o_ref, *, n_true):
    """Row block of H3 = H2 + softmax(theta phi^T) g, then dense1/dense2."""
    t = tpg_blk_ref[:, 0:LANE]                  # bf16, 1/sqrt(d) baked into theta
    p = tpg_all_ref[:, LANE:2 * LANE]           # bf16 [NP, 128]
    g = tpg_all_ref[:, 2 * LANE:3 * LANE]
    # Contract the feature axis directly (no explicit transpose).
    s = jax.lax.dot_general(t, p, (((1,), (1,)), ((), ())),
                            preferred_element_type=F32)       # [tile, NP]
    if n_true < s.shape[1]:                     # mask zero-padded key positions
        col = jax.lax.broadcasted_iota(jnp.int32, s.shape, 1)
        s = jnp.where(col < n_true, s, NEG_BIG)
    s = s - jnp.max(s, axis=1, keepdims=True)
    e = jnp.exp(s)
    inv = 1.0 / jnp.sum(e, axis=1, keepdims=True)             # exact [tile,1]
    attn = (e * inv).astype(BF16)
    ctx = jnp.dot(attn, g, preferred_element_type=F32)        # [tile, 128]
    h3 = h2_ref[...].astype(F32) + ctx
    h3b = h3.astype(BF16)
    h3_ref[...] = h3b
    d1 = jnp.maximum(jnp.dot(h3b, d1w_ref[...],
                             preferred_element_type=F32) + d1b_ref[...], 0.0)
    d2 = jnp.maximum(jnp.dot(d1.astype(BF16), d2w_ref[...],
                             preferred_element_type=F32) + d2b_ref[...], 0.0)
    d2o_ref[...] = d2.astype(BF16)


def _adj_kernel(hr_ref, hc_ref, adj_ref):
    """(i, j) tile of sigmoid(H3 @ H3^T); sigmoid via tanh; bf16 lane-dense."""
    gram = jax.lax.dot_general(hr_ref[...], hc_ref[...], (((1,), (1,)), ((), ())),
                               preferred_element_type=F32)
    adj_ref[...] = (0.5 * jnp.tanh(0.5 * gram) + 0.5).astype(adj_ref.dtype)


# ----------------------------- call builders ------------------------------- #

def _gcn_call(ap, h_in, w, *, act, nout, tm, out_dtype):
    np_ = ap.shape[0]
    kern = functools.partial(_gcn_kernel, act=act, nout=nout)
    return pl.pallas_call(
        kern,
        grid=(np_ // tm,),
        in_specs=[
            pl.BlockSpec((tm, np_), lambda i: (i, 0)),       # A_hat row block
            pl.BlockSpec((np_, LANE), lambda i: (0, 0)),     # full H, resident
            pl.BlockSpec((LANE, LANE), lambda i: (0, 0)),    # W, resident
        ],
        out_specs=pl.BlockSpec((tm, LANE), lambda i: (i, 0)),
        out_shape=jax.ShapeDtypeStruct((np_, LANE), out_dtype),
        compiler_params=_cparams(1),
    )(ap, h_in, w)


def _gcn_tpg_call(ap, h_in, w, wtpg, btpg, *, tm):
    np_ = ap.shape[0]
    return pl.pallas_call(
        _gcn_tpg_kernel,
        grid=(np_ // tm,),
        in_specs=[
            pl.BlockSpec((tm, np_), lambda i: (i, 0)),
            pl.BlockSpec((np_, LANE), lambda i: (0, 0)),
            pl.BlockSpec((LANE, LANE), lambda i: (0, 0)),
            pl.BlockSpec((LANE, 3 * LANE), lambda i: (0, 0)),
            pl.BlockSpec((1, 3 * LANE), lambda i: (0, 0)),
        ],
        out_specs=(
            pl.BlockSpec((tm, LANE), lambda i: (i, 0)),
            pl.BlockSpec((tm, 3 * LANE), lambda i: (i, 0)),
        ),
        out_shape=(
            jax.ShapeDtypeStruct((np_, LANE), BF16),       # H2
            jax.ShapeDtypeStruct((np_, 3 * LANE), BF16),   # [theta | phi | g]
        ),
        compiler_params=_cparams(1),
    )(ap, h_in, w, wtpg, btpg)


def _nonlocal_dense_call(h2, tpg, d1w, d1b, d2w, d2b, *, n_true, tm):
    np_ = h2.shape[0]
    kern = functools.partial(_nonlocal_dense_kernel, n_true=n_true)
    return pl.pallas_call(
        kern,
        grid=(np_ // tm,),
        in_specs=[
            pl.BlockSpec((tm, LANE), lambda i: (i, 0)),        # H2 row block
            pl.BlockSpec((tm, 3 * LANE), lambda i: (i, 0)),    # theta row block
            pl.BlockSpec((np_, 3 * LANE), lambda i: (0, 0)),   # full tpg (phi/g) resident
            pl.BlockSpec((LANE, LANE), lambda i: (0, 0)),
            pl.BlockSpec((1, LANE), lambda i: (0, 0)),
            pl.BlockSpec((LANE, LANE), lambda i: (0, 0)),
            pl.BlockSpec((1, LANE), lambda i: (0, 0)),
        ],
        out_specs=(
            pl.BlockSpec((tm, LANE), lambda i: (i, 0)),
            pl.BlockSpec((tm, LANE), lambda i: (i, 0)),
        ),
        out_shape=(
            jax.ShapeDtypeStruct((np_, LANE), BF16),   # H3
            jax.ShapeDtypeStruct((np_, LANE), BF16),   # dense2 output
        ),
        compiler_params=_cparams(1),
    )(h2, tpg, tpg, d1w, d1b, d2w, d2b)


def _adj_call(h3, *, tm):
    np_ = h3.shape[0]
    return pl.pallas_call(
        _adj_kernel,
        grid=(np_ // tm, np_ // tm),
        in_specs=[
            pl.BlockSpec((tm, LANE), lambda i, j: (i, 0)),
            pl.BlockSpec((tm, LANE), lambda i, j: (j, 0)),
        ],
        out_specs=pl.BlockSpec((tm, tm), lambda i, j: (i, j)),
        out_shape=jax.ShapeDtypeStruct((np_, np_), BF16),
        compiler_params=_cparams(2),
    )(h3, h3)


# ----------------------------- model wrapper ------------------------------- #

def densenet2_forward(a_hat, x, params):
    """a_hat = D^{-1/2}(A+I)D^{-1/2}; x = node features [N, nfeat]."""
    n = x.shape[0]
    nhid2 = params["conv2_w"].shape[1]
    nout = params["conv4_w"].shape[1]
    dims = (x.shape[1], params["conv1_w"].shape[1], nhid2,
            params["conv3_w"].shape[1], nout)
    if max(dims) > LANE:
        # TODO(synk): add a feature-axis grid for hidden sizes > 128.
        raise NotImplementedError("feature dims > 128 need a feature-axis grid")

    tm = _row_tile(n)
    np_ = _round_up(max(n, LANE), tm)

    # Lane/sublane-dense padding: node rows padded to a multiple of the row
    # tile (>= 128, so adj tiles are lane-dense), feature dims padded to 128.
    # Zero rows/cols are inert through the A_hat matmuls and relu; the NLGCN
    # softmax masks padded keys (biases make padded theta/phi/g rows non-zero)
    # and the final softmax masks padded feature columns.
    ap = _pad2(a_hat, np_, np_).astype(BF16)
    xp = _pad2(x, np_, LANE).astype(BF16)

    def wpad(w):
        return _pad2(w, LANE, LANE).astype(BF16)

    def bpad(b):
        return _pad2(b, 1, LANE).astype(F32)

    nl = params["nlgcn"]
    scale = 1.0 / float(nhid2) ** 0.5          # baked into theta (saves N^2 mul)
    wtpg = jnp.concatenate([_pad2(nl["wt"] * scale, LANE, LANE),
                            _pad2(nl["wp"], LANE, LANE),
                            _pad2(nl["wg"], LANE, LANE)], axis=1).astype(BF16)
    btpg = jnp.concatenate([_pad2(nl["bt"] * scale, 1, LANE),
                            _pad2(nl["bp"], 1, LANE),
                            _pad2(nl["bg"], 1, LANE)], axis=1).astype(F32)

    # conv1 + relu; conv2 + relu fused with the theta/phi/g projection
    h1 = _gcn_call(ap, xp, wpad(params["conv1_w"]), act="relu", nout=0,
                   tm=tm, out_dtype=BF16)
    h2, tpg = _gcn_tpg_call(ap, h1, wpad(params["conv2_w"]), wtpg, btpg, tm=tm)

    # NLGCN non-local block + dense1/dense2 (dec2 output is dead and skipped)
    h3, d2 = _nonlocal_dense_call(
        h2, tpg, wpad(params["dense1_w"]), bpad(params["dense1_b"]),
        wpad(params["dense2_w"]), bpad(params["dense2_b"]), n_true=n, tm=tm)

    # A = sigmoid(H3 @ H3^T), tiled over (i, j) row/col blocks, bf16 writeback
    adj = _adj_call(h3, tm=tm)

    # conv3 + relu; conv4 + softmax over the true nout columns
    a3 = _gcn_call(ap, d2, wpad(params["conv3_w"]), act="relu", nout=0,
                   tm=tm, out_dtype=BF16)
    att = _gcn_call(ap, a3, wpad(params["conv4_w"]), act="softmax", nout=nout,
                    tm=tm, out_dtype=F32)

    return att[:n, :nout], adj[:n, :n]


def init_params(key, nfeat, nhid1, nhid2, nhid3, nout):
    ks = jax.random.split(key, 14)   # no key reuse

    def lin(kw, kb, din, dout):
        s = 1.0 / (din ** 0.5)
        # nn.Linear weight stored pre-transposed as [din, dout]; bias [1, dout]
        w = jax.random.uniform(kw, (din, dout), jnp.float32, -s, s)
        b = jax.random.uniform(kb, (1, dout), jnp.float32, -s, s)
        return w, b

    d1w, d1b = lin(ks[4], ks[5], nhid2, nhid2)
    d2w, d2b = lin(ks[6], ks[7], nhid2, nhid2)
    twt, tbt = lin(ks[8], ks[9], nhid2, nhid2)
    twp, tbp = lin(ks[10], ks[11], nhid2, nhid2)
    twg, tbg = lin(ks[12], ks[13], nhid2, nhid2)

    return {
        "conv1_w": jax.random.uniform(ks[0], (nfeat, nhid1), jnp.float32) * 0.2,
        "conv2_w": jax.random.uniform(ks[1], (nhid1, nhid2), jnp.float32) * 0.2,
        "conv3_w": jax.random.uniform(ks[2], (nhid2, nhid3), jnp.float32) * 0.2,
        "conv4_w": jax.random.uniform(ks[3], (nhid3, nout), jnp.float32) * 0.2,
        "dense1_w": d1w, "dense1_b": d1b,
        "dense2_w": d2w, "dense2_b": d2b,
        "nlgcn": {"wt": twt, "bt": tbt, "wp": twp, "bp": tbp, "wg": twg, "bg": tbg},
    }


def normalize_adjacency(a):
    n = a.shape[0]
    a_hat = a + jnp.eye(n, dtype=jnp.float32)
    d_inv_sqrt = 1.0 / jnp.sqrt(jnp.sum(a_hat, axis=1))
    return a_hat * d_inv_sqrt[:, None] * d_inv_sqrt[None, :]


# --------------------------------- main ------------------------------------ #

if __name__ == "__main__":
    N, nfeat, nhid1, nhid2, nhid3, nout = 8, 16, 32, 32, 16, 8

    key = jax.random.PRNGKey(0)
    k_adj, k_x, k_par = jax.random.split(key, 3)

    # Deterministic random symmetric adjacency.
    a_rand = (jax.random.uniform(k_adj, (N, N)) > 0.6).astype(jnp.float32)
    a = jnp.maximum(a_rand, a_rand.T) * (1.0 - jnp.eye(N, dtype=jnp.float32))
    a_hat = normalize_adjacency(a)

    x = jax.random.normal(k_x, (N, nfeat), dtype=jnp.float32)
    params = init_params(k_par, nfeat, nhid1, nhid2, nhid3, nout)

    att, a_rec = jax.jit(densenet2_forward)(a_hat, x, params)
    jax.block_until_ready((att, a_rec))

    assert att.shape == (N, nout) and a_rec.shape == (N, N)
    assert jnp.all(jnp.isfinite(att)) and jnp.all(jnp.isfinite(a_rec))
    # softmax rows of Att sum to 1 (exact [tile,1] normalizer divide)
    assert jnp.allclose(jnp.sum(att, axis=1), 1.0, atol=1e-2)
    # adj is sigmoid via 0.5*tanh(0.5*x)+0.5, stored bf16: exactly in [0, 1]
    assert jnp.all(a_rec >= 0.0) and jnp.all(a_rec <= 1.0 + 1e-3)

    print("KERNEL_OK")
</pallas_src>

<mosaic_0001>
module attributes {stable_mosaic.version = 11 : i64} {
  func.func @_gcn_kernel(%arg0: i32, %arg1: memref<128x128xbf16, #tpu.memory_space<vmem>>, %arg2: memref<128x128xbf16, #tpu.memory_space<vmem>>, %arg3: memref<128x128xbf16, #tpu.memory_space<vmem>>, %arg4: memref<128x128xbf16, #tpu.memory_space<vmem>>) attributes {dimension_semantics = [#tpu.dimension_semantics<parallel>], iteration_bounds = array<i64: 1>, scalar_prefetch = 0 : i64, scratch_operands = 0 : i64, tpu.core_type = #tpu.core_type<tc>, window_params = [{transform_indices = @transform_0, window_bounds = array<i64: 128, 128>}, {pipeline_mode = #tpu.pipeline_mode<synchronous>, transform_indices = @transform_1, window_bounds = array<i64: 128, 128>}, {pipeline_mode = #tpu.pipeline_mode<synchronous>, transform_indices = @transform_2, window_bounds = array<i64: 128, 128>}, {transform_indices = @transform_3, window_bounds = array<i64: 128, 128>}]} {
    %c0 = arith.constant 0 : index
    %c0_0 = arith.constant 0 : index
    %0 = vector.load %arg1[%c0, %c0_0] : memref<128x128xbf16, #tpu.memory_space<vmem>>, vector<128x128xbf16>
    %c0_1 = arith.constant 0 : index
    %c0_2 = arith.constant 0 : index
    %1 = vector.load %arg2[%c0_1, %c0_2] : memref<128x128xbf16, #tpu.memory_space<vmem>>, vector<128x128xbf16>
    %cst = arith.constant dense<0.000000e+00> : vector<128x128xf32>
    %2 = tpu.matmul %0, %1, %cst {dimension_numbers = #tpu.dot_dimension_numbers<[1], [0], [0], [1], [0, 0, 1, 1], [], []>} : vector<128x128xbf16>, vector<128x128xbf16>, vector<128x128xf32> -> vector<128x128xf32>
    %3 = arith.truncf %2 : vector<128x128xf32> to vector<128x128xbf16>
    %c0_3 = arith.constant 0 : index
    %c0_4 = arith.constant 0 : index
    %4 = vector.load %arg3[%c0_3, %c0_4] : memref<128x128xbf16, #tpu.memory_space<vmem>>, vector<128x128xbf16>
    %cst_5 = arith.constant dense<0.000000e+00> : vector<128x128xf32>
    %5 = tpu.matmul %3, %4, %cst_5 {dimension_numbers = #tpu.dot_dimension_numbers<[1], [0], [0], [1], [0, 0, 1, 1], [], []>} : vector<128x128xbf16>, vector<128x128xbf16>, vector<128x128xf32> -> vector<128x128xf32>
    %cst_6 = arith.constant 0.000000e+00 : f32
    %6 = vector.broadcast %cst_6 : f32 to vector<128x128xf32>
    %7 = arith.maximumf %5, %6 : vector<128x128xf32>
    %8 = arith.truncf %7 : vector<128x128xf32> to vector<128x128xbf16>
    %c0_7 = arith.constant 0 : index
    %c0_8 = arith.constant 0 : index
    %9 = vector.load %arg4[%c0_7, %c0_8] : memref<128x128xbf16, #tpu.memory_space<vmem>>, vector<128x128xbf16>
    tpu.vector_store %arg4[%c0_7, %c0_8], %8 {strides = array<i32>} : memref<128x128xbf16, #tpu.memory_space<vmem>>, vector<128x128xbf16>,
    return
  }
  func.func @transform_0(%arg0: i32) -> (i32, i32) {
    %c0_i32 = arith.constant 0 : i32
    %c0_i32_0 = arith.constant 0 : i32
    return %arg0, %c0_i32 : i32, i32
  }
  func.func @transform_1(%arg0: i32) -> (i32, i32) {
    %c0_i32 = arith.constant 0 : i32
    %c0_i32_0 = arith.constant 0 : i32
    %c0_i32_1 = arith.constant 0 : i32
    return %c0_i32, %c0_i32_0 : i32, i32
  }
  func.func @transform_2(%arg0: i32) -> (i32, i32) {
    %c0_i32 = arith.constant 0 : i32
    %c0_i32_0 = arith.constant 0 : i32
    %c0_i32_1 = arith.constant 0 : i32
    return %c0_i32, %c0_i32_0 : i32, i32
  }
  func.func @transform_3(%arg0: i32) -> (i32, i32) {
    %c0_i32 = arith.constant 0 : i32
    %c0_i32_0 = arith.constant 0 : i32
    return %arg0, %c0_i32 : i32, i32
  }
}

module attributes {stable_mosaic.version = 11 : i64} {
  func.func @_gcn_tpg_kernel(%arg0: i32, %arg1: memref<128x128xbf16, #tpu.memory_space<vmem>>, %arg2: memref<128x128xbf16, #tpu.memory_space<vmem>>, %arg3: memref<128x128xbf16, #tpu.memory_space<vmem>>, %arg4: memref<128x384xbf16, #tpu.memory_space<vmem>>, %arg5: memref<1x384xf32, #tpu.memory_space<vmem>>, %arg6: memref<128x128xbf16, #tpu.memory_space<vmem>>, %arg7: memref<128x384xbf16, #tpu.memory_space<vmem>>) attributes {dimension_semantics = [#tpu.dimension_semantics<parallel>], iteration_bounds = array<i64: 1>, scalar_prefetch = 0 : i64, scratch_operands = 0 : i64, tpu.core_type = #tpu.core_type<tc>, window_params = [{transform_indices = @transform_0, window_bounds = array<i64: 128, 128>}, {pipeline_mode = #tpu.pipeline_mode<synchronous>, transform_indices = @transform_1, window_bounds = array<i64: 128, 128>}, {pipeline_mode = #tpu.pipeline_mode<synchronous>, transform_indices = @transform_2, window_bounds = array<i64: 128, 128>}, {pipeline_mode = #tpu.pipeline_mode<synchronous>, transform_indices = @transform_3, window_bounds = array<i64: 128, 384>}, {pipeline_mode = #tpu.pipeline_mode<synchronous>, transform_indices = @transform_4, window_bounds = array<i64: 1, 384>}, {transform_indices = @transform_5, window_bounds = array<i64: 128, 128>}, {transform_indices = @transform_6, window_bounds = array<i64: 128, 384>}]} {
    %c0 = arith.constant 0 : index
    %c0_0 = arith.constant 0 : index
    %0 = vector.load %arg1[%c0, %c0_0] : memref<128x128xbf16, #tpu.memory_space<vmem>>, vector<128x128xbf16>
    %c0_1 = arith.constant 0 : index
    %c0_2 = arith.constant 0 : index
    %1 = vector.load %arg2[%c0_1, %c0_2] : memref<128x128xbf16, #tpu.memory_space<vmem>>, vector<128x128xbf16>
    %cst = arith.constant dense<0.000000e+00> : vector<128x128xf32>
    %2 = tpu.matmul %0, %1, %cst {dimension_numbers = #tpu.dot_dimension_numbers<[1], [0], [0], [1], [0, 0, 1, 1], [], []>} : vector<128x128xbf16>, vector<128x128xbf16>, vector<128x128xf32> -> vector<128x128xf32>
    %3 = arith.truncf %2 : vector<128x128xf32> to vector<128x128xbf16>
    %c0_3 = arith.constant 0 : index
    %c0_4 = arith.constant 0 : index
    %4 = vector.load %arg3[%c0_3, %c0_4] : memref<128x128xbf16, #tpu.memory_space<vmem>>, vector<128x128xbf16>
    %cst_5 = arith.constant dense<0.000000e+00> : vector<128x128xf32>
    %5 = tpu.matmul %3, %4, %cst_5 {dimension_numbers = #tpu.dot_dimension_numbers<[1], [0], [0], [1], [0, 0, 1, 1], [], []>} : vector<128x128xbf16>, vector<128x128xbf16>, vector<128x128xf32> -> vector<128x128xf32>
    %cst_6 = arith.constant 0.000000e+00 : f32
    %6 = vector.broadcast %cst_6 : f32 to vector<128x128xf32>
    %7 = arith.maximumf %5, %6 : vector<128x128xf32>
    %8 = arith.truncf %7 : vector<128x128xf32> to vector<128x128xbf16>
    %c0_7 = arith.constant 0 : index
    %c0_8 = arith.constant 0 : index
    %9 = vector.load %arg6[%c0_7, %c0_8] : memref<128x128xbf16, #tpu.memory_space<vmem>>, vector<128x128xbf16>
    tpu.vector_store %arg6[%c0_7, %c0_8], %8 {strides = array<i32>} : memref<128x128xbf16, #tpu.memory_space<vmem>>, vector<128x128xbf16>,
    %c0_9 = arith.constant 0 : index
    %c0_10 = arith.constant 0 : index
    %10 = vector.load %arg4[%c0_9, %c0_10] : memref<128x384xbf16, #tpu.memory_space<vmem>>, vector<128x384xbf16>
    %cst_11 = arith.constant dense<0.000000e+00> : vector<128x384xf32>
    %11 = tpu.matmul %8, %10, %cst_11 {dimension_numbers = #tpu.dot_dimension_numbers<[1], [0], [0], [1], [0, 0, 1, 1], [], []>} : vector<128x128xbf16>, vector<128x384xbf16>, vector<128x384xf32> -> vector<128x384xf32>
    %c0_12 = arith.constant 0 : index
    %c0_13 = arith.constant 0 : index
    %12 = vector.load %arg5[%c0_12, %c0_13] : memref<1x384xf32, #tpu.memory_space<vmem>>, vector<1x384xf32>
    %13 = vector.broadcast %12 : vector<1x384xf32> to vector<128x384xf32>
    %14 = arith.addf %11, %13 : vector<128x384xf32>
    %15 = arith.truncf %14 : vector<128x384xf32> to vector<128x384xbf16>
    %c0_14 = arith.constant 0 : index
    %c0_15 = arith.constant 0 : index
    %16 = vector.load %arg7[%c0_14, %c0_15] : memref<128x384xbf16, #tpu.memory_space<vmem>>, vector<128x384xbf16>
    tpu.vector_store %arg7[%c0_14, %c0_15], %15 {strides = array<i32>} : memref<128x384xbf16, #tpu.memory_space<vmem>>, vector<128x384xbf16>,
    return
  }
  func.func @transform_0(%arg0: i32) -> (i32, i32) {
    %c0_i32 = arith.constant 0 : i32
    %c0_i32_0 = arith.constant 0 : i32
    return %arg0, %c0_i32 : i32, i32
  }
  func.func @transform_1(%arg0: i32) -> (i32, i32) {
    %c0_i32 = arith.constant 0 : i32
    %c0_i32_0 = arith.constant 0 : i32
    %c0_i32_1 = arith.constant 0 : i32
    return %c0_i32, %c0_i32_0 : i32, i32
  }
  func.func @transform_2(%arg0: i32) -> (i32, i32) {
    %c0_i32 = arith.constant 0 : i32
    %c0_i32_0 = arith.constant 0 : i32
    %c0_i32_1 = arith.constant 0 : i32
    return %c0_i32, %c0_i32_0 : i32, i32
  }
  func.func @transform_3(%arg0: i32) -> (i32, i32) {
    %c0_i32 = arith.constant 0 : i32
    %c0_i32_0 = arith.constant 0 : i32
    %c0_i32_1 = arith.constant 0 : i32
    return %c0_i32, %c0_i32_0 : i32, i32
  }
  func.func @transform_4(%arg0: i32) -> (i32, i32) {
    %c0_i32 = arith.constant 0 : i32
    %c0_i32_0 = arith.constant 0 : i32
    %c0_i32_1 = arith.constant 0 : i32
    return %c0_i32, %c0_i32_0 : i32, i32
  }
  func.func @transform_5(%arg0: i32) -> (i32, i32) {
    %c0_i32 = arith.constant 0 : i32
    %c0_i32_0 = arith.constant 0 : i32
    return %arg0, %c0_i32 : i32, i32
  }
  func.func @transform_6(%arg0: i32) -> (i32, i32) {
    %c0_i32 = arith.constant 0 : i32
    %c0_i32_0 = arith.constant 0 : i32
    return %arg0, %c0_i32 : i32, i32
  }
}

module attributes {stable_mosaic.version = 11 : i64} {
  func.func @_nonlocal_dense_kernel(%arg0: i32, %arg1: memref<128x128xbf16, #tpu.memory_space<vmem>>, %arg2: memref<128x384xbf16, #tpu.memory_space<vmem>>, %arg3: memref<128x384xbf16, #tpu.memory_space<vmem>>, %arg4: memref<128x128xbf16, #tpu.memory_space<vmem>>, %arg5: memref<1x128xf32, #tpu.memory_space<vmem>>, %arg6: memref<128x128xbf16, #tpu.memory_space<vmem>>, %arg7: memref<1x128xf32, #tpu.memory_space<vmem>>, %arg8: memref<128x128xbf16, #tpu.memory_space<vmem>>, %arg9: memref<128x128xbf16, #tpu.memory_space<vmem>>) attributes {dimension_semantics = [#tpu.dimension_semantics<parallel>], iteration_bounds = array<i64: 1>, scalar_prefetch = 0 : i64, scratch_operands = 0 : i64, tpu.core_type = #tpu.core_type<tc>, window_params = [{transform_indices = @transform_0, window_bounds = array<i64: 128, 128>}, {transform_indices = @transform_1, window_bounds = array<i64: 128, 384>}, {pipeline_mode = #tpu.pipeline_mode<synchronous>, transform_indices = @transform_2, window_bounds = array<i64: 128, 384>}, {pipeline_mode = #tpu.pipeline_mode<synchronous>, transform_indices = @transform_3, window_bounds = array<i64: 128, 128>}, {pipeline_mode = #tpu.pipeline_mode<synchronous>, transform_indices = @transform_4, window_bounds = array<i64: 1, 128>}, {pipeline_mode = #tpu.pipeline_mode<synchronous>, transform_indices = @transform_5, window_bounds = array<i64: 128, 128>}, {pipeline_mode = #tpu.pipeline_mode<synchronous>, transform_indices = @transform_6, window_bounds = array<i64: 1, 128>}, {transform_indices = @transform_7, window_bounds = array<i64: 128, 128>}, {transform_indices = @transform_8, window_bounds = array<i64: 128, 128>}]} {
    %c0 = arith.constant 0 : index
    %c0_0 = arith.constant 0 : index
    %0 = vector.load %arg2[%c0, %c0_0] : memref<128x384xbf16, #tpu.memory_space<vmem>>, vector<128x128xbf16>
    %c0_1 = arith.constant 0 : index
    %c128 = arith.constant 128 : index
    %1 = vector.load %arg3[%c0_1, %c128] : memref<128x384xbf16, #tpu.memory_space<vmem>>, vector<128x128xbf16>
    %c0_2 = arith.constant 0 : index
    %c256 = arith.constant 256 : index
    %2 = vector.load %arg3[%c0_2, %c256] : memref<128x384xbf16, #tpu.memory_space<vmem>>, vector<128x128xbf16>
    %cst = arith.constant dense<0.000000e+00> : vector<128x128xf32>
    %3 = tpu.matmul %0, %1, %cst {dimension_numbers = #tpu.dot_dimension_numbers<[1], [1], [0], [0], [0, 0, 1, 0], [], []>} : vector<128x128xbf16>, vector<128x128xbf16>, vector<128x128xf32> -> vector<128x128xf32>
    %4 = tpu.iota {dimensions = array<i32: 1>} : vector<128x128xi32>
    %c8_i32 = arith.constant 8 : i32
    %5 = vector.broadcast %c8_i32 : i32 to vector<128x128xi32>
    %6 = arith.cmpi slt, %4, %5 : vector<128x128xi32>
    %cst_3 = arith.constant -1.000000e+30 : f32
    %7 = vector.broadcast %cst_3 : f32 to vector<128x128xf32>
    %8 = arith.select %6, %3, %7 : vector<128x128xi1>, vector<128x128xf32>
    %cst_4 = arith.constant dense<0xFF800000> : vector<128xf32>
    %9 = vector.multi_reduction <maximumf>, %8, %cst_4 [1] : vector<128x128xf32> to vector<128xf32>
    %10 = vector.shape_cast %9 : vector<128xf32> to vector<128x1xf32>
    %11 = vector.broadcast %10 : vector<128x1xf32> to vector<128x128xf32>
    %12 = arith.subf %8, %11 : vector<128x128xf32>
    %13 = math.exp %12 : vector<128x128xf32>
    %cst_5 = arith.constant dense<0.000000e+00> : vector<128xf32>
    %14 = vector.multi_reduction <add>, %13, %cst_5 [1] : vector<128x128xf32> to vector<128xf32>
    %15 = vector.shape_cast %14 : vector<128xf32> to vector<128x1xf32>
    %cst_6 = arith.constant 1.000000e+00 : f32
    %16 = vector.broadcast %cst_6 : f32 to vector<128x1xf32>
    %17 = arith.divf %16, %15 : vector<128x1xf32>
    %18 = vector.broadcast %17 : vector<128x1xf32> to vector<128x128xf32>
    %19 = arith.mulf %13, %18 : vector<128x128xf32>
    %20 = arith.truncf %19 : vector<128x128xf32> to vector<128x128xbf16>
    %cst_7 = arith.constant dense<0.000000e+00> : vector<128x128xf32>
    %21 = tpu.matmul %20, %2, %cst_7 {dimension_numbers = #tpu.dot_dimension_numbers<[1], [0], [0], [1], [0, 0, 1, 1], [], []>} : vector<128x128xbf16>, vector<128x128xbf16>, vector<128x128xf32> -> vector<128x128xf32>
    %c0_8 = arith.constant 0 : index
    %c0_9 = arith.constant 0 : index
    %22 = vector.load %arg1[%c0_8, %c0_9] : memref<128x128xbf16, #tpu.memory_space<vmem>>, vector<128x128xbf16>
    %23 = arith.extf %22 : vector<128x128xbf16> to vector<128x128xf32>
    %24 = arith.addf %23, %21 : vector<128x128xf32>
    %25 = arith.truncf %24 : vector<128x128xf32> to vector<128x128xbf16>
    %c0_10 = arith.constant 0 : index
    %c0_11 = arith.constant 0 : index
    %26 = vector.load %arg8[%c0_10, %c0_11] : memref<128x128xbf16, #tpu.memory_space<vmem>>, vector<128x128xbf16>
    tpu.vector_store %arg8[%c0_10, %c0_11], %25 {strides = array<i32>} : memref<128x128xbf16, #tpu.memory_space<vmem>>, vector<128x128xbf16>,
    %c0_12 = arith.constant 0 : index
    %c0_13 = arith.constant 0 : index
    %27 = vector.load %arg4[%c0_12, %c0_13] : memref<128x128xbf16, #tpu.memory_space<vmem>>, vector<128x128xbf16>
    %cst_14 = arith.constant dense<0.000000e+00> : vector<128x128xf32>
    %28 = tpu.matmul %25, %27, %cst_14 {dimension_numbers = #tpu.dot_dimension_numbers<[1], [0], [0], [1], [0, 0, 1, 1], [], []>} : vector<128x128xbf16>, vector<128x128xbf16>, vector<128x128xf32> -> vector<128x128xf32>
    %c0_15 = arith.constant 0 : index
    %c0_16 = arith.constant 0 : index
    %29 = vector.load %arg5[%c0_15, %c0_16] : memref<1x128xf32, #tpu.memory_space<vmem>>, vector<1x128xf32>
    %30 = vector.broadcast %29 : vector<1x128xf32> to vector<128x128xf32>
    %31 = arith.addf %28, %30 : vector<128x128xf32>
    %cst_17 = arith.constant 0.000000e+00 : f32
    %32 = vector.broadcast %cst_17 : f32 to vector<128x128xf32>
    %33 = arith.maximumf %31, %32 : vector<128x128xf32>
    %34 = arith.truncf %33 : vector<128x128xf32> to vector<128x128xbf16>
    %c0_18 = arith.constant 0 : index
    %c0_19 = arith.constant 0 : index
    %35 = vector.load %arg6[%c0_18, %c0_19] : memref<128x128xbf16, #tpu.memory_space<vmem>>, vector<128x128xbf16>
    %cst_20 = arith.constant dense<0.000000e+00> : vector<128x128xf32>
    %36 = tpu.matmul %34, %35, %cst_20 {dimension_numbers = #tpu.dot_dimension_numbers<[1], [0], [0], [1], [0, 0, 1, 1], [], []>} : vector<128x128xbf16>, vector<128x128xbf16>, vector<128x128xf32> -> vector<128x128xf32>
    %c0_21 = arith.constant 0 : index
    %c0_22 = arith.constant 0 : index
    %37 = vector.load %arg7[%c0_21, %c0_22] : memref<1x128xf32, #tpu.memory_space<vmem>>, vector<1x128xf32>
    %38 = vector.broadcast %37 : vector<1x128xf32> to vector<128x128xf32>
    %39 = arith.addf %36, %38 : vector<128x128xf32>
    %cst_23 = arith.constant 0.000000e+00 : f32
    %40 = vector.broadcast %cst_23 : f32 to vector<128x128xf32>
    %41 = arith.maximumf %39, %40 : vector<128x128xf32>
    %42 = arith.truncf %41 : vector<128x128xf32> to vector<128x128xbf16>
    %c0_24 = arith.constant 0 : index
    %c0_25 = arith.constant 0 : index
    %43 = vector.load %arg9[%c0_24, %c0_25] : memref<128x128xbf16, #tpu.memory_space<vmem>>, vector<128x128xbf16>
    tpu.vector_store %arg9[%c0_24, %c0_25], %42 {strides = array<i32>} : memref<128x128xbf16, #tpu.memory_space<vmem>>, vector<128x128xbf16>,
    return
  }
  func.func @transform_0(%arg0: i32) -> (i32, i32) {
    %c0_i32 = arith.constant 0 : i32
    %c0_i32_0 = arith.constant 0 : i32
    return %arg0, %c0_i32 : i32, i32
  }
  func.func @transform_1(%arg0: i32) -> (i32, i32) {
    %c0_i32 = arith.constant 0 : i32
    %c0_i32_0 = arith.constant 0 : i32
    return %arg0, %c0_i32 : i32, i32
  }
  func.func @transform_2(%arg0: i32) -> (i32, i32) {
    %c0_i32 = arith.constant 0 : i32
    %c0_i32_0 = arith.constant 0 : i32
    %c0_i32_1 = arith.constant 0 : i32
    return %c0_i32, %c0_i32_0 : i32, i32
  }
  func.func @transform_3(%arg0: i32) -> (i32, i32) {
    %c0_i32 = arith.constant 0 : i32
    %c0_i32_0 = arith.constant 0 : i32
    %c0_i32_1 = arith.constant 0 : i32
    return %c0_i32, %c0_i32_0 : i32, i32
  }
  func.func @transform_4(%arg0: i32) -> (i32, i32) {
    %c0_i32 = arith.constant 0 : i32
    %c0_i32_0 = arith.constant 0 : i32
    %c0_i32_1 = arith.constant 0 : i32
    return %c0_i32, %c0_i32_0 : i32, i32
  }
  func.func @transform_5(%arg0: i32) -> (i32, i32) {
    %c0_i32 = arith.constant 0 : i32
    %c0_i32_0 = arith.constant 0 : i32
    %c0_i32_1 = arith.constant 0 : i32
    return %c0_i32, %c0_i32_0 : i32, i32
  }
  func.func @transform_6(%arg0: i32) -> (i32, i32) {
    %c0_i32 = arith.constant 0 : i32
    %c0_i32_0 = arith.constant 0 : i32
    %c0_i32_1 = arith.constant 0 : i32
    return %c0_i32, %c0_i32_0 : i32, i32
  }
  func.func @transform_7(%arg0: i32) -> (i32, i32) {
    %c0_i32 = arith.constant 0 : i32
    %c0_i32_0 = arith.constant 0 : i32
    return %arg0, %c0_i32 : i32, i32
  }
  func.func @transform_8(%arg0: i32) -> (i32, i32) {
    %c0_i32 = arith.constant 0 : i32
    %c0_i32_0 = arith.constant 0 : i32
    return %arg0, %c0_i32 : i32, i32
  }
}

module attributes {stable_mosaic.version = 11 : i64} {
  func.func @_gcn_kernel(%arg0: i32, %arg1: memref<128x128xbf16, #tpu.memory_space<vmem>>, %arg2: memref<128x128xbf16, #tpu.memory_space<vmem>>, %arg3: memref<128x128xbf16, #tpu.memory_space<vmem>>, %arg4: memref<128x128xf32, #tpu.memory_space<vmem>>) attributes {dimension_semantics = [#tpu.dimension_semantics<parallel>], iteration_bounds = array<i64: 1>, scalar_prefetch = 0 : i64, scratch_operands = 0 : i64, tpu.core_type = #tpu.core_type<tc>, window_params = [{transform_indices = @transform_0, window_bounds = array<i64: 128, 128>}, {pipeline_mode = #tpu.pipeline_mode<synchronous>, transform_indices = @transform_1, window_bounds = array<i64: 128, 128>}, {pipeline_mode = #tpu.pipeline_mode<synchronous>, transform_indices = @transform_2, window_bounds = array<i64: 128, 128>}, {transform_indices = @transform_3, window_bounds = array<i64: 128, 128>}]} {
    %c0 = arith.constant 0 : index
    %c0_0 = arith.constant 0 : index
    %0 = vector.load %arg1[%c0, %c0_0] : memref<128x128xbf16, #tpu.memory_space<vmem>>, vector<128x128xbf16>
    %c0_1 = arith.constant 0 : index
    %c0_2 = arith.constant 0 : index
    %1 = vector.load %arg2[%c0_1, %c0_2] : memref<128x128xbf16, #tpu.memory_space<vmem>>, vector<128x128xbf16>
    %cst = arith.constant dense<0.000000e+00> : vector<128x128xf32>
    %2 = tpu.matmul %0, %1, %cst {dimension_numbers = #tpu.dot_dimension_numbers<[1], [0], [0], [1], [0, 0, 1, 1], [], []>} : vector<128x128xbf16>, vector<128x128xbf16>, vector<128x128xf32> -> vector<128x128xf32>
    %3 = arith.truncf %2 : vector<128x128xf32> to vector<128x128xbf16>
    %c0_3 = arith.constant 0 : index
    %c0_4 = arith.constant 0 : index
    %4 = vector.load %arg3[%c0_3, %c0_4] : memref<128x128xbf16, #tpu.memory_space<vmem>>, vector<128x128xbf16>
    %cst_5 = arith.constant dense<0.000000e+00> : vector<128x128xf32>
    %5 = tpu.matmul %3, %4, %cst_5 {dimension_numbers = #tpu.dot_dimension_numbers<[1], [0], [0], [1], [0, 0, 1, 1], [], []>} : vector<128x128xbf16>, vector<128x128xbf16>, vector<128x128xf32> -> vector<128x128xf32>
    %6 = tpu.iota {dimensions = array<i32: 1>} : vector<128x128xi32>
    %c8_i32 = arith.constant 8 : i32
    %7 = vector.broadcast %c8_i32 : i32 to vector<128x128xi32>
    %8 = arith.cmpi slt, %6, %7 : vector<128x128xi32>
    %cst_6 = arith.constant -1.000000e+30 : f32
    %9 = vector.broadcast %cst_6 : f32 to vector<128x128xf32>
    %10 = arith.select %8, %5, %9 : vector<128x128xi1>, vector<128x128xf32>
    %cst_7 = arith.constant dense<0xFF800000> : vector<128xf32>
    %11 = vector.multi_reduction <maximumf>, %10, %cst_7 [1] : vector<128x128xf32> to vector<128xf32>
    %12 = vector.shape_cast %11 : vector<128xf32> to vector<128x1xf32>
    %13 = vector.broadcast %12 : vector<128x1xf32> to vector<128x128xf32>
    %14 = arith.subf %10, %13 : vector<128x128xf32>
    %15 = math.exp %14 : vector<128x128xf32>
    %cst_8 = arith.constant dense<0.000000e+00> : vector<128xf32>
    %16 = vector.multi_reduction <add>, %15, %cst_8 [1] : vector<128x128xf32> to vector<128xf32>
    %17 = vector.shape_cast %16 : vector<128xf32> to vector<128x1xf32>
    %cst_9 = arith.constant 1.000000e+00 : f32
    %18 = vector.broadcast %cst_9 : f32 to vector<128x1xf32>
    %19 = arith.divf %18, %17 : vector<128x1xf32>
    %20 = vector.broadcast %19 : vector<128x1xf32> to vector<128x128xf32>
    %21 = arith.mulf %15, %20 : vector<128x128xf32>
    %c0_10 = arith.constant 0 : index
    %c0_11 = arith.constant 0 : index
    %22 = vector.load %arg4[%c0_10, %c0_11] : memref<128x128xf32, #tpu.memory_space<vmem>>, vector<128x128xf32>
    tpu.vector_store %arg4[%c0_10, %c0_11], %21 {strides = array<i32>} : memref<128x128xf32, #tpu.memory_space<vmem>>, vector<128x128xf32>,
    return
  }
  func.func @transform_0(%arg0: i32) -> (i32, i32) {
    %c0_i32 = arith.constant 0 : i32
    %c0_i32_0 = arith.constant 0 : i32
    return %arg0, %c0_i32 : i32, i32
  }
  func.func @transform_1(%arg0: i32) -> (i32, i32) {
    %c0_i32 = arith.constant 0 : i32
    %c0_i32_0 = arith.constant 0 : i32
    %c0_i32_1 = arith.constant 0 : i32
    return %c0_i32, %c0_i32_0 : i32, i32
  }
  func.func @transform_2(%arg0: i32) -> (i32, i32) {
    %c0_i32 = arith.constant 0 : i32
    %c0_i32_0 = arith.constant 0 : i32
    %c0_i32_1 = arith.constant 0 : i32
    return %c0_i32, %c0_i32_0 : i32, i32
  }
  func.func @transform_3(%arg0: i32) -> (i32, i32) {
    %c0_i32 = arith.constant 0 : i32
    %c0_i32_0 = arith.constant 0 : i32
    return %arg0, %c0_i32 : i32, i32
  }
}

module attributes {stable_mosaic.version = 11 : i64} {
  func.func @_adj_kernel(%arg0: i32, %arg1: i32, %arg2: memref<128x128xbf16, #tpu.memory_space<vmem>>, %arg3: memref<128x128xbf16, #tpu.memory_space<vmem>>, %arg4: memref<128x128xbf16, #tpu.memory_space<vmem>>) attributes {dimension_semantics = [#tpu.dimension_semantics<parallel>, #tpu.dimension_semantics<parallel>], iteration_bounds = array<i64: 1, 1>, scalar_prefetch = 0 : i64, scratch_operands = 0 : i64, tpu.core_type = #tpu.core_type<tc>, window_params = [{transform_indices = @transform_0, window_bounds = array<i64: 128, 128>}, {transform_indices = @transform_1, window_bounds = array<i64: 128, 128>}, {transform_indices = @transform_2, window_bounds = array<i64: 128, 128>}]} {
    %c0 = arith.constant 0 : index
    %c0_0 = arith.constant 0 : index
    %0 = vector.load %arg2[%c0, %c0_0] : memref<128x128xbf16, #tpu.memory_space<vmem>>, vector<128x128xbf16>
    %c0_1 = arith.constant 0 : index
    %c0_2 = arith.constant 0 : index
    %1 = vector.load %arg3[%c0_1, %c0_2] : memref<128x128xbf16, #tpu.memory_space<vmem>>, vector<128x128xbf16>
    %cst = arith.constant dense<0.000000e+00> : vector<128x128xf32>
    %2 = tpu.matmul %0, %1, %cst {dimension_numbers = #tpu.dot_dimension_numbers<[1], [1], [0], [0], [0, 0, 1, 0], [], []>} : vector<128x128xbf16>, vector<128x128xbf16>, vector<128x128xf32> -> vector<128x128xf32>
    %cst_3 = arith.constant 5.000000e-01 : f32
    %3 = vector.broadcast %cst_3 : f32 to vector<128x128xf32>
    %4 = arith.mulf %3, %2 : vector<128x128xf32>
    %5 = math.tanh %4 : vector<128x128xf32>
    %cst_4 = arith.constant 5.000000e-01 : f32
    %6 = vector.broadcast %cst_4 : f32 to vector<128x128xf32>
    %7 = arith.mulf %6, %5 : vector<128x128xf32>
    %cst_5 = arith.constant 5.000000e-01 : f32
    %8 = vector.broadcast %cst_5 : f32 to vector<128x128xf32>
    %9 = arith.addf %7, %8 : vector<128x128xf32>
    %10 = arith.truncf %9 : vector<128x128xf32> to vector<128x128xbf16>
    %c0_6 = arith.constant 0 : index
    %c0_7 = arith.constant 0 : index
    %11 = vector.load %arg4[%c0_6, %c0_7] : memref<128x128xbf16, #tpu.memory_space<vmem>>, vector<128x128xbf16>
    tpu.vector_store %arg4[%c0_6, %c0_7], %10 {strides = array<i32>} : memref<128x128xbf16, #tpu.memory_space<vmem>>, vector<128x128xbf16>,
    return
  }
  func.func @transform_0(%arg0: i32, %arg1: i32) -> (i32, i32) {
    %c0_i32 = arith.constant 0 : i32
    %c0_i32_0 = arith.constant 0 : i32
    return %arg0, %c0_i32 : i32, i32
  }
  func.func @transform_1(%arg0: i32, %arg1: i32) -> (i32, i32) {
    %c0_i32 = arith.constant 0 : i32
    %c0_i32_0 = arith.constant 0 : i32
    return %arg1, %c0_i32 : i32, i32
  }
  func.func @transform_2(%arg0: i32, %arg1: i32) -> (i32, i32) {
    %c0_i32 = arith.constant 0 : i32
    return %arg0, %arg1 : i32, i32
  }
}

</mosaic_0001>

<llo_original>
// kernel: densenet2_forward.6
$region0: #{densenet2_forward.6}
  #allocation0 [shape = 'u32[]', space=smem, size = 0x4, offset = 0x4, fixed_abs, tag = 'smem constant byte address 0x4 - core index']
  #allocation1 [shape = 'u32[72,128]{1,0:T(1,128)}', space=vmem, size = 0x9000, scoped, tag = 'internal scratch']
  %s0 = inlined_call_operand.vmem [shape: bf16[128,128], index: 0, kind: input, shape index: {}]
  %s1 = inlined_call_operand.vmem [shape: bf16[128,128], index: 1, kind: input, shape index: {}]
  %s2 = inlined_call_operand.vmem [shape: bf16[128,128], index: 2, kind: input, shape index: {}]
  %s3 = inlined_call_operand.vmem [shape: bf16[128,128], index: 3, kind: output, shape index: {}]
  %s4 = sld [smem:[#allocation0]]
  $region22: #{densenet2_forward.6} parent=0
    _
  %s6 = ssub.s32 1, %s4
  %s7 = scalar_select 0, %s6, %s4
  // Predicated region
  $region2: #{densenet2_forward.6} parent=0 // pred_check
    _
  $region3: #{densenet2_forward.6} parent=0 // pred_check_branch
    %9 = sbr.rel (0) target = $region5
  $region4: #{densenet2_forward.6} parent=0 // pred_region
    _
  $region5: #{densenet2_forward.6} parent=0 // pred_fallthru
    _
  // Predicated region
  $region6: #{densenet2_forward.6} parent=0 // pred_check
    _
  $region7: #{densenet2_forward.6} parent=0 // pred_check_branch
    %11 = sbr.rel (0) target = $region9
  $region8: #{densenet2_forward.6} parent=0 // pred_region
    _
  $region9: #{densenet2_forward.6} parent=0 // pred_fallthru
    _
  // Predicated region
  $region10: #{densenet2_forward.6} parent=0 // pred_check
    _
  $region11: #{densenet2_forward.6} parent=0 // pred_check_branch
    %13 = sbr.rel (0) target = $region13
  $region12: #{densenet2_forward.6} parent=0 // pred_region
    _
  $region13: #{densenet2_forward.6} parent=0 // pred_fallthru
    _
  %v14 = vld [vmem:[%s0] sm:$0xf]
  %v15 = vld [vmem:[%s0 + $0x4] sm:$0xf]
  %v16 = vld [vmem:[%s0 + $0x8] sm:$0xf]
  %v17 = vld [vmem:[%s0 + $0xc] sm:$0xf]
  %v18 = vld [vmem:[%s0 + $0x10] sm:$0xf]
  %v19 = vld [vmem:[%s0 + $0x14] sm:$0xf]
  %v20 = vld [vmem:[%s0 + $0x18] sm:$0xf]
  %v21 = vld [vmem:[%s0 + $0x1c] sm:$0xf]
  %v22 = vld [vmem:[%s0 + $0x20] sm:$0xf]
  %v23 = vld [vmem:[%s0 + $0x24] sm:$0xf]
  %v24 = vld [vmem:[%s0 + $0x28] sm:$0xf]
  %v25 = vld [vmem:[%s0 + $0x2c] sm:$0xf]
  %v26 = vld [vmem:[%s0 + $0x30] sm:$0xf]
  %v27 = vld [vmem:[%s0 + $0x34] sm:$0xf]
  %v28 = vld [vmem:[%s0 + $0x38] sm:$0xf]
  %v29 = vld [vmem:[%s0 + $0x3c] sm:$0xf]
  %v30 = vld [vmem:[%s1] sm:$0xf]
  %v31 = vld [vmem:[%s1 + $0x4] sm:$0xf]
  %v32 = vld [vmem:[%s1 + $0x8] sm:$0xf]
  %v33 = vld [vmem:[%s1 + $0xc] sm:$0xf]
  %v34 = vld [vmem:[%s1 + $0x10] sm:$0xf]
  %v35 = vld [vmem:[%s1 + $0x14] sm:$0xf]
  %v36 = vld [vmem:[%s1 + $0x18] sm:$0xf]
  %v37 = vld [vmem:[%s1 + $0x1c] sm:$0xf]
  %v38 = vld [vmem:[%s1 + $0x20] sm:$0xf]
  %v39 = vld [vmem:[%s1 + $0x24] sm:$0xf]
  %v40 = vld [vmem:[%s1 + $0x28] sm:$0xf]
  %v41 = vld [vmem:[%s1 + $0x2c] sm:$0xf]
  %v42 = vld [vmem:[%s1 + $0x30] sm:$0xf]
  %v43 = vld [vmem:[%s1 + $0x34] sm:$0xf]
  %v44 = vld [vmem:[%s1 + $0x38] sm:$0xf]
  %v45 = vld [vmem:[%s1 + $0x3c] sm:$0xf]
  %v62 = vunpack.c.l.b16 %v14
  %v63 = vunpack.c.l.b16 %v15
  %v64 = vunpack.c.l.b16 %v16
  %v65 = vunpack.c.l.b16 %v17
  %v66 = vunpack.c.l.b16 %v18
  %v67 = vunpack.c.l.b16 %v19
  %v68 = vunpack.c.l.b16 %v20
  %v69 = vunpack.c.l.b16 %v21
  %v70 = vunpack.c.l.b16 %v22
  %v71 = vunpack.c.l.b16 %v23
  %v72 = vunpack.c.l.b16 %v24
  %v73 = vunpack.c.l.b16 %v25
  %v74 = vunpack.c.l.b16 %v26
  %v75 = vunpack.c.l.b16 %v27
  %v76 = vunpack.c.l.b16 %v28
  %v77 = vunpack.c.l.b16 %v29
  %v78 = vpack.c.b16 %v63, %v62
  %v79 = vpack.c.b16 %v65, %v64
  %v80 = vpack.c.b16 %v67, %v66
  %v81 = vpack.c.b16 %v69, %v68
  %v82 = vpack.c.b16 %v71, %v70
  %v83 = vpack.c.b16 %v73, %v72
  %v84 = vpack.c.b16 %v75, %v74
  %v85 = vpack.c.b16 %v77, %v76
  %v110 = vunpack.c.l.b16 %v30
  %v111 = vunpack.c.l.b16 %v31
  %v112 = vunpack.c.l.b16 %v32
  %v113 = vunpack.c.l.b16 %v33
  %v114 = vunpack.c.l.b16 %v34
  %v115 = vunpack.c.l.b16 %v35
  %v116 = vunpack.c.l.b16 %v36
  %v117 = vunpack.c.l.b16 %v37
  %v118 = vunpack.c.l.b16 %v38
  %v119 = vunpack.c.l.b16 %v39
  %v120 = vunpack.c.l.b16 %v40
  %v121 = vunpack.c.l.b16 %v41
  %v122 = vunpack.c.l.b16 %v42
  %v123 = vunpack.c.l.b16 %v43
  %v124 = vunpack.c.l.b16 %v44
  %v125 = vunpack.c.l.b16 %v45
  %v126 = vpack.c.b16 %v111, %v110
  %v127 = vpack.c.b16 %v113, %v112
  %v128 = vpack.c.b16 %v115, %v114
  %v129 = vpack.c.b16 %v117, %v116
  %v130 = vpack.c.b16 %v119, %v118
  %v131 = vpack.c.b16 %v121, %v120
  %v132 = vpack.c.b16 %v123, %v122
  %v133 = vpack.c.b16 %v125, %v124
  %142 = vmatpush.bf16.msra.mxu0 %v133
  %143 = vmatpush.bf16.msra.mxu0 %v132
  %144 = vmatpush.bf16.msra.mxu0 %v131
  %145 = vmatpush.bf16.msra.mxu0 %v130
  %146 = vmatpush.bf16.msra.mxu0 %v129
  %147 = vmatpush.bf16.msra.mxu0 %v128
  %148 = vmatpush.bf16.msra.mxu0 %v127
  %149 = vmatpush.bf16.msra.mxu0 %v126
  %150 = vmatmul.bf16.gmra.mxu0 %v78
  %v151 = vpop.f32.mrf.mxu0
  %v152 = vadd.f32 0.0, %v151
  %v153 = vpop.f32.mrf.mxu0
  %v154 = vadd.f32 0.0, %v153
  %155 = vmatmul.bf16.gmra.mxu0 %v79
  %v156 = vpop.f32.mrf.mxu0
  %v157 = vadd.f32 0.0, %v156
  %v158 = vpop.f32.mrf.mxu0
  %v159 = vadd.f32 0.0, %v158
  %160 = vmatmul.bf16.gmra.mxu0 %v80
  %v161 = vpop.f32.mrf.mxu0
  %v162 = vadd.f32 0.0, %v161
  %v163 = vpop.f32.mrf.mxu0
  %v164 = vadd.f32 0.0, %v163
  %165 = vmatmul.bf16.gmra.mxu0 %v81
  %v166 = vpop.f32.mrf.mxu0
  %v167 = vadd.f32 0.0, %v166
  %v168 = vpop.f32.mrf.mxu0
  %v169 = vadd.f32 0.0, %v168
  %170 = vmatmul.bf16.gmra.mxu0 %v82
  %v171 = vpop.f32.mrf.mxu0
  %v172 = vadd.f32 0.0, %v171
  %v173 = vpop.f32.mrf.mxu0
  %v174 = vadd.f32 0.0, %v173
  %175 = vmatmul.bf16.gmra.mxu0 %v83
  %v176 = vpop.f32.mrf.mxu0
  %v177 = vadd.f32 0.0, %v176
  %v178 = vpop.f32.mrf.mxu0
  %v179 = vadd.f32 0.0, %v178
  %180 = vmatmul.bf16.gmra.mxu0 %v84
  %v181 = vpop.f32.mrf.mxu0
  %v182 = vadd.f32 0.0, %v181
  %v183 = vpop.f32.mrf.mxu0
  %v184 = vadd.f32 0.0, %v183
  %185 = vmatmul.bf16.gmra.mxu0 %v85
  %v186 = vpop.f32.mrf.mxu0
  %v187 = vadd.f32 0.0, %v186
  %v188 = vpop.f32.mrf.mxu0
  %v189 = vadd.f32 0.0, %v188
  %190 = vdwg.mxu0
  %v191 = vpack.c.bf16 %v154, %v152
  %v192 = vpack.c.bf16 %v159, %v157
  %v193 = vpack.c.bf16 %v164, %v162
  %v194 = vpack.c.bf16 %v169, %v167
  %v195 = vpack.c.bf16 %v174, %v172
  %v196 = vpack.c.bf16 %v179, %v177
  %v197 = vpack.c.bf16 %v184, %v182
  %v198 = vpack.c.bf16 %v189, %v187
  %v199 = vld [vmem:[%s2] sm:$0xf]
  %v200 = vld [vmem:[%s2 + $0x4] sm:$0xf]
  %v201 = vld [vmem:[%s2 + $0x8] sm:$0xf]
  %v202 = vld [vmem:[%s2 + $0xc] sm:$0xf]
  %v203 = vld [vmem:[%s2 + $0x10] sm:$0xf]
  %v204 = vld [vmem:[%s2 + $0x14] sm:$0xf]
  %v205 = vld [vmem:[%s2 + $0x18] sm:$0xf]
  %v206 = vld [vmem:[%s2 + $0x1c] sm:$0xf]
  %v207 = vld [vmem:[%s2 + $0x20] sm:$0xf]
  %v208 = vld [vmem:[%s2 + $0x24] sm:$0xf]
  %v209 = vld [vmem:[%s2 + $0x28] sm:$0xf]
  %v210 = vld [vmem:[%s2 + $0x2c] sm:$0xf]
  %v211 = vld [vmem:[%s2 + $0x30] sm:$0xf]
  %v212 = vld [vmem:[%s2 + $0x34] sm:$0xf]
  %v213 = vld [vmem:[%s2 + $0x38] sm:$0xf]
  %v214 = vld [vmem:[%s2 + $0x3c] sm:$0xf]
  %v231 = vunpack.c.l.b16 %v199
  %v232 = vunpack.c.l.b16 %v200
  %v233 = vunpack.c.l.b16 %v201
  %v234 = vunpack.c.l.b16 %v202
  %v235 = vunpack.c.l.b16 %v203
  %v236 = vunpack.c.l.b16 %v204
  %v237 = vunpack.c.l.b16 %v205
  %v238 = vunpack.c.l.b16 %v206
  %v239 = vunpack.c.l.b16 %v207
  %v240 = vunpack.c.l.b16 %v208
  %v241 = vunpack.c.l.b16 %v209
  %v242 = vunpack.c.l.b16 %v210
  %v243 = vunpack.c.l.b16 %v211
  %v244 = vunpack.c.l.b16 %v212
  %v245 = vunpack.c.l.b16 %v213
  %v246 = vunpack.c.l.b16 %v214
  %v247 = vpack.c.b16 %v232, %v231
  %v248 = vpack.c.b16 %v234, %v233
  %v249 = vpack.c.b16 %v236, %v235
  %v250 = vpack.c.b16 %v238, %v237
  %v251 = vpack.c.b16 %v240, %v239
  %v252 = vpack.c.b16 %v242, %v241
  %v253 = vpack.c.b16 %v244, %v243
  %v254 = vpack.c.b16 %v246, %v245
  %263 = vmatpush.bf16.msra.mxu0 %v254
  %264 = vmatpush.bf16.msra.mxu0 %v253
  %265 = vmatpush.bf16.msra.mxu0 %v252
  %266 = vmatpush.bf16.msra.mxu0 %v251
  %267 = vmatpush.bf16.msra.mxu0 %v250
  %268 = vmatpush.bf16.msra.mxu0 %v249
  %269 = vmatpush.bf16.msra.mxu0 %v248
  %270 = vmatpush.bf16.msra.mxu0 %v247
  %271 = vmatmul.bf16.gmra.mxu0 %v191
  %v272 = vpop.f32.mrf.mxu0
  %v273 = vadd.f32 0.0, %v272
  %v274 = vpop.f32.mrf.mxu0
  %v275 = vadd.f32 0.0, %v274
  %276 = vmatmul.bf16.gmra.mxu0 %v192
  %v277 = vpop.f32.mrf.mxu0
  %v278 = vadd.f32 0.0, %v277
  %v279 = vpop.f32.mrf.mxu0
  %v280 = vadd.f32 0.0, %v279
  %281 = vmatmul.bf16.gmra.mxu0 %v193
  %v282 = vpop.f32.mrf.mxu0
  %v283 = vadd.f32 0.0, %v282
  %v284 = vpop.f32.mrf.mxu0
  %v285 = vadd.f32 0.0, %v284
  %286 = vmatmul.bf16.gmra.mxu0 %v194
  %v287 = vpop.f32.mrf.mxu0
  %v288 = vadd.f32 0.0, %v287
  %v289 = vpop.f32.mrf.mxu0
  %v290 = vadd.f32 0.0, %v289
  %291 = vmatmul.bf16.gmra.mxu0 %v195
  %v292 = vpop.f32.mrf.mxu0
  %v293 = vadd.f32 0.0, %v292
  %v294 = vpop.f32.mrf.mxu0
  %v295 = vadd.f32 0.0, %v294
  %296 = vmatmul.bf16.gmra.mxu0 %v196
  %v297 = vpop.f32.mrf.mxu0
  %v298 = vadd.f32 0.0, %v297
  %v299 = vpop.f32.mrf.mxu0
  %v300 = vadd.f32 0.0, %v299
  %301 = vmatmul.bf16.gmra.mxu0 %v197
  %v302 = vpop.f32.mrf.mxu0
  %v303 = vadd.f32 0.0, %v302
  %v304 = vpop.f32.mrf.mxu0
  %v305 = vadd.f32 0.0, %v304
  %306 = vmatmul.bf16.gmra.mxu0 %v198
  %v307 = vpop.f32.mrf.mxu0
  %v308 = vadd.f32 0.0, %v307
  %v309 = vpop.f32.mrf.mxu0
  %v310 = vadd.f32 0.0, %v309
  %311 = vdwg.mxu0
  %v312 = vmax.f32 %v273, 0.0
  %v313 = vmax.f32 %v275, 0.0
  %v314 = vmax.f32 %v278, 0.0
  %v315 = vmax.f32 %v280, 0.0
  %v316 = vmax.f32 %v283, 0.0
  %v317 = vmax.f32 %v285, 0.0
  %v318 = vmax.f32 %v288, 0.0
  %v319 = vmax.f32 %v290, 0.0
  %v320 = vmax.f32 %v293, 0.0
  %v321 = vmax.f32 %v295, 0.0
  %v322 = vmax.f32 %v298, 0.0
  %v323 = vmax.f32 %v300, 0.0
  %v324 = vmax.f32 %v303, 0.0
  %v325 = vmax.f32 %v305, 0.0
  %v326 = vmax.f32 %v308, 0.0
  %v327 = vmax.f32 %v310, 0.0
  %v328 = vpack.c.bf16 %v312, %v312
  %v329 = vpack.c.bf16 %v313, %v313
  %v330 = vpack.c.bf16 %v314, %v314
  %v331 = vpack.c.bf16 %v315, %v315
  %v332 = vpack.c.bf16 %v316, %v316
  %v333 = vpack.c.bf16 %v317, %v317
  %v334 = vpack.c.bf16 %v318, %v318
  %v335 = vpack.c.bf16 %v319, %v319
  %v336 = vpack.c.bf16 %v320, %v320
  %v337 = vpack.c.bf16 %v321, %v321
  %v338 = vpack.c.bf16 %v322, %v322
  %v339 = vpack.c.bf16 %v323, %v323
  %v340 = vpack.c.bf16 %v324, %v324
  %v341 = vpack.c.bf16 %v325, %v325
  %v342 = vpack.c.bf16 %v326, %v326
  %v343 = vpack.c.bf16 %v327, %v327
  %344 = vst [vmem:[%s3] sm:$0xf] %v328
  %345 = vst [vmem:[%s3 + $0x4] sm:$0xf] %v329
  %346 = vst [vmem:[%s3 + $0x8] sm:$0xf] %v330
  %347 = vst [vmem:[%s3 + $0xc] sm:$0xf] %v331
  %348 = vst [vmem:[%s3 + $0x10] sm:$0xf] %v332
  %349 = vst [vmem:[%s3 + $0x14] sm:$0xf] %v333
  %350 = vst [vmem:[%s3 + $0x18] sm:$0xf] %v334
  %351 = vst [vmem:[%s3 + $0x1c] sm:$0xf] %v335
  %352 = vst [vmem:[%s3 + $0x20] sm:$0xf] %v336
  %353 = vst [vmem:[%s3 + $0x24] sm:$0xf] %v337
  %354 = vst [vmem:[%s3 + $0x28] sm:$0xf] %v338
  %355 = vst [vmem:[%s3 + $0x2c] sm:$0xf] %v339
  %356 = vst [vmem:[%s3 + $0x30] sm:$0xf] %v340
  %357 = vst [vmem:[%s3 + $0x34] sm:$0xf] %v341
  %358 = vst [vmem:[%s3 + $0x38] sm:$0xf] %v342
  %359 = vst [vmem:[%s3 + $0x3c] sm:$0xf] %v343
  // Predicated region
  $region14: #{densenet2_forward.6} parent=0 // pred_check
    _
  $region15: #{densenet2_forward.6} parent=0 // pred_check_branch
    %361 = sbr.rel (0) target = $region17
  $region16: #{densenet2_forward.6} parent=0 // pred_region
    _
  $region17: #{densenet2_forward.6} parent=0 // pred_fallthru
    _
  // Predicated region
  $region18: #{densenet2_forward.6} parent=0 // pred_check
    _
  $region19: #{densenet2_forward.6} parent=0 // pred_check_branch
    %363 = sbr.rel (0) target = $region21
  $region20: #{densenet2_forward.6} parent=0 // pred_region
    _
  $region21: #{densenet2_forward.6} parent=0 // pred_fallthru
    _

// kernel: densenet2_forward.7
$region0: #{densenet2_forward.7}
  #allocation0 [shape = 'u32[]', space=smem, size = 0x4, offset = 0x4, fixed_abs, tag = 'smem constant byte address 0x4 - core index']
  #allocation1 [shape = 'u32[72,128]{1,0:T(1,128)}', space=vmem, size = 0x9000, scoped, tag = 'internal scratch']
  %s0 = inlined_call_operand.vmem [shape: bf16[128,128], index: 0, kind: input, shape index: {}]
  %s1 = inlined_call_operand.vmem [shape: bf16[128,128], index: 1, kind: input, shape index: {}]
  %s2 = inlined_call_operand.vmem [shape: bf16[128,128], index: 2, kind: input, shape index: {}]
  %s3 = inlined_call_operand.vmem [shape: bf16[128,384], index: 3, kind: input, shape index: {}]
  %s4 = inlined_call_operand.vmem [shape: f32[1,384], index: 4, kind: input, shape index: {}]
  %s5 = inlined_call_operand.vmem [shape: bf16[128,128], index: 5, kind: output, shape index: {0}]
  %s6 = inlined_call_operand.vmem [shape: bf16[128,384], index: 6, kind: output, shape index: {1}]
  %7 = xla_tuple %s5, %s6
  %s8 = sld [smem:[#allocation0]]
  $region38: #{densenet2_forward.7} parent=0
    _
  %s10 = ssub.s32 1, %s8
  %s11 = scalar_select 0, %s10, %s8
  // Predicated region
  $region2: #{densenet2_forward.7} parent=0 // pred_check
    _
  $region3: #{densenet2_forward.7} parent=0 // pred_check_branch
    %13 = sbr.rel (0) target = $region5
  $region4: #{densenet2_forward.7} parent=0 // pred_region
    _
  $region5: #{densenet2_forward.7} parent=0 // pred_fallthru
    _
  // Predicated region
  $region6: #{densenet2_forward.7} parent=0 // pred_check
    _
  $region7: #{densenet2_forward.7} parent=0 // pred_check_branch
    %15 = sbr.rel (0) target = $region9
  $region8: #{densenet2_forward.7} parent=0 // pred_region
    _
  $region9: #{densenet2_forward.7} parent=0 // pred_fallthru
    _
  // Predicated region
  $region10: #{densenet2_forward.7} parent=0 // pred_check
    _
  $region11: #{densenet2_forward.7} parent=0 // pred_check_branch
    %17 = sbr.rel (0) target = $region13
  $region12: #{densenet2_forward.7} parent=0 // pred_region
    _
  $region13: #{densenet2_forward.7} parent=0 // pred_fallthru
    _
  // Predicated region
  $region14: #{densenet2_forward.7} parent=0 // pred_check
    _
  $region15: #{densenet2_forward.7} parent=0 // pred_check_branch
    %19 = sbr.rel (0) target = $region17
  $region16: #{densenet2_forward.7} parent=0 // pred_region
    _
  $region17: #{densenet2_forward.7} parent=0 // pred_fallthru
    _
  // Predicated region
  $region18: #{densenet2_forward.7} parent=0 // pred_check
    _
  $region19: #{densenet2_forward.7} parent=0 // pred_check_branch
    %21 = sbr.rel (0) target = $region21
  $region20: #{densenet2_forward.7} parent=0 // pred_region
    _
  $region21: #{densenet2_forward.7} parent=0 // pred_fallthru
    _
  %v22 = vld [vmem:[%s0] sm:$0xf]
  %v23 = vld [vmem:[%s0 + $0x4] sm:$0xf]
  %v24 = vld [vmem:[%s0 + $0x8] sm:$0xf]
  %v25 = vld [vmem:[%s0 + $0xc] sm:$0xf]
  %v26 = vld [vmem:[%s0 + $0x10] sm:$0xf]
  %v27 = vld [vmem:[%s0 + $0x14] sm:$0xf]
  %v28 = vld [vmem:[%s0 + $0x18] sm:$0xf]
  %v29 = vld [vmem:[%s0 + $0x1c] sm:$0xf]
  %v30 = vld [vmem:[%s0 + $0x20] sm:$0xf]
  %v31 = vld [vmem:[%s0 + $0x24] sm:$0xf]
  %v32 = vld [vmem:[%s0 + $0x28] sm:$0xf]
  %v33 = vld [vmem:[%s0 + $0x2c] sm:$0xf]
  %v34 = vld [vmem:[%s0 + $0x30] sm:$0xf]
  %v35 = vld [vmem:[%s0 + $0x34] sm:$0xf]
  %v36 = vld [vmem:[%s0 + $0x38] sm:$0xf]
  %v37 = vld [vmem:[%s0 + $0x3c] sm:$0xf]
  %v38 = vld [vmem:[%s1] sm:$0xf]
  %v39 = vld [vmem:[%s1 + $0x4] sm:$0xf]
  %v40 = vld [vmem:[%s1 + $0x8] sm:$0xf]
  %v41 = vld [vmem:[%s1 + $0xc] sm:$0xf]
  %v42 = vld [vmem:[%s1 + $0x10] sm:$0xf]
  %v43 = vld [vmem:[%s1 + $0x14] sm:$0xf]
  %v44 = vld [vmem:[%s1 + $0x18] sm:$0xf]
  %v45 = vld [vmem:[%s1 + $0x1c] sm:$0xf]
  %v46 = vld [vmem:[%s1 + $0x20] sm:$0xf]
  %v47 = vld [vmem:[%s1 + $0x24] sm:$0xf]
  %v48 = vld [vmem:[%s1 + $0x28] sm:$0xf]
  %v49 = vld [vmem:[%s1 + $0x2c] sm:$0xf]
  %v50 = vld [vmem:[%s1 + $0x30] sm:$0xf]
  %v51 = vld [vmem:[%s1 + $0x34] sm:$0xf]
  %v52 = vld [vmem:[%s1 + $0x38] sm:$0xf]
  %v53 = vld [vmem:[%s1 + $0x3c] sm:$0xf]
  %v70 = vunpack.c.l.b16 %v22
  %v71 = vunpack.c.l.b16 %v23
  %v72 = vunpack.c.l.b16 %v24
  %v73 = vunpack.c.l.b16 %v25
  %v74 = vunpack.c.l.b16 %v26
  %v75 = vunpack.c.l.b16 %v27
  %v76 = vunpack.c.l.b16 %v28
  %v77 = vunpack.c.l.b16 %v29
  %v78 = vunpack.c.l.b16 %v30
  %v79 = vunpack.c.l.b16 %v31
  %v80 = vunpack.c.l.b16 %v32
  %v81 = vunpack.c.l.b16 %v33
  %v82 = vunpack.c.l.b16 %v34
  %v83 = vunpack.c.l.b16 %v35
  %v84 = vunpack.c.l.b16 %v36
  %v85 = vunpack.c.l.b16 %v37
  %v86 = vpack.c.b16 %v71, %v70
  %v87 = vpack.c.b16 %v73, %v72
  %v88 = vpack.c.b16 %v75, %v74
  %v89 = vpack.c.b16 %v77, %v76
  %v90 = vpack.c.b16 %v79, %v78
  %v91 = vpack.c.b16 %v81, %v80
  %v92 = vpack.c.b16 %v83, %v82
  %v93 = vpack.c.b16 %v85, %v84
  %v118 = vunpack.c.l.b16 %v38
  %v119 = vunpack.c.l.b16 %v39
  %v120 = vunpack.c.l.b16 %v40
  %v121 = vunpack.c.l.b16 %v41
  %v122 = vunpack.c.l.b16 %v42
  %v123 = vunpack.c.l.b16 %v43
  %v124 = vunpack.c.l.b16 %v44
  %v125 = vunpack.c.l.b16 %v45
  %v126 = vunpack.c.l.b16 %v46
  %v127 = vunpack.c.l.b16 %v47
  %v128 = vunpack.c.l.b16 %v48
  %v129 = vunpack.c.l.b16 %v49
  %v130 = vunpack.c.l.b16 %v50
  %v131 = vunpack.c.l.b16 %v51
  %v132 = vunpack.c.l.b16 %v52
  %v133 = vunpack.c.l.b16 %v53
  %v134 = vpack.c.b16 %v119, %v118
  %v135 = vpack.c.b16 %v121, %v120
  %v136 = vpack.c.b16 %v123, %v122
  %v137 = vpack.c.b16 %v125, %v124
  %v138 = vpack.c.b16 %v127, %v126
  %v139 = vpack.c.b16 %v129, %v128
  %v140 = vpack.c.b16 %v131, %v130
  %v141 = vpack.c.b16 %v133, %v132
  %150 = vmatpush.bf16.msra.mxu0 %v141
  %151 = vmatpush.bf16.msra.mxu0 %v140
  %152 = vmatpush.bf16.msra.mxu0 %v139
  %153 = vmatpush.bf16.msra.mxu0 %v138
  %154 = vmatpush.bf16.msra.mxu0 %v137
  %155 = vmatpush.bf16.msra.mxu0 %v136
  %156 = vmatpush.bf16.msra.mxu0 %v135
  %157 = vmatpush.bf16.msra.mxu0 %v134
  %158 = vmatmul.bf16.gmra.mxu0 %v86
  %v159 = vpop.f32.mrf.mxu0
  %v160 = vadd.f32 0.0, %v159
  %v161 = vpop.f32.mrf.mxu0
  %v162 = vadd.f32 0.0, %v161
  %163 = vmatmul.bf16.gmra.mxu0 %v87
  %v164 = vpop.f32.mrf.mxu0
  %v165 = vadd.f32 0.0, %v164
  %v166 = vpop.f32.mrf.mxu0
  %v167 = vadd.f32 0.0, %v166
  %168 = vmatmul.bf16.gmra.mxu0 %v88
  %v169 = vpop.f32.mrf.mxu0
  %v170 = vadd.f32 0.0, %v169
  %v171 = vpop.f32.mrf.mxu0
  %v172 = vadd.f32 0.0, %v171
  %173 = vmatmul.bf16.gmra.mxu0 %v89
  %v174 = vpop.f32.mrf.mxu0
  %v175 = vadd.f32 0.0, %v174
  %v176 = vpop.f32.mrf.mxu0
  %v177 = vadd.f32 0.0, %v176
  %178 = vmatmul.bf16.gmra.mxu0 %v90
  %v179 = vpop.f32.mrf.mxu0
  %v180 = vadd.f32 0.0, %v179
  %v181 = vpop.f32.mrf.mxu0
  %v182 = vadd.f32 0.0, %v181
  %183 = vmatmul.bf16.gmra.mxu0 %v91
  %v184 = vpop.f32.mrf.mxu0
  %v185 = vadd.f32 0.0, %v184
  %v186 = vpop.f32.mrf.mxu0
  %v187 = vadd.f32 0.0, %v186
  %188 = vmatmul.bf16.gmra.mxu0 %v92
  %v189 = vpop.f32.mrf.mxu0
  %v190 = vadd.f32 0.0, %v189
  %v191 = vpop.f32.mrf.mxu0
  %v192 = vadd.f32 0.0, %v191
  %193 = vmatmul.bf16.gmra.mxu0 %v93
  %v194 = vpop.f32.mrf.mxu0
  %v195 = vadd.f32 0.0, %v194
  %v196 = vpop.f32.mrf.mxu0
  %v197 = vadd.f32 0.0, %v196
  %198 = vdwg.mxu0
  %v199 = vpack.c.bf16 %v162, %v160
  %v200 = vpack.c.bf16 %v167, %v165
  %v201 = vpack.c.bf16 %v172, %v170
  %v202 = vpack.c.bf16 %v177, %v175
  %v203 = vpack.c.bf16 %v182, %v180
  %v204 = vpack.c.bf16 %v187, %v185
  %v205 = vpack.c.bf16 %v192, %v190
  %v206 = vpack.c.bf16 %v197, %v195
  %v207 = vld [vmem:[%s2] sm:$0xf]
  %v208 = vld [vmem:[%s2 + $0x4] sm:$0xf]
  %v209 = vld [vmem:[%s2 + $0x8] sm:$0xf]
  %v210 = vld [vmem:[%s2 + $0xc] sm:$0xf]
  %v211 = vld [vmem:[%s2 + $0x10] sm:$0xf]
  %v212 = vld [vmem:[%s2 + $0x14] sm:$0xf]
  %v213 = vld [vmem:[%s2 + $0x18] sm:$0xf]
  %v214 = vld [vmem:[%s2 + $0x1c] sm:$0xf]
  %v215 = vld [vmem:[%s2 + $0x20] sm:$0xf]
  %v216 = vld [vmem:[%s2 + $0x24] sm:$0xf]
  %v217 = vld [vmem:[%s2 + $0x28] sm:$0xf]
  %v218 = vld [vmem:[%s2 + $0x2c] sm:$0xf]
  %v219 = vld [vmem:[%s2 + $0x30] sm:$0xf]
  %v220 = vld [vmem:[%s2 + $0x34] sm:$0xf]
  %v221 = vld [vmem:[%s2 + $0x38] sm:$0xf]
  %v222 = vld [vmem:[%s2 + $0x3c] sm:$0xf]
  %v239 = vunpack.c.l.b16 %v207
  %v240 = vunpack.c.l.b16 %v208
  %v241 = vunpack.c.l.b16 %v209
  %v242 = vunpack.c.l.b16 %v210
  %v243 = vunpack.c.l.b16 %v211
  %v244 = vunpack.c.l.b16 %v212
  %v245 = vunpack.c.l.b16 %v213
  %v246 = vunpack.c.l.b16 %v214
  %v247 = vunpack.c.l.b16 %v215
  %v248 = vunpack.c.l.b16 %v216
  %v249 = vunpack.c.l.b16 %v217
  %v250 = vunpack.c.l.b16 %v218
  %v251 = vunpack.c.l.b16 %v219
  %v252 = vunpack.c.l.b16 %v220
  %v253 = vunpack.c.l.b16 %v221
  %v254 = vunpack.c.l.b16 %v222
  %v255 = vpack.c.b16 %v240, %v239
  %v256 = vpack.c.b16 %v242, %v241
  %v257 = vpack.c.b16 %v244, %v243
  %v258 = vpack.c.b16 %v246, %v245
  %v259 = vpack.c.b16 %v248, %v247
  %v260 = vpack.c.b16 %v250, %v249
  %v261 = vpack.c.b16 %v252, %v251
  %v262 = vpack.c.b16 %v254, %v253
  %271 = vmatpush.bf16.msra.mxu0 %v262
  %272 = vmatpush.bf16.msra.mxu0 %v261
  %273 = vmatpush.bf16.msra.mxu0 %v260
  %274 = vmatpush.bf16.msra.mxu0 %v259
  %275 = vmatpush.bf16.msra.mxu0 %v258
  %276 = vmatpush.bf16.msra.mxu0 %v257
  %277 = vmatpush.bf16.msra.mxu0 %v256
  %278 = vmatpush.bf16.msra.mxu0 %v255
  %279 = vmatmul.bf16.gmra.mxu0 %v199
  %v280 = vpop.f32.mrf.mxu0
  %v281 = vadd.f32 0.0, %v280
  %v282 = vpop.f32.mrf.mxu0
  %v283 = vadd.f32 0.0, %v282
  %284 = vmatmul.bf16.gmra.mxu0 %v200
  %v285 = vpop.f32.mrf.mxu0
  %v286 = vadd.f32 0.0, %v285
  %v287 = vpop.f32.mrf.mxu0
  %v288 = vadd.f32 0.0, %v287
  %289 = vmatmul.bf16.gmra.mxu0 %v201
  %v290 = vpop.f32.mrf.mxu0
  %v291 = vadd.f32 0.0, %v290
  %v292 = vpop.f32.mrf.mxu0
  %v293 = vadd.f32 0.0, %v292
  %294 = vmatmul.bf16.gmra.mxu0 %v202
  %v295 = vpop.f32.mrf.mxu0
  %v296 = vadd.f32 0.0, %v295
  %v297 = vpop.f32.mrf.mxu0
  %v298 = vadd.f32 0.0, %v297
  %299 = vmatmul.bf16.gmra.mxu0 %v203
  %v300 = vpop.f32.mrf.mxu0
  %v301 = vadd.f32 0.0, %v300
  %v302 = vpop.f32.mrf.mxu0
  %v303 = vadd.f32 0.0, %v302
  %304 = vmatmul.bf16.gmra.mxu0 %v204
  %v305 = vpop.f32.mrf.mxu0
  %v306 = vadd.f32 0.0, %v305
  %v307 = vpop.f32.mrf.mxu0
  %v308 = vadd.f32 0.0, %v307
  %309 = vmatmul.bf16.gmra.mxu0 %v205
  %v310 = vpop.f32.mrf.mxu0
  %v311 = vadd.f32 0.0, %v310
  %v312 = vpop.f32.mrf.mxu0
  %v313 = vadd.f32 0.0, %v312
  %314 = vmatmul.bf16.gmra.mxu0 %v206
  %v315 = vpop.f32.mrf.mxu0
  %v316 = vadd.f32 0.0, %v315
  %v317 = vpop.f32.mrf.mxu0
  %v318 = vadd.f32 0.0, %v317
  %319 = vdwg.mxu0
  %v320 = vmax.f32 %v281, 0.0
  %v321 = vmax.f32 %v283, 0.0
  %v322 = vmax.f32 %v286, 0.0
  %v323 = vmax.f32 %v288, 0.0
  %v324 = vmax.f32 %v291, 0.0
  %v325 = vmax.f32 %v293, 0.0
  %v326 = vmax.f32 %v296, 0.0
  %v327 = vmax.f32 %v298, 0.0
  %v328 = vmax.f32 %v301, 0.0
  %v329 = vmax.f32 %v303, 0.0
  %v330 = vmax.f32 %v306, 0.0
  %v331 = vmax.f32 %v308, 0.0
  %v332 = vmax.f32 %v311, 0.0
  %v333 = vmax.f32 %v313, 0.0
  %v334 = vmax.f32 %v316, 0.0
  %v335 = vmax.f32 %v318, 0.0
  %v336 = vpack.c.bf16 %v320, %v320
  %v337 = vpack.c.bf16 %v321, %v321
  %v338 = vpack.c.bf16 %v322, %v322
  %v339 = vpack.c.bf16 %v323, %v323
  %v340 = vpack.c.bf16 %v324, %v324
  %v341 = vpack.c.bf16 %v325, %v325
  %v342 = vpack.c.bf16 %v326, %v326
  %v343 = vpack.c.bf16 %v327, %v327
  %v344 = vpack.c.bf16 %v328, %v328
  %v345 = vpack.c.bf16 %v329, %v329
  %v346 = vpack.c.bf16 %v330, %v330
  %v347 = vpack.c.bf16 %v331, %v331
  %v348 = vpack.c.bf16 %v332, %v332
  %v349 = vpack.c.bf16 %v333, %v333
  %v350 = vpack.c.bf16 %v334, %v334
  %v351 = vpack.c.bf16 %v335, %v335
  %352 = vst [vmem:[%s5] sm:$0xf] %v336
  %353 = vst [vmem:[%s5 + $0x4] sm:$0xf] %v337
  %354 = vst [vmem:[%s5 + $0x8] sm:$0xf] %v338
  %355 = vst [vmem:[%s5 + $0xc] sm:$0xf] %v339
  %356 = vst [vmem:[%s5 + $0x10] sm:$0xf] %v340
  %357 = vst [vmem:[%s5 + $0x14] sm:$0xf] %v341
  %358 = vst [vmem:[%s5 + $0x18] sm:$0xf] %v342
  %359 = vst [vmem:[%s5 + $0x1c] sm:$0xf] %v343
  %360 = vst [vmem:[%s5 + $0x20] sm:$0xf] %v344
  %361 = vst [vmem:[%s5 + $0x24] sm:$0xf] %v345
  %362 = vst [vmem:[%s5 + $0x28] sm:$0xf] %v346
  %363 = vst [vmem:[%s5 + $0x2c] sm:$0xf] %v347
  %364 = vst [vmem:[%s5 + $0x30] sm:$0xf] %v348
  %365 = vst [vmem:[%s5 + $0x34] sm:$0xf] %v349
  %366 = vst [vmem:[%s5 + $0x38] sm:$0xf] %v350
  %367 = vst [vmem:[%s5 + $0x3c] sm:$0xf] %v351
  %v368 = vld [vmem:[%s3] sm:$0xff]
  %v369 = vld [vmem:[%s3 + $0x8] sm:$0xf]
  %v370 = vld [vmem:[%s3 + $0xc] sm:$0xff]
  %v371 = vld [vmem:[%s3 + $0x14] sm:$0xf]
  %v372 = vld [vmem:[%s3 + $0x18] sm:$0xff]
  %v373 = vld [vmem:[%s3 + $0x20] sm:$0xf]
  %v374 = vld [vmem:[%s3 + $0x24] sm:$0xff]
  %v375 = vld [vmem:[%s3 + $0x2c] sm:$0xf]
  %v376 = vld [vmem:[%s3 + $0x30] sm:$0xff]
  %v377 = vld [vmem:[%s3 + $0x38] sm:$0xf]
  %v378 = vld [vmem:[%s3 + $0x3c] sm:$0xff]
  %v379 = vld [vmem:[%s3 + $0x44] sm:$0xf]
  %v380 = vld [vmem:[%s3 + $0x48] sm:$0xff]
  %v381 = vld [vmem:[%s3 + $0x50] sm:$0xf]
  %v382 = vld [vmem:[%s3 + $0x54] sm:$0xff]
  %v383 = vld [vmem:[%s3 + $0x5c] sm:$0xf]
  %v384 = vld [vmem:[%s3 + $0x60] sm:$0xff]
  %v385 = vld [vmem:[%s3 + $0x68] sm:$0xf]
  %v386 = vld [vmem:[%s3 + $0x6c] sm:$0xff]
  %v387 = vld [vmem:[%s3 + $0x74] sm:$0xf]
  %v388 = vld [vmem:[%s3 + $0x78] sm:$0xff]
  %v389 = vld [vmem:[%s3 + $0x80] sm:$0xf]
  %v390 = vld [vmem:[%s3 + $0x84] sm:$0xff]
  %v391 = vld [vmem:[%s3 + $0x8c] sm:$0xf]
  %v392 = vld [vmem:[%s3 + $0x90] sm:$0xff]
  %v393 = vld [vmem:[%s3 + $0x98] sm:$0xf]
  %v394 = vld [vmem:[%s3 + $0x9c] sm:$0xff]
  %v395 = vld [vmem:[%s3 + $0xa4] sm:$0xf]
  %v396 = vld [vmem:[%s3 + $0xa8] sm:$0xff]
  %v397 = vld [vmem:[%s3 + $0xb0] sm:$0xf]
  %v398 = vld [vmem:[%s3 + $0xb4] sm:$0xff]
  %v399 = vld [vmem:[%s3 + $0xbc] sm:$0xf]
  %v400 = vld [vmem:[%s4] sm:$0x7]
  %v402 = vperm.slane %v400, 0
  %v403 = vperm.slane %v400, 1
  %v404 = vperm.slane %v400, 2
  %v424 = vunpack.c.l.b16 %v336
  %v425 = vunpack.c.l.b16 %v337
  %v426 = vunpack.c.l.b16 %v338
  %v427 = vunpack.c.l.b16 %v339
  %v428 = vunpack.c.l.b16 %v340
  %v429 = vunpack.c.l.b16 %v341
  %v430 = vunpack.c.l.b16 %v342
  %v431 = vunpack.c.l.b16 %v343
  %v432 = vunpack.c.l.b16 %v344
  %v433 = vunpack.c.l.b16 %v345
  %v434 = vunpack.c.l.b16 %v346
  %v435 = vunpack.c.l.b16 %v347
  %v436 = vunpack.c.l.b16 %v348
  %v437 = vunpack.c.l.b16 %v349
  %v438 = vunpack.c.l.b16 %v350
  %v439 = vunpack.c.l.b16 %v351
  %v440 = vpack.c.b16 %v425, %v424
  %v441 = vpack.c.b16 %v427, %v426
  %v442 = vpack.c.b16 %v429, %v428
  %v443 = vpack.c.b16 %v431, %v430
  %v444 = vpack.c.b16 %v433, %v432
  %v445 = vpack.c.b16 %v435, %v434
  %v446 = vpack.c.b16 %v437, %v436
  %v447 = vpack.c.b16 %v439, %v438
  %v488 = vunpack.c.l.b16 %v368
  %v489 = vunpack.c.h.b16 %v368
  %v490 = vunpack.c.l.b16 %v369
  %v491 = vunpack.c.l.b16 %v370
  %v492 = vunpack.c.h.b16 %v370
  %v493 = vunpack.c.l.b16 %v371
  %v494 = vunpack.c.l.b16 %v372
  %v495 = vunpack.c.h.b16 %v372
  %v496 = vunpack.c.l.b16 %v373
  %v497 = vunpack.c.l.b16 %v374
  %v498 = vunpack.c.h.b16 %v374
  %v499 = vunpack.c.l.b16 %v375
  %v500 = vunpack.c.l.b16 %v376
  %v501 = vunpack.c.h.b16 %v376
  %v502 = vunpack.c.l.b16 %v377
  %v503 = vunpack.c.l.b16 %v378
  %v504 = vunpack.c.h.b16 %v378
  %v505 = vunpack.c.l.b16 %v379
  %v506 = vunpack.c.l.b16 %v380
  %v507 = vunpack.c.h.b16 %v380
  %v508 = vunpack.c.l.b16 %v381
  %v509 = vunpack.c.l.b16 %v382
  %v510 = vunpack.c.h.b16 %v382
  %v511 = vunpack.c.l.b16 %v383
  %v512 = vunpack.c.l.b16 %v384
  %v513 = vunpack.c.h.b16 %v384
  %v514 = vunpack.c.l.b16 %v385
  %v515 = vunpack.c.l.b16 %v386
  %v516 = vunpack.c.h.b16 %v386
  %v517 = vunpack.c.l.b16 %v387
  %v518 = vunpack.c.l.b16 %v388
  %v519 = vunpack.c.h.b16 %v388
  %v520 = vunpack.c.l.b16 %v389
  %v521 = vunpack.c.l.b16 %v390
  %v522 = vunpack.c.h.b16 %v390
  %v523 = vunpack.c.l.b16 %v391
  %v524 = vunpack.c.l.b16 %v392
  %v525 = vunpack.c.h.b16 %v392
  %v526 = vunpack.c.l.b16 %v393
  %v527 = vunpack.c.l.b16 %v394
  %v528 = vunpack.c.h.b16 %v394
  %v529 = vunpack.c.l.b16 %v395
  %v530 = vunpack.c.l.b16 %v396
  %v531 = vunpack.c.h.b16 %v396
  %v532 = vunpack.c.l.b16 %v397
  %v533 = vunpack.c.l.b16 %v398
  %v534 = vunpack.c.h.b16 %v398
  %v535 = vunpack.c.l.b16 %v399
  %v536 = vpack.c.b16 %v491, %v488
  %v537 = vpack.c.b16 %v492, %v489
  %v538 = vpack.c.b16 %v493, %v490
  %v539 = vpack.c.b16 %v497, %v494
  %v540 = vpack.c.b16 %v498, %v495
  %v541 = vpack.c.b16 %v499, %v496
  %v542 = vpack.c.b16 %v503, %v500
  %v543 = vpack.c.b16 %v504, %v501
  %v544 = vpack.c.b16 %v505, %v502
  %v545 = vpack.c.b16 %v509, %v506
  %v546 = vpack.c.b16 %v510, %v507
  %v547 = vpack.c.b16 %v511, %v508
  %v548 = vpack.c.b16 %v515, %v512
  %v549 = vpack.c.b16 %v516, %v513
  %v550 = vpack.c.b16 %v517, %v514
  %v551 = vpack.c.b16 %v521, %v518
  %v552 = vpack.c.b16 %v522, %v519
  %v553 = vpack.c.b16 %v523, %v520
  %v554 = vpack.c.b16 %v527, %v524
  %v555 = vpack.c.b16 %v528, %v525
  %v556 = vpack.c.b16 %v529, %v526
  %v557 = vpack.c.b16 %v533, %v530
  %v558 = vpack.c.b16 %v534, %v531
  %v559 = vpack.c.b16 %v535, %v532
  %584 = vmatpush.bf16.msra.mxu0 %v557
  %585 = vmatpush.bf16.msra.mxu0 %v554
  %586 = vmatpush.bf16.msra.mxu0 %v551
  %587 = vmatpush.bf16.msra.mxu0 %v548
  %588 = vmatpush.bf16.msra.mxu0 %v545
  %589 = vmatpush.bf16.msra.mxu0 %v542
  %590 = vmatpush.bf16.msra.mxu0 %v539
  %591 = vmatpush.bf16.msra.mxu0 %v536
  %592 = vmatmul.bf16.gmra.mxu0 %v440
  %v593 = vpop.f32.mrf.mxu0
  %v594 = vadd.f32 %v402, %v593
  %v595 = vpop.f32.mrf.mxu0
  %v596 = vadd.f32 %v402, %v595
  %597 = vmatmul.bf16.gmra.mxu0 %v441
  %v598 = vpop.f32.mrf.mxu0
  %v599 = vadd.f32 %v402, %v598
  %v600 = vpop.f32.mrf.mxu0
  %v601 = vadd.f32 %v402, %v600
  %602 = vmatmul.bf16.gmra.mxu0 %v442
  %v603 = vpop.f32.mrf.mxu0
  %v604 = vadd.f32 %v402, %v603
  %v605 = vpop.f32.mrf.mxu0
  %v606 = vadd.f32 %v402, %v605
  %607 = vmatmul.bf16.gmra.mxu0 %v443
  %v608 = vpop.f32.mrf.mxu0
  %v609 = vadd.f32 %v402, %v608
  %v610 = vpop.f32.mrf.mxu0
  %v611 = vadd.f32 %v402, %v610
  %612 = vmatmul.bf16.gmra.mxu0 %v444
  %v613 = vpop.f32.mrf.mxu0
  %v614 = vadd.f32 %v402, %v613
  %v615 = vpop.f32.mrf.mxu0
  %v616 = vadd.f32 %v402, %v615
  %617 = vmatmul.bf16.gmra.mxu0 %v445
  %v618 = vpop.f32.mrf.mxu0
  %v619 = vadd.f32 %v402, %v618
  %v620 = vpop.f32.mrf.mxu0
  %v621 = vadd.f32 %v402, %v620
  %622 = vmatmul.bf16.gmra.mxu0 %v446
  %v623 = vpop.f32.mrf.mxu0
  %v624 = vadd.f32 %v402, %v623
  %v625 = vpop.f32.mrf.mxu0
  %v626 = vadd.f32 %v402, %v625
  %627 = vmatmul.bf16.gmra.mxu0 %v447
  %v628 = vpop.f32.mrf.mxu0
  %v629 = vadd.f32 %v402, %v628
  %v630 = vpop.f32.mrf.mxu0
  %v631 = vadd.f32 %v402, %v630
  %632 = vdwg.mxu0
  %633 = vmatpush.bf16.msra.mxu0 %v558
  %634 = vmatpush.bf16.msra.mxu0 %v555
  %635 = vmatpush.bf16.msra.mxu0 %v552
  %636 = vmatpush.bf16.msra.mxu0 %v549
  %637 = vmatpush.bf16.msra.mxu0 %v546
  %638 = vmatpush.bf16.msra.mxu0 %v543
  %639 = vmatpush.bf16.msra.mxu0 %v540
  %640 = vmatpush.bf16.msra.mxu0 %v537
  %641 = vmatmul.bf16.gmra.mxu0 %v440
  %v642 = vpop.f32.mrf.mxu0
  %v643 = vadd.f32 %v403, %v642
  %v644 = vpop.f32.mrf.mxu0
  %v645 = vadd.f32 %v403, %v644
  %646 = vmatmul.bf16.gmra.mxu0 %v441
  %v647 = vpop.f32.mrf.mxu0
  %v648 = vadd.f32 %v403, %v647
  %v649 = vpop.f32.mrf.mxu0
  %v650 = vadd.f32 %v403, %v649
  %651 = vmatmul.bf16.gmra.mxu0 %v442
  %v652 = vpop.f32.mrf.mxu0
  %v653 = vadd.f32 %v403, %v652
  %v654 = vpop.f32.mrf.mxu0
  %v655 = vadd.f32 %v403, %v654
  %656 = vmatmul.bf16.gmra.mxu0 %v443
  %v657 = vpop.f32.mrf.mxu0
  %v658 = vadd.f32 %v403, %v657
  %v659 = vpop.f32.mrf.mxu0
  %v660 = vadd.f32 %v403, %v659
  %661 = vmatmul.bf16.gmra.mxu0 %v444
  %v662 = vpop.f32.mrf.mxu0
  %v663 = vadd.f32 %v403, %v662
  %v664 = vpop.f32.mrf.mxu0
  %v665 = vadd.f32 %v403, %v664
  %666 = vmatmul.bf16.gmra.mxu0 %v445
  %v667 = vpop.f32.mrf.mxu0
  %v668 = vadd.f32 %v403, %v667
  %v669 = vpop.f32.mrf.mxu0
  %v670 = vadd.f32 %v403, %v669
  %671 = vmatmul.bf16.gmra.mxu0 %v446
  %v672 = vpop.f32.mrf.mxu0
  %v673 = vadd.f32 %v403, %v672
  %v674 = vpop.f32.mrf.mxu0
  %v675 = vadd.f32 %v403, %v674
  %676 = vmatmul.bf16.gmra.mxu0 %v447
  %v677 = vpop.f32.mrf.mxu0
  %v678 = vadd.f32 %v403, %v677
  %v679 = vpop.f32.mrf.mxu0
  %v680 = vadd.f32 %v403, %v679
  %681 = vdwg.mxu0
  %682 = vmatpush.bf16.msra.mxu0 %v559
  %683 = vmatpush.bf16.msra.mxu0 %v556
  %684 = vmatpush.bf16.msra.mxu0 %v553
  %685 = vmatpush.bf16.msra.mxu0 %v550
  %686 = vmatpush.bf16.msra.mxu0 %v547
  %687 = vmatpush.bf16.msra.mxu0 %v544
  %688 = vmatpush.bf16.msra.mxu0 %v541
  %689 = vmatpush.bf16.msra.mxu0 %v538
  %690 = vmatmul.bf16.gmra.mxu0 %v440
  %v691 = vpop.f32.mrf.mxu0
  %v692 = vadd.f32 %v404, %v691
  %v693 = vpop.f32.mrf.mxu0
  %v694 = vadd.f32 %v404, %v693
  %695 = vmatmul.bf16.gmra.mxu0 %v441
  %v696 = vpop.f32.mrf.mxu0
  %v697 = vadd.f32 %v404, %v696
  %v698 = vpop.f32.mrf.mxu0
  %v699 = vadd.f32 %v404, %v698
  %700 = vmatmul.bf16.gmra.mxu0 %v442
  %v701 = vpop.f32.mrf.mxu0
  %v702 = vadd.f32 %v404, %v701
  %v703 = vpop.f32.mrf.mxu0
  %v704 = vadd.f32 %v404, %v703
  %705 = vmatmul.bf16.gmra.mxu0 %v443
  %v706 = vpop.f32.mrf.mxu0
  %v707 = vadd.f32 %v404, %v706
  %v708 = vpop.f32.mrf.mxu0
  %v709 = vadd.f32 %v404, %v708
  %710 = vmatmul.bf16.gmra.mxu0 %v444
  %v711 = vpop.f32.mrf.mxu0
  %v712 = vadd.f32 %v404, %v711
  %v713 = vpop.f32.mrf.mxu0
  %v714 = vadd.f32 %v404, %v713
  %715 = vmatmul.bf16.gmra.mxu0 %v445
  %v716 = vpop.f32.mrf.mxu0
  %v717 = vadd.f32 %v404, %v716
  %v718 = vpop.f32.mrf.mxu0
  %v719 = vadd.f32 %v404, %v718
  %720 = vmatmul.bf16.gmra.mxu0 %v446
  %v721 = vpop.f32.mrf.mxu0
  %v722 = vadd.f32 %v404, %v721
  %v723 = vpop.f32.mrf.mxu0
  %v724 = vadd.f32 %v404, %v723
  %725 = vmatmul.bf16.gmra.mxu0 %v447
  %v726 = vpop.f32.mrf.mxu0
  %v727 = vadd.f32 %v404, %v726
  %v728 = vpop.f32.mrf.mxu0
  %v729 = vadd.f32 %v404, %v728
  %730 = vdwg.mxu0
  %v731 = vpack.c.bf16 %v643, %v594
  %v732 = vpack.c.bf16 %v692, %v692
  %v733 = vpack.c.bf16 %v645, %v596
  %v734 = vpack.c.bf16 %v694, %v694
  %v735 = vpack.c.bf16 %v648, %v599
  %v736 = vpack.c.bf16 %v697, %v697
  %v737 = vpack.c.bf16 %v650, %v601
  %v738 = vpack.c.bf16 %v699, %v699
  %v739 = vpack.c.bf16 %v653, %v604
  %v740 = vpack.c.bf16 %v702, %v702
  %v741 = vpack.c.bf16 %v655, %v606
  %v742 = vpack.c.bf16 %v704, %v704
  %v743 = vpack.c.bf16 %v658, %v609
  %v744 = vpack.c.bf16 %v707, %v707
  %v745 = vpack.c.bf16 %v660, %v611
  %v746 = vpack.c.bf16 %v709, %v709
  %v747 = vpack.c.bf16 %v663, %v614
  %v748 = vpack.c.bf16 %v712, %v712
  %v749 = vpack.c.bf16 %v665, %v616
  %v750 = vpack.c.bf16 %v714, %v714
  %v751 = vpack.c.bf16 %v668, %v619
  %v752 = vpack.c.bf16 %v717, %v717
  %v753 = vpack.c.bf16 %v670, %v621
  %v754 = vpack.c.bf16 %v719, %v719
  %v755 = vpack.c.bf16 %v673, %v624
  %v756 = vpack.c.bf16 %v722, %v722
  %v757 = vpack.c.bf16 %v675, %v626
  %v758 = vpack.c.bf16 %v724, %v724
  %v759 = vpack.c.bf16 %v678, %v629
  %v760 = vpack.c.bf16 %v727, %v727
  %v761 = vpack.c.bf16 %v680, %v631
  %v762 = vpack.c.bf16 %v729, %v729
  %763 = vst [vmem:[%s6] sm:$0xff] %v731
  %764 = vst [vmem:[%s6 + $0x8] sm:$0xf] %v732
  %765 = vst [vmem:[%s6 + $0xc] sm:$0xff] %v733
  %766 = vst [vmem:[%s6 + $0x14] sm:$0xf] %v734
  %767 = vst [vmem:[%s6 + $0x18] sm:$0xff] %v735
  %768 = vst [vmem:[%s6 + $0x20] sm:$0xf] %v736
  %769 = vst [vmem:[%s6 + $0x24] sm:$0xff] %v737
  %770 = vst [vmem:[%s6 + $0x2c] sm:$0xf] %v738
  %771 = vst [vmem:[%s6 + $0x30] sm:$0xff] %v739
  %772 = vst [vmem:[%s6 + $0x38] sm:$0xf] %v740
  %773 = vst [vmem:[%s6 + $0x3c] sm:$0xff] %v741
  %774 = vst [vmem:[%s6 + $0x44] sm:$0xf] %v742
  %775 = vst [vmem:[%s6 + $0x48] sm:$0xff] %v743
  %776 = vst [vmem:[%s6 + $0x50] sm:$0xf] %v744
  %777 = vst [vmem:[%s6 + $0x54] sm:$0xff] %v745
  %778 = vst [vmem:[%s6 + $0x5c] sm:$0xf] %v746
  %779 = vst [vmem:[%s6 + $0x60] sm:$0xff] %v747
  %780 = vst [vmem:[%s6 + $0x68] sm:$0xf] %v748
  %781 = vst [vmem:[%s6 + $0x6c] sm:$0xff] %v749
  %782 = vst [vmem:[%s6 + $0x74] sm:$0xf] %v750
  %783 = vst [vmem:[%s6 + $0x78] sm:$0xff] %v751
  %784 = vst [vmem:[%s6 + $0x80] sm:$0xf] %v752
  %785 = vst [vmem:[%s6 + $0x84] sm:$0xff] %v753
  %786 = vst [vmem:[%s6 + $0x8c] sm:$0xf] %v754
  %787 = vst [vmem:[%s6 + $0x90] sm:$0xff] %v755
  %788 = vst [vmem:[%s6 + $0x98] sm:$0xf] %v756
  %789 = vst [vmem:[%s6 + $0x9c] sm:$0xff] %v757
  %790 = vst [vmem:[%s6 + $0xa4] sm:$0xf] %v758
  %791 = vst [vmem:[%s6 + $0xa8] sm:$0xff] %v759
  %792 = vst [vmem:[%s6 + $0xb0] sm:$0xf] %v760
  %793 = vst [vmem:[%s6 + $0xb4] sm:$0xff] %v761
  %794 = vst [vmem:[%s6 + $0xbc] sm:$0xf] %v762
  // Predicated region
  $region22: #{densenet2_forward.7} parent=0 // pred_check
    _
  $region23: #{densenet2_forward.7} parent=0 // pred_check_branch
    %796 = sbr.rel (0) target = $region25
  $region24: #{densenet2_forward.7} parent=0 // pred_region
    _
  $region25: #{densenet2_forward.7} parent=0 // pred_fallthru
    _
  // Predicated region
  $region26: #{densenet2_forward.7} parent=0 // pred_check
    _
  $region27: #{densenet2_forward.7} parent=0 // pred_check_branch
    %798 = sbr.rel (0) target = $region29
  $region28: #{densenet2_forward.7} parent=0 // pred_region
    _
  $region29: #{densenet2_forward.7} parent=0 // pred_fallthru
    _
  // Predicated region
  $region30: #{densenet2_forward.7} parent=0 // pred_check
    _
  $region31: #{densenet2_forward.7} parent=0 // pred_check_branch
    %800 = sbr.rel (0) target = $region33
  $region32: #{densenet2_forward.7} parent=0 // pred_region
    _
  $region33: #{densenet2_forward.7} parent=0 // pred_fallthru
    _
  // Predicated region
  $region34: #{densenet2_forward.7} parent=0 // pred_check
    _
  $region35: #{densenet2_forward.7} parent=0 // pred_check_branch
    %802 = sbr.rel (0) target = $region37
  $region36: #{densenet2_forward.7} parent=0 // pred_region
    _
  $region37: #{densenet2_forward.7} parent=0 // pred_fallthru
    _

// kernel: densenet2_forward.8
$region0: #{densenet2_forward.8}
  #allocation0 [shape = 'u32[]', space=smem, size = 0x4, offset = 0x4, fixed_abs, tag = 'smem constant byte address 0x4 - core index']
  #allocation1 [shape = 'u32[72,128]{1,0:T(1,128)}', space=vmem, size = 0x9000, scoped, tag = 'internal scratch']
  %s0 = inlined_call_operand.vmem [shape: bf16[128,128], index: 0, kind: input, shape index: {}]
  %s1 = inlined_call_operand.vmem [shape: bf16[128,384], index: 1, kind: input, shape index: {}, may-alias: {1,2}]
  %s2 = inlined_call_operand.vmem [shape: bf16[128,384], index: 2, kind: input, shape index: {}, may-alias: {1,2}]
  %s3 = inlined_call_operand.vmem [shape: bf16[128,128], index: 3, kind: input, shape index: {}]
  %s4 = inlined_call_operand.vmem [shape: f32[1,128], index: 4, kind: input, shape index: {}]
  %s5 = inlined_call_operand.vmem [shape: bf16[128,128], index: 5, kind: input, shape index: {}]
  %s6 = inlined_call_operand.vmem [shape: f32[1,128], index: 6, kind: input, shape index: {}]
  %s7 = inlined_call_operand.vmem [shape: bf16[128,128], index: 7, kind: output, shape index: {0}]
  %s8 = inlined_call_operand.vmem [shape: bf16[128,128], index: 8, kind: output, shape index: {1}]
  %9 = xla_tuple %s7, %s8
  %s10 = sld [smem:[#allocation0]]
  $region46: #{densenet2_forward.8} parent=0
    _
  %s12 = ssub.s32 1, %s10
  %s13 = scalar_select 0, %s12, %s10
  // Predicated region
  $region2: #{densenet2_forward.8} parent=0 // pred_check
    _
  $region3: #{densenet2_forward.8} parent=0 // pred_check_branch
    %15 = sbr.rel (0) target = $region5
  $region4: #{densenet2_forward.8} parent=0 // pred_region
    _
  $region5: #{densenet2_forward.8} parent=0 // pred_fallthru
    _
  // Predicated region
  $region6: #{densenet2_forward.8} parent=0 // pred_check
    _
  $region7: #{densenet2_forward.8} parent=0 // pred_check_branch
    %17 = sbr.rel (0) target = $region9
  $region8: #{densenet2_forward.8} parent=0 // pred_region
    _
  $region9: #{densenet2_forward.8} parent=0 // pred_fallthru
    _
  // Predicated region
  $region10: #{densenet2_forward.8} parent=0 // pred_check
    _
  $region11: #{densenet2_forward.8} parent=0 // pred_check_branch
    %19 = sbr.rel (0) target = $region13
  $region12: #{densenet2_forward.8} parent=0 // pred_region
    _
  $region13: #{densenet2_forward.8} parent=0 // pred_fallthru
    _
  // Predicated region
  $region14: #{densenet2_forward.8} parent=0 // pred_check
    _
  $region15: #{densenet2_forward.8} parent=0 // pred_check_branch
    %21 = sbr.rel (0) target = $region17
  $region16: #{densenet2_forward.8} parent=0 // pred_region
    _
  $region17: #{densenet2_forward.8} parent=0 // pred_fallthru
    _
  // Predicated region
  $region18: #{densenet2_forward.8} parent=0 // pred_check
    _
  $region19: #{densenet2_forward.8} parent=0 // pred_check_branch
    %23 = sbr.rel (0) target = $region21
  $region20: #{densenet2_forward.8} parent=0 // pred_region
    _
  $region21: #{densenet2_forward.8} parent=0 // pred_fallthru
    _
  // Predicated region
  $region22: #{densenet2_forward.8} parent=0 // pred_check
    _
  $region23: #{densenet2_forward.8} parent=0 // pred_check_branch
    %25 = sbr.rel (0) target = $region25
  $region24: #{densenet2_forward.8} parent=0 // pred_region
    _
  $region25: #{densenet2_forward.8} parent=0 // pred_fallthru
    _
  // Predicated region
  $region26: #{densenet2_forward.8} parent=0 // pred_check
    _
  $region27: #{densenet2_forward.8} parent=0 // pred_check_branch
    %27 = sbr.rel (0) target = $region29
  $region28: #{densenet2_forward.8} parent=0 // pred_region
    _
  $region29: #{densenet2_forward.8} parent=0 // pred_fallthru
    _
  %v28 = vld [vmem:[%s1] sm:$0xf]
  %v29 = vld [vmem:[%s1 + $0xc] sm:$0xf]
  %v30 = vld [vmem:[%s1 + $0x18] sm:$0xf]
  %v31 = vld [vmem:[%s1 + $0x24] sm:$0xf]
  %v32 = vld [vmem:[%s1 + $0x30] sm:$0xf]
  %v33 = vld [vmem:[%s1 + $0x3c] sm:$0xf]
  %v34 = vld [vmem:[%s1 + $0x48] sm:$0xf]
  %v35 = vld [vmem:[%s1 + $0x54] sm:$0xf]
  %v36 = vld [vmem:[%s1 + $0x60] sm:$0xf]
  %v37 = vld [vmem:[%s1 + $0x6c] sm:$0xf]
  %v38 = vld [vmem:[%s1 + $0x78] sm:$0xf]
  %v39 = vld [vmem:[%s1 + $0x84] sm:$0xf]
  %v40 = vld [vmem:[%s1 + $0x90] sm:$0xf]
  %v41 = vld [vmem:[%s1 + $0x9c] sm:$0xf]
  %v42 = vld [vmem:[%s1 + $0xa8] sm:$0xf]
  %v43 = vld [vmem:[%s1 + $0xb4] sm:$0xf]
  %v44 = vld [vmem:[%s2 + $0x4] sm:$0xf]
  %v45 = vld [vmem:[%s2 + $0x10] sm:$0xf]
  %v46 = vld [vmem:[%s2 + $0x1c] sm:$0xf]
  %v47 = vld [vmem:[%s2 + $0x28] sm:$0xf]
  %v48 = vld [vmem:[%s2 + $0x34] sm:$0xf]
  %v49 = vld [vmem:[%s2 + $0x40] sm:$0xf]
  %v50 = vld [vmem:[%s2 + $0x4c] sm:$0xf]
  %v51 = vld [vmem:[%s2 + $0x58] sm:$0xf]
  %v52 = vld [vmem:[%s2 + $0x64] sm:$0xf]
  %v53 = vld [vmem:[%s2 + $0x70] sm:$0xf]
  %v54 = vld [vmem:[%s2 + $0x7c] sm:$0xf]
  %v55 = vld [vmem:[%s2 + $0x88] sm:$0xf]
  %v56 = vld [vmem:[%s2 + $0x94] sm:$0xf]
  %v57 = vld [vmem:[%s2 + $0xa0] sm:$0xf]
  %v58 = vld [vmem:[%s2 + $0xac] sm:$0xf]
  %v59 = vld [vmem:[%s2 + $0xb8] sm:$0xf]
  %v60 = vld [vmem:[%s2 + $0x8] sm:$0xf]
  %v61 = vld [vmem:[%s2 + $0x14] sm:$0xf]
  %v62 = vld [vmem:[%s2 + $0x20] sm:$0xf]
  %v63 = vld [vmem:[%s2 + $0x2c] sm:$0xf]
  %v64 = vld [vmem:[%s2 + $0x38] sm:$0xf]
  %v65 = vld [vmem:[%s2 + $0x44] sm:$0xf]
  %v66 = vld [vmem:[%s2 + $0x50] sm:$0xf]
  %v67 = vld [vmem:[%s2 + $0x5c] sm:$0xf]
  %v68 = vld [vmem:[%s2 + $0x68] sm:$0xf]
  %v69 = vld [vmem:[%s2 + $0x74] sm:$0xf]
  %v70 = vld [vmem:[%s2 + $0x80] sm:$0xf]
  %v71 = vld [vmem:[%s2 + $0x8c] sm:$0xf]
  %v72 = vld [vmem:[%s2 + $0x98] sm:$0xf]
  %v73 = vld [vmem:[%s2 + $0xa4] sm:$0xf]
  %v74 = vld [vmem:[%s2 + $0xb0] sm:$0xf]
  %v75 = vld [vmem:[%s2 + $0xbc] sm:$0xf]
  %v92 = vunpack.c.l.b16 %v28
  %v93 = vunpack.c.l.b16 %v29
  %v94 = vunpack.c.l.b16 %v30
  %v95 = vunpack.c.l.b16 %v31
  %v96 = vunpack.c.l.b16 %v32
  %v97 = vunpack.c.l.b16 %v33
  %v98 = vunpack.c.l.b16 %v34
  %v99 = vunpack.c.l.b16 %v35
  %v100 = vunpack.c.l.b16 %v36
  %v101 = vunpack.c.l.b16 %v37
  %v102 = vunpack.c.l.b16 %v38
  %v103 = vunpack.c.l.b16 %v39
  %v104 = vunpack.c.l.b16 %v40
  %v105 = vunpack.c.l.b16 %v41
  %v106 = vunpack.c.l.b16 %v42
  %v107 = vunpack.c.l.b16 %v43
  %v108 = vpack.c.b16 %v93, %v92
  %v109 = vpack.c.b16 %v95, %v94
  %v110 = vpack.c.b16 %v97, %v96
  %v111 = vpack.c.b16 %v99, %v98
  %v112 = vpack.c.b16 %v101, %v100
  %v113 = vpack.c.b16 %v103, %v102
  %v114 = vpack.c.b16 %v105, %v104
  %v115 = vpack.c.b16 %v107, %v106
  %v140 = vunpack.c.l.b16 %v44
  %v141 = vunpack.c.l.b16 %v45
  %v142 = vunpack.c.l.b16 %v46
  %v143 = vunpack.c.l.b16 %v47
  %v144 = vunpack.c.l.b16 %v48
  %v145 = vunpack.c.l.b16 %v49
  %v146 = vunpack.c.l.b16 %v50
  %v147 = vunpack.c.l.b16 %v51
  %v148 = vunpack.c.l.b16 %v52
  %v149 = vunpack.c.l.b16 %v53
  %v150 = vunpack.c.l.b16 %v54
  %v151 = vunpack.c.l.b16 %v55
  %v152 = vunpack.c.l.b16 %v56
  %v153 = vunpack.c.l.b16 %v57
  %v154 = vunpack.c.l.b16 %v58
  %v155 = vunpack.c.l.b16 %v59
  %v156 = vpack.c.b16 %v141, %v140
  %v157 = vpack.c.b16 %v143, %v142
  %v158 = vpack.c.b16 %v145, %v144
  %v159 = vpack.c.b16 %v147, %v146
  %v160 = vpack.c.b16 %v149, %v148
  %v161 = vpack.c.b16 %v151, %v150
  %v162 = vpack.c.b16 %v153, %v152
  %v163 = vpack.c.b16 %v155, %v154
  %172 = vmatpush.bf16.xpose.msra.mxu0 %v163
  %173 = vmatpush.bf16.xpose.msra.mxu0 %v162
  %174 = vmatpush.bf16.xpose.msra.mxu0 %v161
  %175 = vmatpush.bf16.xpose.msra.mxu0 %v160
  %176 = vmatpush.bf16.xpose.msra.mxu0 %v159
  %177 = vmatpush.bf16.xpose.msra.mxu0 %v158
  %178 = vmatpush.bf16.xpose.msra.mxu0 %v157
  %179 = vmatpush.bf16.xpose.msra.mxu0 %v156
  %180 = vmatmul.bf16.gmra.mxu0 %v108
  %v181 = vpop.f32.mrf.mxu0
  %v182 = vadd.f32 0.0, %v181
  %v183 = vpop.f32.mrf.mxu0
  %v184 = vadd.f32 0.0, %v183
  %185 = vmatmul.bf16.gmra.mxu0 %v109
  %v186 = vpop.f32.mrf.mxu0
  %v187 = vadd.f32 0.0, %v186
  %v188 = vpop.f32.mrf.mxu0
  %v189 = vadd.f32 0.0, %v188
  %190 = vmatmul.bf16.gmra.mxu0 %v110
  %v191 = vpop.f32.mrf.mxu0
  %v192 = vadd.f32 0.0, %v191
  %v193 = vpop.f32.mrf.mxu0
  %v194 = vadd.f32 0.0, %v193
  %195 = vmatmul.bf16.gmra.mxu0 %v111
  %v196 = vpop.f32.mrf.mxu0
  %v197 = vadd.f32 0.0, %v196
  %v198 = vpop.f32.mrf.mxu0
  %v199 = vadd.f32 0.0, %v198
  %200 = vmatmul.bf16.gmra.mxu0 %v112
  %v201 = vpop.f32.mrf.mxu0
  %v202 = vadd.f32 0.0, %v201
  %v203 = vpop.f32.mrf.mxu0
  %v204 = vadd.f32 0.0, %v203
  %205 = vmatmul.bf16.gmra.mxu0 %v113
  %v206 = vpop.f32.mrf.mxu0
  %v207 = vadd.f32 0.0, %v206
  %v208 = vpop.f32.mrf.mxu0
  %v209 = vadd.f32 0.0, %v208
  %210 = vmatmul.bf16.gmra.mxu0 %v114
  %v211 = vpop.f32.mrf.mxu0
  %v212 = vadd.f32 0.0, %v211
  %v213 = vpop.f32.mrf.mxu0
  %v214 = vadd.f32 0.0, %v213
  %215 = vmatmul.bf16.gmra.mxu0 %v115
  %v216 = vpop.f32.mrf.mxu0
  %v217 = vadd.f32 0.0, %v216
  %v218 = vpop.f32.mrf.mxu0
  %v219 = vadd.f32 0.0, %v218
  %220 = vdwg.mxu0
  %v221 = vlaneseq
  %v222 = vand.u32 %v221, 127
  %vm223 = vcmp.lt.s32.totalorder %v222, 8
  %v224 = vsel %vm223, %v182, -1e+30
  %v225 = vsel %vm223, %v184, -1e+30
  %v226 = vsel %vm223, %v187, -1e+30
  %v227 = vsel %vm223, %v189, -1e+30
  %v228 = vsel %vm223, %v192, -1e+30
  %v229 = vsel %vm223, %v194, -1e+30
  %v230 = vsel %vm223, %v197, -1e+30
  %v231 = vsel %vm223, %v199, -1e+30
  %v232 = vsel %vm223, %v202, -1e+30
  %v233 = vsel %vm223, %v204, -1e+30
  %v234 = vsel %vm223, %v207, -1e+30
  %v235 = vsel %vm223, %v209, -1e+30
  %v236 = vsel %vm223, %v212, -1e+30
  %v237 = vsel %vm223, %v214, -1e+30
  %v238 = vsel %vm223, %v217, -1e+30
  %v239 = vsel %vm223, %v219, -1e+30
  %240 = vmax.xlane.f32.xlu0 %v224
  %v241 = vpop.xlane.xlu0 %240
  %242 = vmax.xlane.f32.xlu0 %v225
  %v243 = vpop.xlane.xlu0 %242
  %244 = vmax.xlane.f32.xlu0 %v226
  %v245 = vpop.xlane.xlu0 %244
  %246 = vmax.xlane.f32.xlu0 %v227
  %v247 = vpop.xlane.xlu0 %246
  %248 = vmax.xlane.f32.xlu0 %v228
  %v249 = vpop.xlane.xlu0 %248
  %250 = vmax.xlane.f32.xlu0 %v229
  %v251 = vpop.xlane.xlu0 %250
  %252 = vmax.xlane.f32.xlu0 %v230
  %v253 = vpop.xlane.xlu0 %252
  %254 = vmax.xlane.f32.xlu0 %v231
  %v255 = vpop.xlane.xlu0 %254
  %256 = vmax.xlane.f32.xlu0 %v232
  %v257 = vpop.xlane.xlu0 %256
  %258 = vmax.xlane.f32.xlu0 %v233
  %v259 = vpop.xlane.xlu0 %258
  %260 = vmax.xlane.f32.xlu0 %v234
  %v261 = vpop.xlane.xlu0 %260
  %262 = vmax.xlane.f32.xlu0 %v235
  %v263 = vpop.xlane.xlu0 %262
  %264 = vmax.xlane.f32.xlu0 %v236
  %v265 = vpop.xlane.xlu0 %264
  %266 = vmax.xlane.f32.xlu0 %v237
  %v267 = vpop.xlane.xlu0 %266
  %268 = vmax.xlane.f32.xlu0 %v238
  %v269 = vpop.xlane.xlu0 %268
  %270 = vmax.xlane.f32.xlu0 %v239
  %v271 = vpop.xlane.xlu0 %270
  %v272 = vsub.f32 %v224, %v241
  %v273 = vsub.f32 %v225, %v243
  %v274 = vsub.f32 %v226, %v245
  %v275 = vsub.f32 %v227, %v247
  %v276 = vsub.f32 %v228, %v249
  %v277 = vsub.f32 %v229, %v251
  %v278 = vsub.f32 %v230, %v253
  %v279 = vsub.f32 %v231, %v255
  %v280 = vsub.f32 %v232, %v257
  %v281 = vsub.f32 %v233, %v259
  %v282 = vsub.f32 %v234, %v261
  %v283 = vsub.f32 %v235, %v263
  %v284 = vsub.f32 %v236, %v265
  %v285 = vsub.f32 %v237, %v267
  %v286 = vsub.f32 %v238, %v269
  %v287 = vsub.f32 %v239, %v271
  %v288 = vmul.f32 %v272, 1.442695
  %v289 = vpow.pop %v288
  %v290 = vmul.f32 %v273, 1.442695
  %v291 = vpow.pop %v290
  %v292 = vmul.f32 %v274, 1.442695
  %v293 = vpow.pop %v292
  %v294 = vmul.f32 %v275, 1.442695
  %v295 = vpow.pop %v294
  %v296 = vmul.f32 %v276, 1.442695
  %v297 = vpow.pop %v296
  %v298 = vmul.f32 %v277, 1.442695
  %v299 = vpow.pop %v298
  %v300 = vmul.f32 %v278, 1.442695
  %v301 = vpow.pop %v300
  %v302 = vmul.f32 %v279, 1.442695
  %v303 = vpow.pop %v302
  %v304 = vmul.f32 %v280, 1.442695
  %v305 = vpow.pop %v304
  %v306 = vmul.f32 %v281, 1.442695
  %v307 = vpow.pop %v306
  %v308 = vmul.f32 %v282, 1.442695
  %v309 = vpow.pop %v308
  %v310 = vmul.f32 %v283, 1.442695
  %v311 = vpow.pop %v310
  %v312 = vmul.f32 %v284, 1.442695
  %v313 = vpow.pop %v312
  %v314 = vmul.f32 %v285, 1.442695
  %v315 = vpow.pop %v314
  %v316 = vmul.f32 %v286, 1.442695
  %v317 = vpow.pop %v316
  %v318 = vmul.f32 %v287, 1.442695
  %v319 = vpow.pop %v318
  %320 = vadd.xlane.f32.xlu0 %v289
  %v321 = vpop.xlane.xlu0 %320
  %322 = vadd.xlane.f32.xlu0 %v291
  %v323 = vpop.xlane.xlu0 %322
  %324 = vadd.xlane.f32.xlu0 %v293
  %v325 = vpop.xlane.xlu0 %324
  %326 = vadd.xlane.f32.xlu0 %v295
  %v327 = vpop.xlane.xlu0 %326
  %328 = vadd.xlane.f32.xlu0 %v297
  %v329 = vpop.xlane.xlu0 %328
  %330 = vadd.xlane.f32.xlu0 %v299
  %v331 = vpop.xlane.xlu0 %330
  %332 = vadd.xlane.f32.xlu0 %v301
  %v333 = vpop.xlane.xlu0 %332
  %334 = vadd.xlane.f32.xlu0 %v303
  %v335 = vpop.xlane.xlu0 %334
  %336 = vadd.xlane.f32.xlu0 %v305
  %v337 = vpop.xlane.xlu0 %336
  %338 = vadd.xlane.f32.xlu0 %v307
  %v339 = vpop.xlane.xlu0 %338
  %340 = vadd.xlane.f32.xlu0 %v309
  %v341 = vpop.xlane.xlu0 %340
  %342 = vadd.xlane.f32.xlu0 %v311
  %v343 = vpop.xlane.xlu0 %342
  %344 = vadd.xlane.f32.xlu0 %v313
  %v345 = vpop.xlane.xlu0 %344
  %346 = vadd.xlane.f32.xlu0 %v315
  %v347 = vpop.xlane.xlu0 %346
  %348 = vadd.xlane.f32.xlu0 %v317
  %v349 = vpop.xlane.xlu0 %348
  %350 = vadd.xlane.f32.xlu0 %v319
  %v351 = vpop.xlane.xlu0 %350
  %v352 = vrcp.pop %v321
  %v353 = vmul.f32 %v321, %v352
  %v354 = vsub.f32 1.0, %v353
  %v355 = vmul.f32 %v352, %v354
  %v356 = vadd.f32 %v352, %v355
  %vm357 = vweird.f32 %v321
  %vm358 = vweird.f32 %v352
  %vm359 = vmor %vm357, %vm358
  %v360 = vsel %vm359, %v352, %v356
  %v361 = vand.u32 2147483647, %v321
  %vm362 = vcmp.eq.f32.partialorder %v361, 8.507059e+37
  %v363 = vand.u32 %v321, 2147483648
  %v364 = vor.u32 1.1754944e-38, %v363
  %v365 = vsel %vm362, %v364, %v360
  %v366 = vmul.f32 1.0, %v365
  %v367 = vrcp.pop %v323
  %v368 = vmul.f32 %v323, %v367
  %v369 = vsub.f32 1.0, %v368
  %v370 = vmul.f32 %v367, %v369
  %v371 = vadd.f32 %v367, %v370
  %vm372 = vweird.f32 %v323
  %vm373 = vweird.f32 %v367
  %vm374 = vmor %vm372, %vm373
  %v375 = vsel %vm374, %v367, %v371
  %v376 = vand.u32 2147483647, %v323
  %vm377 = vcmp.eq.f32.partialorder %v376, 8.507059e+37
  %v378 = vand.u32 %v323, 2147483648
  %v379 = vor.u32 1.1754944e-38, %v378
  %v380 = vsel %vm377, %v379, %v375
  %v381 = vmul.f32 1.0, %v380
  %v382 = vrcp.pop %v325
  %v383 = vmul.f32 %v325, %v382
  %v384 = vsub.f32 1.0, %v383
  %v385 = vmul.f32 %v382, %v384
  %v386 = vadd.f32 %v382, %v385
  %vm387 = vweird.f32 %v325
  %vm388 = vweird.f32 %v382
  %vm389 = vmor %vm387, %vm388
  %v390 = vsel %vm389, %v382, %v386
  %v391 = vand.u32 2147483647, %v325
  %vm392 = vcmp.eq.f32.partialorder %v391, 8.507059e+37
  %v393 = vand.u32 %v325, 2147483648
  %v394 = vor.u32 1.1754944e-38, %v393
  %v395 = vsel %vm392, %v394, %v390
  %v396 = vmul.f32 1.0, %v395
  %v397 = vrcp.pop %v327
  %v398 = vmul.f32 %v327, %v397
  %v399 = vsub.f32 1.0, %v398
  %v400 = vmul.f32 %v397, %v399
  %v401 = vadd.f32 %v397, %v400
  %vm402 = vweird.f32 %v327
  %vm403 = vweird.f32 %v397
  %vm404 = vmor %vm402, %vm403
  %v405 = vsel %vm404, %v397, %v401
  %v406 = vand.u32 2147483647, %v327
  %vm407 = vcmp.eq.f32.partialorder %v406, 8.507059e+37
  %v408 = vand.u32 %v327, 2147483648
  %v409 = vor.u32 1.1754944e-38, %v408
  %v410 = vsel %vm407, %v409, %v405
  %v411 = vmul.f32 1.0, %v410
  %v412 = vrcp.pop %v329
  %v413 = vmul.f32 %v329, %v412
  %v414 = vsub.f32 1.0, %v413
  %v415 = vmul.f32 %v412, %v414
  %v416 = vadd.f32 %v412, %v415
  %vm417 = vweird.f32 %v329
  %vm418 = vweird.f32 %v412
  %vm419 = vmor %vm417, %vm418
  %v420 = vsel %vm419, %v412, %v416
  %v421 = vand.u32 2147483647, %v329
  %vm422 = vcmp.eq.f32.partialorder %v421, 8.507059e+37
  %v423 = vand.u32 %v329, 2147483648
  %v424 = vor.u32 1.1754944e-38, %v423
  %v425 = vsel %vm422, %v424, %v420
  %v426 = vmul.f32 1.0, %v425
  %v427 = vrcp.pop %v331
  %v428 = vmul.f32 %v331, %v427
  %v429 = vsub.f32 1.0, %v428
  %v430 = vmul.f32 %v427, %v429
  %v431 = vadd.f32 %v427, %v430
  %vm432 = vweird.f32 %v331
  %vm433 = vweird.f32 %v427
  %vm434 = vmor %vm432, %vm433
  %v435 = vsel %vm434, %v427, %v431
  %v436 = vand.u32 2147483647, %v331
  %vm437 = vcmp.eq.f32.partialorder %v436, 8.507059e+37
  %v438 = vand.u32 %v331, 2147483648
  %v439 = vor.u32 1.1754944e-38, %v438
  %v440 = vsel %vm437, %v439, %v435
  %v441 = vmul.f32 1.0, %v440
  %v442 = vrcp.pop %v333
  %v443 = vmul.f32 %v333, %v442
  %v444 = vsub.f32 1.0, %v443
  %v445 = vmul.f32 %v442, %v444
  %v446 = vadd.f32 %v442, %v445
  %vm447 = vweird.f32 %v333
  %vm448 = vweird.f32 %v442
  %vm449 = vmor %vm447, %vm448
  %v450 = vsel %vm449, %v442, %v446
  %v451 = vand.u32 2147483647, %v333
  %vm452 = vcmp.eq.f32.partialorder %v451, 8.507059e+37
  %v453 = vand.u32 %v333, 2147483648
  %v454 = vor.u32 1.1754944e-38, %v453
  %v455 = vsel %vm452, %v454, %v450
  %v456 = vmul.f32 1.0, %v455
  %v457 = vrcp.pop %v335
  %v458 = vmul.f32 %v335, %v457
  %v459 = vsub.f32 1.0, %v458
  %v460 = vmul.f32 %v457, %v459
  %v461 = vadd.f32 %v457, %v460
  %vm462 = vweird.f32 %v335
  %vm463 = vweird.f32 %v457
  %vm464 = vmor %vm462, %vm463
  %v465 = vsel %vm464, %v457, %v461
  %v466 = vand.u32 2147483647, %v335
  %vm467 = vcmp.eq.f32.partialorder %v466, 8.507059e+37
  %v468 = vand.u32 %v335, 2147483648
  %v469 = vor.u32 1.1754944e-38, %v468
  %v470 = vsel %vm467, %v469, %v465
  %v471 = vmul.f32 1.0, %v470
  %v472 = vrcp.pop %v337
  %v473 = vmul.f32 %v337, %v472
  %v474 = vsub.f32 1.0, %v473
  %v475 = vmul.f32 %v472, %v474
  %v476 = vadd.f32 %v472, %v475
  %vm477 = vweird.f32 %v337
  %vm478 = vweird.f32 %v472
  %vm479 = vmor %vm477, %vm478
  %v480 = vsel %vm479, %v472, %v476
  %v481 = vand.u32 2147483647, %v337
  %vm482 = vcmp.eq.f32.partialorder %v481, 8.507059e+37
  %v483 = vand.u32 %v337, 2147483648
  %v484 = vor.u32 1.1754944e-38, %v483
  %v485 = vsel %vm482, %v484, %v480
  %v486 = vmul.f32 1.0, %v485
  %v487 = vrcp.pop %v339
  %v488 = vmul.f32 %v339, %v487
  %v489 = vsub.f32 1.0, %v488
  %v490 = vmul.f32 %v487, %v489
  %v491 = vadd.f32 %v487, %v490
  %vm492 = vweird.f32 %v339
  %vm493 = vweird.f32 %v487
  %vm494 = vmor %vm492, %vm493
  %v495 = vsel %vm494, %v487, %v491
  %v496 = vand.u32 2147483647, %v339
  %vm497 = vcmp.eq.f32.partialorder %v496, 8.507059e+37
  %v498 = vand.u32 %v339, 2147483648
  %v499 = vor.u32 1.1754944e-38, %v498
  %v500 = vsel %vm497, %v499, %v495
  %v501 = vmul.f32 1.0, %v500
  %v502 = vrcp.pop %v341
  %v503 = vmul.f32 %v341, %v502
  %v504 = vsub.f32 1.0, %v503
  %v505 = vmul.f32 %v502, %v504
  %v506 = vadd.f32 %v502, %v505
  %vm507 = vweird.f32 %v341
  %vm508 = vweird.f32 %v502
  %vm509 = vmor %vm507, %vm508
  %v510 = vsel %vm509, %v502, %v506
  %v511 = vand.u32 2147483647, %v341
  %vm512 = vcmp.eq.f32.partialorder %v511, 8.507059e+37
  %v513 = vand.u32 %v341, 2147483648
  %v514 = vor.u32 1.1754944e-38, %v513
  %v515 = vsel %vm512, %v514, %v510
  %v516 = vmul.f32 1.0, %v515
  %v517 = vrcp.pop %v343
  %v518 = vmul.f32 %v343, %v517
  %v519 = vsub.f32 1.0, %v518
  %v520 = vmul.f32 %v517, %v519
  %v521 = vadd.f32 %v517, %v520
  %vm522 = vweird.f32 %v343
  %vm523 = vweird.f32 %v517
  %vm524 = vmor %vm522, %vm523
  %v525 = vsel %vm524, %v517, %v521
  %v526 = vand.u32 2147483647, %v343
  %vm527 = vcmp.eq.f32.partialorder %v526, 8.507059e+37
  %v528 = vand.u32 %v343, 2147483648
  %v529 = vor.u32 1.1754944e-38, %v528
  %v530 = vsel %vm527, %v529, %v525
  %v531 = vmul.f32 1.0, %v530
  %v532 = vrcp.pop %v345
  %v533 = vmul.f32 %v345, %v532
  %v534 = vsub.f32 1.0, %v533
  %v535 = vmul.f32 %v532, %v534
  %v536 = vadd.f32 %v532, %v535
  %vm537 = vweird.f32 %v345
  %vm538 = vweird.f32 %v532
  %vm539 = vmor %vm537, %vm538
  %v540 = vsel %vm539, %v532, %v536
  %v541 = vand.u32 2147483647, %v345
  %vm542 = vcmp.eq.f32.partialorder %v541, 8.507059e+37
  %v543 = vand.u32 %v345, 2147483648
  %v544 = vor.u32 1.1754944e-38, %v543
  %v545 = vsel %vm542, %v544, %v540
  %v546 = vmul.f32 1.0, %v545
  %v547 = vrcp.pop %v347
  %v548 = vmul.f32 %v347, %v547
  %v549 = vsub.f32 1.0, %v548
  %v550 = vmul.f32 %v547, %v549
  %v551 = vadd.f32 %v547, %v550
  %vm552 = vweird.f32 %v347
  %vm553 = vweird.f32 %v547
  %vm554 = vmor %vm552, %vm553
  %v555 = vsel %vm554, %v547, %v551
  %v556 = vand.u32 2147483647, %v347
  %vm557 = vcmp.eq.f32.partialorder %v556, 8.507059e+37
  %v558 = vand.u32 %v347, 2147483648
  %v559 = vor.u32 1.1754944e-38, %v558
  %v560 = vsel %vm557, %v559, %v555
  %v561 = vmul.f32 1.0, %v560
  %v562 = vrcp.pop %v349
  %v563 = vmul.f32 %v349, %v562
  %v564 = vsub.f32 1.0, %v563
  %v565 = vmul.f32 %v562, %v564
  %v566 = vadd.f32 %v562, %v565
  %vm567 = vweird.f32 %v349
  %vm568 = vweird.f32 %v562
  %vm569 = vmor %vm567, %vm568
  %v570 = vsel %vm569, %v562, %v566
  %v571 = vand.u32 2147483647, %v349
  %vm572 = vcmp.eq.f32.partialorder %v571, 8.507059e+37
  %v573 = vand.u32 %v349, 2147483648
  %v574 = vor.u32 1.1754944e-38, %v573
  %v575 = vsel %vm572, %v574, %v570
  %v576 = vmul.f32 1.0, %v575
  %v577 = vrcp.pop %v351
  %v578 = vmul.f32 %v351, %v577
  %v579 = vsub.f32 1.0, %v578
  %v580 = vmul.f32 %v577, %v579
  %v581 = vadd.f32 %v577, %v580
  %vm582 = vweird.f32 %v351
  %vm583 = vweird.f32 %v577
  %vm584 = vmor %vm582, %vm583
  %v585 = vsel %vm584, %v577, %v581
  %v586 = vand.u32 2147483647, %v351
  %vm587 = vcmp.eq.f32.partialorder %v586, 8.507059e+37
  %v588 = vand.u32 %v351, 2147483648
  %v589 = vor.u32 1.1754944e-38, %v588
  %v590 = vsel %vm587, %v589, %v585
  %v591 = vmul.f32 1.0, %v590
  %v592 = vmul.f32 %v289, %v366
  %v593 = vmul.f32 %v291, %v381
  %v594 = vmul.f32 %v293, %v396
  %v595 = vmul.f32 %v295, %v411
  %v596 = vmul.f32 %v297, %v426
  %v597 = vmul.f32 %v299, %v441
  %v598 = vmul.f32 %v301, %v456
  %v599 = vmul.f32 %v303, %v471
  %v600 = vmul.f32 %v305, %v486
  %v601 = vmul.f32 %v307, %v501
  %v602 = vmul.f32 %v309, %v516
  %v603 = vmul.f32 %v311, %v531
  %v604 = vmul.f32 %v313, %v546
  %v605 = vmul.f32 %v315, %v561
  %v606 = vmul.f32 %v317, %v576
  %v607 = vmul.f32 %v319, %v591
  %v608 = vpack.c.bf16 %v593, %v592
  %v609 = vpack.c.bf16 %v595, %v594
  %v610 = vpack.c.bf16 %v597, %v596
  %v611 = vpack.c.bf16 %v599, %v598
  %v612 = vpack.c.bf16 %v601, %v600
  %v613 = vpack.c.bf16 %v603, %v602
  %v614 = vpack.c.bf16 %v605, %v604
  %v615 = vpack.c.bf16 %v607, %v606
  %v632 = vunpack.c.l.b16 %v60
  %v633 = vunpack.c.l.b16 %v61
  %v634 = vunpack.c.l.b16 %v62
  %v635 = vunpack.c.l.b16 %v63
  %v636 = vunpack.c.l.b16 %v64
  %v637 = vunpack.c.l.b16 %v65
  %v638 = vunpack.c.l.b16 %v66
  %v639 = vunpack.c.l.b16 %v67
  %v640 = vunpack.c.l.b16 %v68
  %v641 = vunpack.c.l.b16 %v69
  %v642 = vunpack.c.l.b16 %v70
  %v643 = vunpack.c.l.b16 %v71
  %v644 = vunpack.c.l.b16 %v72
  %v645 = vunpack.c.l.b16 %v73
  %v646 = vunpack.c.l.b16 %v74
  %v647 = vunpack.c.l.b16 %v75
  %v648 = vpack.c.b16 %v633, %v632
  %v649 = vpack.c.b16 %v635, %v634
  %v650 = vpack.c.b16 %v637, %v636
  %v651 = vpack.c.b16 %v639, %v638
  %v652 = vpack.c.b16 %v641, %v640
  %v653 = vpack.c.b16 %v643, %v642
  %v654 = vpack.c.b16 %v645, %v644
  %v655 = vpack.c.b16 %v647, %v646
  %664 = vmatpush.bf16.msra.mxu0 %v655
  %665 = vmatpush.bf16.msra.mxu0 %v654
  %666 = vmatpush.bf16.msra.mxu0 %v653
  %667 = vmatpush.bf16.msra.mxu0 %v652
  %668 = vmatpush.bf16.msra.mxu0 %v651
  %669 = vmatpush.bf16.msra.mxu0 %v650
  %670 = vmatpush.bf16.msra.mxu0 %v649
  %671 = vmatpush.bf16.msra.mxu0 %v648
  %672 = vmatmul.bf16.gmra.mxu0 %v608
  %v673 = vpop.f32.mrf.mxu0
  %v674 = vadd.f32 0.0, %v673
  %v675 = vpop.f32.mrf.mxu0
  %v676 = vadd.f32 0.0, %v675
  %677 = vmatmul.bf16.gmra.mxu0 %v609
  %v678 = vpop.f32.mrf.mxu0
  %v679 = vadd.f32 0.0, %v678
  %v680 = vpop.f32.mrf.mxu0
  %v681 = vadd.f32 0.0, %v680
  %682 = vmatmul.bf16.gmra.mxu0 %v610
  %v683 = vpop.f32.mrf.mxu0
  %v684 = vadd.f32 0.0, %v683
  %v685 = vpop.f32.mrf.mxu0
  %v686 = vadd.f32 0.0, %v685
  %687 = vmatmul.bf16.gmra.mxu0 %v611
  %v688 = vpop.f32.mrf.mxu0
  %v689 = vadd.f32 0.0, %v688
  %v690 = vpop.f32.mrf.mxu0
  %v691 = vadd.f32 0.0, %v690
  %692 = vmatmul.bf16.gmra.mxu0 %v612
  %v693 = vpop.f32.mrf.mxu0
  %v694 = vadd.f32 0.0, %v693
  %v695 = vpop.f32.mrf.mxu0
  %v696 = vadd.f32 0.0, %v695
  %697 = vmatmul.bf16.gmra.mxu0 %v613
  %v698 = vpop.f32.mrf.mxu0
  %v699 = vadd.f32 0.0, %v698
  %v700 = vpop.f32.mrf.mxu0
  %v701 = vadd.f32 0.0, %v700
  %702 = vmatmul.bf16.gmra.mxu0 %v614
  %v703 = vpop.f32.mrf.mxu0
  %v704 = vadd.f32 0.0, %v703
  %v705 = vpop.f32.mrf.mxu0
  %v706 = vadd.f32 0.0, %v705
  %707 = vmatmul.bf16.gmra.mxu0 %v615
  %v708 = vpop.f32.mrf.mxu0
  %v709 = vadd.f32 0.0, %v708
  %v710 = vpop.f32.mrf.mxu0
  %v711 = vadd.f32 0.0, %v710
  %712 = vdwg.mxu0
  %v713 = vld [vmem:[%s0] sm:$0xf]
  %v714 = vld [vmem:[%s0 + $0x4] sm:$0xf]
  %v715 = vld [vmem:[%s0 + $0x8] sm:$0xf]
  %v716 = vld [vmem:[%s0 + $0xc] sm:$0xf]
  %v717 = vld [vmem:[%s0 + $0x10] sm:$0xf]
  %v718 = vld [vmem:[%s0 + $0x14] sm:$0xf]
  %v719 = vld [vmem:[%s0 + $0x18] sm:$0xf]
  %v720 = vld [vmem:[%s0 + $0x1c] sm:$0xf]
  %v721 = vld [vmem:[%s0 + $0x20] sm:$0xf]
  %v722 = vld [vmem:[%s0 + $0x24] sm:$0xf]
  %v723 = vld [vmem:[%s0 + $0x28] sm:$0xf]
  %v724 = vld [vmem:[%s0 + $0x2c] sm:$0xf]
  %v725 = vld [vmem:[%s0 + $0x30] sm:$0xf]
  %v726 = vld [vmem:[%s0 + $0x34] sm:$0xf]
  %v727 = vld [vmem:[%s0 + $0x38] sm:$0xf]
  %v728 = vld [vmem:[%s0 + $0x3c] sm:$0xf]
  %v729 = vunpack.c.l.bf16 %v713
  %v730 = vunpack.c.l.bf16 %v714
  %v731 = vunpack.c.l.bf16 %v715
  %v732 = vunpack.c.l.bf16 %v716
  %v733 = vunpack.c.l.bf16 %v717
  %v734 = vunpack.c.l.bf16 %v718
  %v735 = vunpack.c.l.bf16 %v719
  %v736 = vunpack.c.l.bf16 %v720
  %v737 = vunpack.c.l.bf16 %v721
  %v738 = vunpack.c.l.bf16 %v722
  %v739 = vunpack.c.l.bf16 %v723
  %v740 = vunpack.c.l.bf16 %v724
  %v741 = vunpack.c.l.bf16 %v725
  %v742 = vunpack.c.l.bf16 %v726
  %v743 = vunpack.c.l.bf16 %v727
  %v744 = vunpack.c.l.bf16 %v728
  %v745 = vadd.f32 %v729, %v674
  %v746 = vadd.f32 %v730, %v676
  %v747 = vadd.f32 %v731, %v679
  %v748 = vadd.f32 %v732, %v681
  %v749 = vadd.f32 %v733, %v684
  %v750 = vadd.f32 %v734, %v686
  %v751 = vadd.f32 %v735, %v689
  %v752 = vadd.f32 %v736, %v691
  %v753 = vadd.f32 %v737, %v694
  %v754 = vadd.f32 %v738, %v696
  %v755 = vadd.f32 %v739, %v699
  %v756 = vadd.f32 %v740, %v701
  %v757 = vadd.f32 %v741, %v704
  %v758 = vadd.f32 %v742, %v706
  %v759 = vadd.f32 %v743, %v709
  %v760 = vadd.f32 %v744, %v711
  %v761 = vpack.c.bf16 %v745, %v745
  %v762 = vpack.c.bf16 %v746, %v746
  %v763 = vpack.c.bf16 %v747, %v747
  %v764 = vpack.c.bf16 %v748, %v748
  %v765 = vpack.c.bf16 %v749, %v749
  %v766 = vpack.c.bf16 %v750, %v750
  %v767 = vpack.c.bf16 %v751, %v751
  %v768 = vpack.c.bf16 %v752, %v752
  %v769 = vpack.c.bf16 %v753, %v753
  %v770 = vpack.c.bf16 %v754, %v754
  %v771 = vpack.c.bf16 %v755, %v755
  %v772 = vpack.c.bf16 %v756, %v756
  %v773 = vpack.c.bf16 %v757, %v757
  %v774 = vpack.c.bf16 %v758, %v758
  %v775 = vpack.c.bf16 %v759, %v759
  %v776 = vpack.c.bf16 %v760, %v760
  %777 = vst [vmem:[%s7] sm:$0xf] %v761
  %778 = vst [vmem:[%s7 + $0x4] sm:$0xf] %v762
  %779 = vst [vmem:[%s7 + $0x8] sm:$0xf] %v763
  %780 = vst [vmem:[%s7 + $0xc] sm:$0xf] %v764
  %781 = vst [vmem:[%s7 + $0x10] sm:$0xf] %v765
  %782 = vst [vmem:[%s7 + $0x14] sm:$0xf] %v766
  %783 = vst [vmem:[%s7 + $0x18] sm:$0xf] %v767
  %784 = vst [vmem:[%s7 + $0x1c] sm:$0xf] %v768
  %785 = vst [vmem:[%s7 + $0x20] sm:$0xf] %v769
  %786 = vst [vmem:[%s7 + $0x24] sm:$0xf] %v770
  %787 = vst [vmem:[%s7 + $0x28] sm:$0xf] %v771
  %788 = vst [vmem:[%s7 + $0x2c] sm:$0xf] %v772
  %789 = vst [vmem:[%s7 + $0x30] sm:$0xf] %v773
  %790 = vst [vmem:[%s7 + $0x34] sm:$0xf] %v774
  %791 = vst [vmem:[%s7 + $0x38] sm:$0xf] %v775
  %792 = vst [vmem:[%s7 + $0x3c] sm:$0xf] %v776
  %v793 = vld [vmem:[%s3] sm:$0xf]
  %v794 = vld [vmem:[%s3 + $0x4] sm:$0xf]
  %v795 = vld [vmem:[%s3 + $0x8] sm:$0xf]
  %v796 = vld [vmem:[%s3 + $0xc] sm:$0xf]
  %v797 = vld [vmem:[%s3 + $0x10] sm:$0xf]
  %v798 = vld [vmem:[%s3 + $0x14] sm:$0xf]
  %v799 = vld [vmem:[%s3 + $0x18] sm:$0xf]
  %v800 = vld [vmem:[%s3 + $0x1c] sm:$0xf]
  %v801 = vld [vmem:[%s3 + $0x20] sm:$0xf]
  %v802 = vld [vmem:[%s3 + $0x24] sm:$0xf]
  %v803 = vld [vmem:[%s3 + $0x28] sm:$0xf]
  %v804 = vld [vmem:[%s3 + $0x2c] sm:$0xf]
  %v805 = vld [vmem:[%s3 + $0x30] sm:$0xf]
  %v806 = vld [vmem:[%s3 + $0x34] sm:$0xf]
  %v807 = vld [vmem:[%s3 + $0x38] sm:$0xf]
  %v808 = vld [vmem:[%s3 + $0x3c] sm:$0xf]
  %v809 = vld [vmem:[%s4] sm:$0x1]
  %v811 = vperm.slane %v809, 0
  %v829 = vunpack.c.l.b16 %v761
  %v830 = vunpack.c.l.b16 %v762
  %v831 = vunpack.c.l.b16 %v763
  %v832 = vunpack.c.l.b16 %v764
  %v833 = vunpack.c.l.b16 %v765
  %v834 = vunpack.c.l.b16 %v766
  %v835 = vunpack.c.l.b16 %v767
  %v836 = vunpack.c.l.b16 %v768
  %v837 = vunpack.c.l.b16 %v769
  %v838 = vunpack.c.l.b16 %v770
  %v839 = vunpack.c.l.b16 %v771
  %v840 = vunpack.c.l.b16 %v772
  %v841 = vunpack.c.l.b16 %v773
  %v842 = vunpack.c.l.b16 %v774
  %v843 = vunpack.c.l.b16 %v775
  %v844 = vunpack.c.l.b16 %v776
  %v845 = vpack.c.b16 %v830, %v829
  %v846 = vpack.c.b16 %v832, %v831
  %v847 = vpack.c.b16 %v834, %v833
  %v848 = vpack.c.b16 %v836, %v835
  %v849 = vpack.c.b16 %v838, %v837
  %v850 = vpack.c.b16 %v840, %v839
  %v851 = vpack.c.b16 %v842, %v841
  %v852 = vpack.c.b16 %v844, %v843
  %v877 = vunpack.c.l.b16 %v793
  %v878 = vunpack.c.l.b16 %v794
  %v879 = vunpack.c.l.b16 %v795
  %v880 = vunpack.c.l.b16 %v796
  %v881 = vunpack.c.l.b16 %v797
  %v882 = vunpack.c.l.b16 %v798
  %v883 = vunpack.c.l.b16 %v799
  %v884 = vunpack.c.l.b16 %v800
  %v885 = vunpack.c.l.b16 %v801
  %v886 = vunpack.c.l.b16 %v802
  %v887 = vunpack.c.l.b16 %v803
  %v888 = vunpack.c.l.b16 %v804
  %v889 = vunpack.c.l.b16 %v805
  %v890 = vunpack.c.l.b16 %v806
  %v891 = vunpack.c.l.b16 %v807
  %v892 = vunpack.c.l.b16 %v808
  %v893 = vpack.c.b16 %v878, %v877
  %v894 = vpack.c.b16 %v880, %v879
  %v895 = vpack.c.b16 %v882, %v881
  %v896 = vpack.c.b16 %v884, %v883
  %v897 = vpack.c.b16 %v886, %v885
  %v898 = vpack.c.b16 %v888, %v887
  %v899 = vpack.c.b16 %v890, %v889
  %v900 = vpack.c.b16 %v892, %v891
  %909 = vmatpush.bf16.msra.mxu0 %v900
  %910 = vmatpush.bf16.msra.mxu0 %v899
  %911 = vmatpush.bf16.msra.mxu0 %v898
  %912 = vmatpush.bf16.msra.mxu0 %v897
  %913 = vmatpush.bf16.msra.mxu0 %v896
  %914 = vmatpush.bf16.msra.mxu0 %v895
  %915 = vmatpush.bf16.msra.mxu0 %v894
  %916 = vmatpush.bf16.msra.mxu0 %v893
  %917 = vmatmul.bf16.gmra.mxu0 %v845
  %v918 = vpop.f32.mrf.mxu0
  %v919 = vadd.f32 %v811, %v918
  %v920 = vpop.f32.mrf.mxu0
  %v921 = vadd.f32 %v811, %v920
  %922 = vmatmul.bf16.gmra.mxu0 %v846
  %v923 = vpop.f32.mrf.mxu0
  %v924 = vadd.f32 %v811, %v923
  %v925 = vpop.f32.mrf.mxu0
  %v926 = vadd.f32 %v811, %v925
  %927 = vmatmul.bf16.gmra.mxu0 %v847
  %v928 = vpop.f32.mrf.mxu0
  %v929 = vadd.f32 %v811, %v928
  %v930 = vpop.f32.mrf.mxu0
  %v931 = vadd.f32 %v811, %v930
  %932 = vmatmul.bf16.gmra.mxu0 %v848
  %v933 = vpop.f32.mrf.mxu0
  %v934 = vadd.f32 %v811, %v933
  %v935 = vpop.f32.mrf.mxu0
  %v936 = vadd.f32 %v811, %v935
  %937 = vmatmul.bf16.gmra.mxu0 %v849
  %v938 = vpop.f32.mrf.mxu0
  %v939 = vadd.f32 %v811, %v938
  %v940 = vpop.f32.mrf.mxu0
  %v941 = vadd.f32 %v811, %v940
  %942 = vmatmul.bf16.gmra.mxu0 %v850
  %v943 = vpop.f32.mrf.mxu0
  %v944 = vadd.f32 %v811, %v943
  %v945 = vpop.f32.mrf.mxu0
  %v946 = vadd.f32 %v811, %v945
  %947 = vmatmul.bf16.gmra.mxu0 %v851
  %v948 = vpop.f32.mrf.mxu0
  %v949 = vadd.f32 %v811, %v948
  %v950 = vpop.f32.mrf.mxu0
  %v951 = vadd.f32 %v811, %v950
  %952 = vmatmul.bf16.gmra.mxu0 %v852
  %v953 = vpop.f32.mrf.mxu0
  %v954 = vadd.f32 %v811, %v953
  %v955 = vpop.f32.mrf.mxu0
  %v956 = vadd.f32 %v811, %v955
  %957 = vdwg.mxu0
  %v958 = vmax.f32 %v919, 0.0
  %v959 = vmax.f32 %v921, 0.0
  %v960 = vmax.f32 %v924, 0.0
  %v961 = vmax.f32 %v926, 0.0
  %v962 = vmax.f32 %v929, 0.0
  %v963 = vmax.f32 %v931, 0.0
  %v964 = vmax.f32 %v934, 0.0
  %v965 = vmax.f32 %v936, 0.0
  %v966 = vmax.f32 %v939, 0.0
  %v967 = vmax.f32 %v941, 0.0
  %v968 = vmax.f32 %v944, 0.0
  %v969 = vmax.f32 %v946, 0.0
  %v970 = vmax.f32 %v949, 0.0
  %v971 = vmax.f32 %v951, 0.0
  %v972 = vmax.f32 %v954, 0.0
  %v973 = vmax.f32 %v956, 0.0
  %v974 = vpack.c.bf16 %v959, %v958
  %v975 = vpack.c.bf16 %v961, %v960
  %v976 = vpack.c.bf16 %v963, %v962
  %v977 = vpack.c.bf16 %v965, %v964
  %v978 = vpack.c.bf16 %v967, %v966
  %v979 = vpack.c.bf16 %v969, %v968
  %v980 = vpack.c.bf16 %v971, %v970
  %v981 = vpack.c.bf16 %v973, %v972
  %v982 = vld [vmem:[%s5] sm:$0xf]
  %v983 = vld [vmem:[%s5 + $0x4] sm:$0xf]
  %v984 = vld [vmem:[%s5 + $0x8] sm:$0xf]
  %v985 = vld [vmem:[%s5 + $0xc] sm:$0xf]
  %v986 = vld [vmem:[%s5 + $0x10] sm:$0xf]
  %v987 = vld [vmem:[%s5 + $0x14] sm:$0xf]
  %v988 = vld [vmem:[%s5 + $0x18] sm:$0xf]
  %v989 = vld [vmem:[%s5 + $0x1c] sm:$0xf]
  %v990 = vld [vmem:[%s5 + $0x20] sm:$0xf]
  %v991 = vld [vmem:[%s5 + $0x24] sm:$0xf]
  %v992 = vld [vmem:[%s5 + $0x28] sm:$0xf]
  %v993 = vld [vmem:[%s5 + $0x2c] sm:$0xf]
  %v994 = vld [vmem:[%s5 + $0x30] sm:$0xf]
  %v995 = vld [vmem:[%s5 + $0x34] sm:$0xf]
  %v996 = vld [vmem:[%s5 + $0x38] sm:$0xf]
  %v997 = vld [vmem:[%s5 + $0x3c] sm:$0xf]
  %v998 = vld [vmem:[%s6] sm:$0x1]
  %v1000 = vperm.slane %v998, 0
  %v1018 = vunpack.c.l.b16 %v982
  %v1019 = vunpack.c.l.b16 %v983
  %v1020 = vunpack.c.l.b16 %v984
  %v1021 = vunpack.c.l.b16 %v985
  %v1022 = vunpack.c.l.b16 %v986
  %v1023 = vunpack.c.l.b16 %v987
  %v1024 = vunpack.c.l.b16 %v988
  %v1025 = vunpack.c.l.b16 %v989
  %v1026 = vunpack.c.l.b16 %v990
  %v1027 = vunpack.c.l.b16 %v991
  %v1028 = vunpack.c.l.b16 %v992
  %v1029 = vunpack.c.l.b16 %v993
  %v1030 = vunpack.c.l.b16 %v994
  %v1031 = vunpack.c.l.b16 %v995
  %v1032 = vunpack.c.l.b16 %v996
  %v1033 = vunpack.c.l.b16 %v997
  %v1034 = vpack.c.b16 %v1019, %v1018
  %v1035 = vpack.c.b16 %v1021, %v1020
  %v1036 = vpack.c.b16 %v1023, %v1022
  %v1037 = vpack.c.b16 %v1025, %v1024
  %v1038 = vpack.c.b16 %v1027, %v1026
  %v1039 = vpack.c.b16 %v1029, %v1028
  %v1040 = vpack.c.b16 %v1031, %v1030
  %v1041 = vpack.c.b16 %v1033, %v1032
  %1050 = vmatpush.bf16.msra.mxu0 %v1041
  %1051 = vmatpush.bf16.msra.mxu0 %v1040
  %1052 = vmatpush.bf16.msra.mxu0 %v1039
  %1053 = vmatpush.bf16.msra.mxu0 %v1038
  %1054 = vmatpush.bf16.msra.mxu0 %v1037
  %1055 = vmatpush.bf16.msra.mxu0 %v1036
  %1056 = vmatpush.bf16.msra.mxu0 %v1035
  %1057 = vmatpush.bf16.msra.mxu0 %v1034
  %1058 = vmatmul.bf16.gmra.mxu0 %v974
  %v1059 = vpop.f32.mrf.mxu0
  %v1060 = vadd.f32 %v1000, %v1059
  %v1061 = vpop.f32.mrf.mxu0
  %v1062 = vadd.f32 %v1000, %v1061
  %1063 = vmatmul.bf16.gmra.mxu0 %v975
  %v1064 = vpop.f32.mrf.mxu0
  %v1065 = vadd.f32 %v1000, %v1064
  %v1066 = vpop.f32.mrf.mxu0
  %v1067 = vadd.f32 %v1000, %v1066
  %1068 = vmatmul.bf16.gmra.mxu0 %v976
  %v1069 = vpop.f32.mrf.mxu0
  %v1070 = vadd.f32 %v1000, %v1069
  %v1071 = vpop.f32.mrf.mxu0
  %v1072 = vadd.f32 %v1000, %v1071
  %1073 = vmatmul.bf16.gmra.mxu0 %v977
  %v1074 = vpop.f32.mrf.mxu0
  %v1075 = vadd.f32 %v1000, %v1074
  %v1076 = vpop.f32.mrf.mxu0
  %v1077 = vadd.f32 %v1000, %v1076
  %1078 = vmatmul.bf16.gmra.mxu0 %v978
  %v1079 = vpop.f32.mrf.mxu0
  %v1080 = vadd.f32 %v1000, %v1079
  %v1081 = vpop.f32.mrf.mxu0
  %v1082 = vadd.f32 %v1000, %v1081
  %1083 = vmatmul.bf16.gmra.mxu0 %v979
  %v1084 = vpop.f32.mrf.mxu0
  %v1085 = vadd.f32 %v1000, %v1084
  %v1086 = vpop.f32.mrf.mxu0
  %v1087 = vadd.f32 %v1000, %v1086
  %1088 = vmatmul.bf16.gmra.mxu0 %v980
  %v1089 = vpop.f32.mrf.mxu0
  %v1090 = vadd.f32 %v1000, %v1089
  %v1091 = vpop.f32.mrf.mxu0
  %v1092 = vadd.f32 %v1000, %v1091
  %1093 = vmatmul.bf16.gmra.mxu0 %v981
  %v1094 = vpop.f32.mrf.mxu0
  %v1095 = vadd.f32 %v1000, %v1094
  %v1096 = vpop.f32.mrf.mxu0
  %v1097 = vadd.f32 %v1000, %v1096
  %1098 = vdwg.mxu0
  %v1099 = vmax.f32 %v1060, 0.0
  %v1100 = vmax.f32 %v1062, 0.0
  %v1101 = vmax.f32 %v1065, 0.0
  %v1102 = vmax.f32 %v1067, 0.0
  %v1103 = vmax.f32 %v1070, 0.0
  %v1104 = vmax.f32 %v1072, 0.0
  %v1105 = vmax.f32 %v1075, 0.0
  %v1106 = vmax.f32 %v1077, 0.0
  %v1107 = vmax.f32 %v1080, 0.0
  %v1108 = vmax.f32 %v1082, 0.0
  %v1109 = vmax.f32 %v1085, 0.0
  %v1110 = vmax.f32 %v1087, 0.0
  %v1111 = vmax.f32 %v1090, 0.0
  %v1112 = vmax.f32 %v1092, 0.0
  %v1113 = vmax.f32 %v1095, 0.0
  %v1114 = vmax.f32 %v1097, 0.0
  %v1115 = vpack.c.bf16 %v1099, %v1099
  %v1116 = vpack.c.bf16 %v1100, %v1100
  %v1117 = vpack.c.bf16 %v1101, %v1101
  %v1118 = vpack.c.bf16 %v1102, %v1102
  %v1119 = vpack.c.bf16 %v1103, %v1103
  %v1120 = vpack.c.bf16 %v1104, %v1104
  %v1121 = vpack.c.bf16 %v1105, %v1105
  %v1122 = vpack.c.bf16 %v1106, %v1106
  %v1123 = vpack.c.bf16 %v1107, %v1107
  %v1124 = vpack.c.bf16 %v1108, %v1108
  %v1125 = vpack.c.bf16 %v1109, %v1109
  %v1126 = vpack.c.bf16 %v1110, %v1110
  %v1127 = vpack.c.bf16 %v1111, %v1111
  %v1128 = vpack.c.bf16 %v1112, %v1112
  %v1129 = vpack.c.bf16 %v1113, %v1113
  %v1130 = vpack.c.bf16 %v1114, %v1114
  %1131 = vst [vmem:[%s8] sm:$0xf] %v1115
  %1132 = vst [vmem:[%s8 + $0x4] sm:$0xf] %v1116
  %1133 = vst [vmem:[%s8 + $0x8] sm:$0xf] %v1117
  %1134 = vst [vmem:[%s8 + $0xc] sm:$0xf] %v1118
  %1135 = vst [vmem:[%s8 + $0x10] sm:$0xf] %v1119
  %1136 = vst [vmem:[%s8 + $0x14] sm:$0xf] %v1120
  %1137 = vst [vmem:[%s8 + $0x18] sm:$0xf] %v1121
  %1138 = vst [vmem:[%s8 + $0x1c] sm:$0xf] %v1122
  %1139 = vst [vmem:[%s8 + $0x20] sm:$0xf] %v1123
  %1140 = vst [vmem:[%s8 + $0x24] sm:$0xf] %v1124
  %1141 = vst [vmem:[%s8 + $0x28] sm:$0xf] %v1125
  %1142 = vst [vmem:[%s8 + $0x2c] sm:$0xf] %v1126
  %1143 = vst [vmem:[%s8 + $0x30] sm:$0xf] %v1127
  %1144 = vst [vmem:[%s8 + $0x34] sm:$0xf] %v1128
  %1145 = vst [vmem:[%s8 + $0x38] sm:$0xf] %v1129
  %1146 = vst [vmem:[%s8 + $0x3c] sm:$0xf] %v1130
  // Predicated region
  $region30: #{densenet2_forward.8} parent=0 // pred_check
    _
  $region31: #{densenet2_forward.8} parent=0 // pred_check_branch
    %1148 = sbr.rel (0) target = $region33
  $region32: #{densenet2_forward.8} parent=0 // pred_region
    _
  $region33: #{densenet2_forward.8} parent=0 // pred_fallthru
    _
  // Predicated region
  $region34: #{densenet2_forward.8} parent=0 // pred_check
    _
  $region35: #{densenet2_forward.8} parent=0 // pred_check_branch
    %1150 = sbr.rel (0) target = $region37
  $region36: #{densenet2_forward.8} parent=0 // pred_region
    _
  $region37: #{densenet2_forward.8} parent=0 // pred_fallthru
    _
  // Predicated region
  $region38: #{densenet2_forward.8} parent=0 // pred_check
    _
  $region39: #{densenet2_forward.8} parent=0 // pred_check_branch
    %1152 = sbr.rel (0) target = $region41
  $region40: #{densenet2_forward.8} parent=0 // pred_region
    _
  $region41: #{densenet2_forward.8} parent=0 // pred_fallthru
    _
  // Predicated region
  $region42: #{densenet2_forward.8} parent=0 // pred_check
    _
  $region43: #{densenet2_forward.8} parent=0 // pred_check_branch
    %1154 = sbr.rel (0) target = $region45
  $region44: #{densenet2_forward.8} parent=0 // pred_region
    _
  $region45: #{densenet2_forward.8} parent=0 // pred_fallthru
    _

// kernel: densenet2_forward.11
$region0: #{densenet2_forward.11}
  #allocation0 [shape = 'u32[]', space=smem, size = 0x4, offset = 0x4, fixed_abs, tag = 'smem constant byte address 0x4 - core index']
  #allocation1 [shape = 'u32[72,128]{1,0:T(1,128)}', space=vmem, size = 0x9000, scoped, tag = 'internal scratch']
  %s0 = inlined_call_operand.vmem [shape: bf16[128,128], index: 0, kind: input, shape index: {}]
  %s1 = inlined_call_operand.vmem [shape: bf16[128,128], index: 1, kind: input, shape index: {}]
  %s2 = inlined_call_operand.vmem [shape: bf16[128,128], index: 2, kind: input, shape index: {}]
  %s3 = inlined_call_operand.vmem [shape: f32[128,128], index: 3, kind: output, shape index: {}]
  %s4 = sld [smem:[#allocation0]]
  $region22: #{densenet2_forward.11} parent=0
    _
  %s6 = ssub.s32 1, %s4
  %s7 = scalar_select 0, %s6, %s4
  // Predicated region
  $region2: #{densenet2_forward.11} parent=0 // pred_check
    _
  $region3: #{densenet2_forward.11} parent=0 // pred_check_branch
    %9 = sbr.rel (0) target = $region5
  $region4: #{densenet2_forward.11} parent=0 // pred_region
    _
  $region5: #{densenet2_forward.11} parent=0 // pred_fallthru
    _
  // Predicated region
  $region6: #{densenet2_forward.11} parent=0 // pred_check
    _
  $region7: #{densenet2_forward.11} parent=0 // pred_check_branch
    %11 = sbr.rel (0) target = $region9
  $region8: #{densenet2_forward.11} parent=0 // pred_region
    _
  $region9: #{densenet2_forward.11} parent=0 // pred_fallthru
    _
  // Predicated region
  $region10: #{densenet2_forward.11} parent=0 // pred_check
    _
  $region11: #{densenet2_forward.11} parent=0 // pred_check_branch
    %13 = sbr.rel (0) target = $region13
  $region12: #{densenet2_forward.11} parent=0 // pred_region
    _
  $region13: #{densenet2_forward.11} parent=0 // pred_fallthru
    _
  %v14 = vld [vmem:[%s0] sm:$0xf]
  %v15 = vld [vmem:[%s0 + $0x4] sm:$0xf]
  %v16 = vld [vmem:[%s0 + $0x8] sm:$0xf]
  %v17 = vld [vmem:[%s0 + $0xc] sm:$0xf]
  %v18 = vld [vmem:[%s0 + $0x10] sm:$0xf]
  %v19 = vld [vmem:[%s0 + $0x14] sm:$0xf]
  %v20 = vld [vmem:[%s0 + $0x18] sm:$0xf]
  %v21 = vld [vmem:[%s0 + $0x1c] sm:$0xf]
  %v22 = vld [vmem:[%s0 + $0x20] sm:$0xf]
  %v23 = vld [vmem:[%s0 + $0x24] sm:$0xf]
  %v24 = vld [vmem:[%s0 + $0x28] sm:$0xf]
  %v25 = vld [vmem:[%s0 + $0x2c] sm:$0xf]
  %v26 = vld [vmem:[%s0 + $0x30] sm:$0xf]
  %v27 = vld [vmem:[%s0 + $0x34] sm:$0xf]
  %v28 = vld [vmem:[%s0 + $0x38] sm:$0xf]
  %v29 = vld [vmem:[%s0 + $0x3c] sm:$0xf]
  %v30 = vld [vmem:[%s1] sm:$0xf]
  %v31 = vld [vmem:[%s1 + $0x4] sm:$0xf]
  %v32 = vld [vmem:[%s1 + $0x8] sm:$0xf]
  %v33 = vld [vmem:[%s1 + $0xc] sm:$0xf]
  %v34 = vld [vmem:[%s1 + $0x10] sm:$0xf]
  %v35 = vld [vmem:[%s1 + $0x14] sm:$0xf]
  %v36 = vld [vmem:[%s1 + $0x18] sm:$0xf]
  %v37 = vld [vmem:[%s1 + $0x1c] sm:$0xf]
  %v38 = vld [vmem:[%s1 + $0x20] sm:$0xf]
  %v39 = vld [vmem:[%s1 + $0x24] sm:$0xf]
  %v40 = vld [vmem:[%s1 + $0x28] sm:$0xf]
  %v41 = vld [vmem:[%s1 + $0x2c] sm:$0xf]
  %v42 = vld [vmem:[%s1 + $0x30] sm:$0xf]
  %v43 = vld [vmem:[%s1 + $0x34] sm:$0xf]
  %v44 = vld [vmem:[%s1 + $0x38] sm:$0xf]
  %v45 = vld [vmem:[%s1 + $0x3c] sm:$0xf]
  %v62 = vunpack.c.l.b16 %v14
  %v63 = vunpack.c.l.b16 %v15
  %v64 = vunpack.c.l.b16 %v16
  %v65 = vunpack.c.l.b16 %v17
  %v66 = vunpack.c.l.b16 %v18
  %v67 = vunpack.c.l.b16 %v19
  %v68 = vunpack.c.l.b16 %v20
  %v69 = vunpack.c.l.b16 %v21
  %v70 = vunpack.c.l.b16 %v22
  %v71 = vunpack.c.l.b16 %v23
  %v72 = vunpack.c.l.b16 %v24
  %v73 = vunpack.c.l.b16 %v25
  %v74 = vunpack.c.l.b16 %v26
  %v75 = vunpack.c.l.b16 %v27
  %v76 = vunpack.c.l.b16 %v28
  %v77 = vunpack.c.l.b16 %v29
  %v78 = vpack.c.b16 %v63, %v62
  %v79 = vpack.c.b16 %v65, %v64
  %v80 = vpack.c.b16 %v67, %v66
  %v81 = vpack.c.b16 %v69, %v68
  %v82 = vpack.c.b16 %v71, %v70
  %v83 = vpack.c.b16 %v73, %v72
  %v84 = vpack.c.b16 %v75, %v74
  %v85 = vpack.c.b16 %v77, %v76
  %v110 = vunpack.c.l.b16 %v30
  %v111 = vunpack.c.l.b16 %v31
  %v112 = vunpack.c.l.b16 %v32
  %v113 = vunpack.c.l.b16 %v33
  %v114 = vunpack.c.l.b16 %v34
  %v115 = vunpack.c.l.b16 %v35
  %v116 = vunpack.c.l.b16 %v36
  %v117 = vunpack.c.l.b16 %v37
  %v118 = vunpack.c.l.b16 %v38
  %v119 = vunpack.c.l.b16 %v39
  %v120 = vunpack.c.l.b16 %v40
  %v121 = vunpack.c.l.b16 %v41
  %v122 = vunpack.c.l.b16 %v42
  %v123 = vunpack.c.l.b16 %v43
  %v124 = vunpack.c.l.b16 %v44
  %v125 = vunpack.c.l.b16 %v45
  %v126 = vpack.c.b16 %v111, %v110
  %v127 = vpack.c.b16 %v113, %v112
  %v128 = vpack.c.b16 %v115, %v114
  %v129 = vpack.c.b16 %v117, %v116
  %v130 = vpack.c.b16 %v119, %v118
  %v131 = vpack.c.b16 %v121, %v120
  %v132 = vpack.c.b16 %v123, %v122
  %v133 = vpack.c.b16 %v125, %v124
  %142 = vmatpush.bf16.msra.mxu0 %v133
  %143 = vmatpush.bf16.msra.mxu0 %v132
  %144 = vmatpush.bf16.msra.mxu0 %v131
  %145 = vmatpush.bf16.msra.mxu0 %v130
  %146 = vmatpush.bf16.msra.mxu0 %v129
  %147 = vmatpush.bf16.msra.mxu0 %v128
  %148 = vmatpush.bf16.msra.mxu0 %v127
  %149 = vmatpush.bf16.msra.mxu0 %v126
  %150 = vmatmul.bf16.gmra.mxu0 %v78
  %v151 = vpop.f32.mrf.mxu0
  %v152 = vadd.f32 0.0, %v151
  %v153 = vpop.f32.mrf.mxu0
  %v154 = vadd.f32 0.0, %v153
  %155 = vmatmul.bf16.gmra.mxu0 %v79
  %v156 = vpop.f32.mrf.mxu0
  %v157 = vadd.f32 0.0, %v156
  %v158 = vpop.f32.mrf.mxu0
  %v159 = vadd.f32 0.0, %v158
  %160 = vmatmul.bf16.gmra.mxu0 %v80
  %v161 = vpop.f32.mrf.mxu0
  %v162 = vadd.f32 0.0, %v161
  %v163 = vpop.f32.mrf.mxu0
  %v164 = vadd.f32 0.0, %v163
  %165 = vmatmul.bf16.gmra.mxu0 %v81
  %v166 = vpop.f32.mrf.mxu0
  %v167 = vadd.f32 0.0, %v166
  %v168 = vpop.f32.mrf.mxu0
  %v169 = vadd.f32 0.0, %v168
  %170 = vmatmul.bf16.gmra.mxu0 %v82
  %v171 = vpop.f32.mrf.mxu0
  %v172 = vadd.f32 0.0, %v171
  %v173 = vpop.f32.mrf.mxu0
  %v174 = vadd.f32 0.0, %v173
  %175 = vmatmul.bf16.gmra.mxu0 %v83
  %v176 = vpop.f32.mrf.mxu0
  %v177 = vadd.f32 0.0, %v176
  %v178 = vpop.f32.mrf.mxu0
  %v179 = vadd.f32 0.0, %v178
  %180 = vmatmul.bf16.gmra.mxu0 %v84
  %v181 = vpop.f32.mrf.mxu0
  %v182 = vadd.f32 0.0, %v181
  %v183 = vpop.f32.mrf.mxu0
  %v184 = vadd.f32 0.0, %v183
  %185 = vmatmul.bf16.gmra.mxu0 %v85
  %v186 = vpop.f32.mrf.mxu0
  %v187 = vadd.f32 0.0, %v186
  %v188 = vpop.f32.mrf.mxu0
  %v189 = vadd.f32 0.0, %v188
  %190 = vdwg.mxu0
  %v191 = vpack.c.bf16 %v154, %v152
  %v192 = vpack.c.bf16 %v159, %v157
  %v193 = vpack.c.bf16 %v164, %v162
  %v194 = vpack.c.bf16 %v169, %v167
  %v195 = vpack.c.bf16 %v174, %v172
  %v196 = vpack.c.bf16 %v179, %v177
  %v197 = vpack.c.bf16 %v184, %v182
  %v198 = vpack.c.bf16 %v189, %v187
  %v199 = vld [vmem:[%s2] sm:$0xf]
  %v200 = vld [vmem:[%s2 + $0x4] sm:$0xf]
  %v201 = vld [vmem:[%s2 + $0x8] sm:$0xf]
  %v202 = vld [vmem:[%s2 + $0xc] sm:$0xf]
  %v203 = vld [vmem:[%s2 + $0x10] sm:$0xf]
  %v204 = vld [vmem:[%s2 + $0x14] sm:$0xf]
  %v205 = vld [vmem:[%s2 + $0x18] sm:$0xf]
  %v206 = vld [vmem:[%s2 + $0x1c] sm:$0xf]
  %v207 = vld [vmem:[%s2 + $0x20] sm:$0xf]
  %v208 = vld [vmem:[%s2 + $0x24] sm:$0xf]
  %v209 = vld [vmem:[%s2 + $0x28] sm:$0xf]
  %v210 = vld [vmem:[%s2 + $0x2c] sm:$0xf]
  %v211 = vld [vmem:[%s2 + $0x30] sm:$0xf]
  %v212 = vld [vmem:[%s2 + $0x34] sm:$0xf]
  %v213 = vld [vmem:[%s2 + $0x38] sm:$0xf]
  %v214 = vld [vmem:[%s2 + $0x3c] sm:$0xf]
  %v231 = vunpack.c.l.b16 %v199
  %v232 = vunpack.c.l.b16 %v200
  %v233 = vunpack.c.l.b16 %v201
  %v234 = vunpack.c.l.b16 %v202
  %v235 = vunpack.c.l.b16 %v203
  %v236 = vunpack.c.l.b16 %v204
  %v237 = vunpack.c.l.b16 %v205
  %v238 = vunpack.c.l.b16 %v206
  %v239 = vunpack.c.l.b16 %v207
  %v240 = vunpack.c.l.b16 %v208
  %v241 = vunpack.c.l.b16 %v209
  %v242 = vunpack.c.l.b16 %v210
  %v243 = vunpack.c.l.b16 %v211
  %v244 = vunpack.c.l.b16 %v212
  %v245 = vunpack.c.l.b16 %v213
  %v246 = vunpack.c.l.b16 %v214
  %v247 = vpack.c.b16 %v232, %v231
  %v248 = vpack.c.b16 %v234, %v233
  %v249 = vpack.c.b16 %v236, %v235
  %v250 = vpack.c.b16 %v238, %v237
  %v251 = vpack.c.b16 %v240, %v239
  %v252 = vpack.c.b16 %v242, %v241
  %v253 = vpack.c.b16 %v244, %v243
  %v254 = vpack.c.b16 %v246, %v245
  %263 = vmatpush.bf16.msra.mxu0 %v254
  %264 = vmatpush.bf16.msra.mxu0 %v253
  %265 = vmatpush.bf16.msra.mxu0 %v252
  %266 = vmatpush.bf16.msra.mxu0 %v251
  %267 = vmatpush.bf16.msra.mxu0 %v250
  %268 = vmatpush.bf16.msra.mxu0 %v249
  %269 = vmatpush.bf16.msra.mxu0 %v248
  %270 = vmatpush.bf16.msra.mxu0 %v247
  %271 = vmatmul.bf16.gmra.mxu0 %v191
  %v272 = vpop.f32.mrf.mxu0
  %v273 = vadd.f32 0.0, %v272
  %v274 = vpop.f32.mrf.mxu0
  %v275 = vadd.f32 0.0, %v274
  %276 = vmatmul.bf16.gmra.mxu0 %v192
  %v277 = vpop.f32.mrf.mxu0
  %v278 = vadd.f32 0.0, %v277
  %v279 = vpop.f32.mrf.mxu0
  %v280 = vadd.f32 0.0, %v279
  %281 = vmatmul.bf16.gmra.mxu0 %v193
  %v282 = vpop.f32.mrf.mxu0
  %v283 = vadd.f32 0.0, %v282
  %v284 = vpop.f32.mrf.mxu0
  %v285 = vadd.f32 0.0, %v284
  %286 = vmatmul.bf16.gmra.mxu0 %v194
  %v287 = vpop.f32.mrf.mxu0
  %v288 = vadd.f32 0.0, %v287
  %v289 = vpop.f32.mrf.mxu0
  %v290 = vadd.f32 0.0, %v289
  %291 = vmatmul.bf16.gmra.mxu0 %v195
  %v292 = vpop.f32.mrf.mxu0
  %v293 = vadd.f32 0.0, %v292
  %v294 = vpop.f32.mrf.mxu0
  %v295 = vadd.f32 0.0, %v294
  %296 = vmatmul.bf16.gmra.mxu0 %v196
  %v297 = vpop.f32.mrf.mxu0
  %v298 = vadd.f32 0.0, %v297
  %v299 = vpop.f32.mrf.mxu0
  %v300 = vadd.f32 0.0, %v299
  %301 = vmatmul.bf16.gmra.mxu0 %v197
  %v302 = vpop.f32.mrf.mxu0
  %v303 = vadd.f32 0.0, %v302
  %v304 = vpop.f32.mrf.mxu0
  %v305 = vadd.f32 0.0, %v304
  %306 = vmatmul.bf16.gmra.mxu0 %v198
  %v307 = vpop.f32.mrf.mxu0
  %v308 = vadd.f32 0.0, %v307
  %v309 = vpop.f32.mrf.mxu0
  %v310 = vadd.f32 0.0, %v309
  %311 = vdwg.mxu0
  %v312 = vlaneseq
  %v313 = vand.u32 %v312, 127
  %vm314 = vcmp.lt.s32.totalorder %v313, 8
  %v315 = vsel %vm314, %v273, -1e+30
  %v316 = vsel %vm314, %v275, -1e+30
  %v317 = vsel %vm314, %v278, -1e+30
  %v318 = vsel %vm314, %v280, -1e+30
  %v319 = vsel %vm314, %v283, -1e+30
  %v320 = vsel %vm314, %v285, -1e+30
  %v321 = vsel %vm314, %v288, -1e+30
  %v322 = vsel %vm314, %v290, -1e+30
  %v323 = vsel %vm314, %v293, -1e+30
  %v324 = vsel %vm314, %v295, -1e+30
  %v325 = vsel %vm314, %v298, -1e+30
  %v326 = vsel %vm314, %v300, -1e+30
  %v327 = vsel %vm314, %v303, -1e+30
  %v328 = vsel %vm314, %v305, -1e+30
  %v329 = vsel %vm314, %v308, -1e+30
  %v330 = vsel %vm314, %v310, -1e+30
  %331 = vmax.xlane.f32.xlu0 %v315
  %v332 = vpop.xlane.xlu0 %331
  %333 = vmax.xlane.f32.xlu0 %v316
  %v334 = vpop.xlane.xlu0 %333
  %335 = vmax.xlane.f32.xlu0 %v317
  %v336 = vpop.xlane.xlu0 %335
  %337 = vmax.xlane.f32.xlu0 %v318
  %v338 = vpop.xlane.xlu0 %337
  %339 = vmax.xlane.f32.xlu0 %v319
  %v340 = vpop.xlane.xlu0 %339
  %341 = vmax.xlane.f32.xlu0 %v320
  %v342 = vpop.xlane.xlu0 %341
  %343 = vmax.xlane.f32.xlu0 %v321
  %v344 = vpop.xlane.xlu0 %343
  %345 = vmax.xlane.f32.xlu0 %v322
  %v346 = vpop.xlane.xlu0 %345
  %347 = vmax.xlane.f32.xlu0 %v323
  %v348 = vpop.xlane.xlu0 %347
  %349 = vmax.xlane.f32.xlu0 %v324
  %v350 = vpop.xlane.xlu0 %349
  %351 = vmax.xlane.f32.xlu0 %v325
  %v352 = vpop.xlane.xlu0 %351
  %353 = vmax.xlane.f32.xlu0 %v326
  %v354 = vpop.xlane.xlu0 %353
  %355 = vmax.xlane.f32.xlu0 %v327
  %v356 = vpop.xlane.xlu0 %355
  %357 = vmax.xlane.f32.xlu0 %v328
  %v358 = vpop.xlane.xlu0 %357
  %359 = vmax.xlane.f32.xlu0 %v329
  %v360 = vpop.xlane.xlu0 %359
  %361 = vmax.xlane.f32.xlu0 %v330
  %v362 = vpop.xlane.xlu0 %361
  %v363 = vsub.f32 %v315, %v332
  %v364 = vsub.f32 %v316, %v334
  %v365 = vsub.f32 %v317, %v336
  %v366 = vsub.f32 %v318, %v338
  %v367 = vsub.f32 %v319, %v340
  %v368 = vsub.f32 %v320, %v342
  %v369 = vsub.f32 %v321, %v344
  %v370 = vsub.f32 %v322, %v346
  %v371 = vsub.f32 %v323, %v348
  %v372 = vsub.f32 %v324, %v350
  %v373 = vsub.f32 %v325, %v352
  %v374 = vsub.f32 %v326, %v354
  %v375 = vsub.f32 %v327, %v356
  %v376 = vsub.f32 %v328, %v358
  %v377 = vsub.f32 %v329, %v360
  %v378 = vsub.f32 %v330, %v362
  %v379 = vmul.f32 %v363, 1.442695
  %v380 = vpow.pop %v379
  %v381 = vmul.f32 %v364, 1.442695
  %v382 = vpow.pop %v381
  %v383 = vmul.f32 %v365, 1.442695
  %v384 = vpow.pop %v383
  %v385 = vmul.f32 %v366, 1.442695
  %v386 = vpow.pop %v385
  %v387 = vmul.f32 %v367, 1.442695
  %v388 = vpow.pop %v387
  %v389 = vmul.f32 %v368, 1.442695
  %v390 = vpow.pop %v389
  %v391 = vmul.f32 %v369, 1.442695
  %v392 = vpow.pop %v391
  %v393 = vmul.f32 %v370, 1.442695
  %v394 = vpow.pop %v393
  %v395 = vmul.f32 %v371, 1.442695
  %v396 = vpow.pop %v395
  %v397 = vmul.f32 %v372, 1.442695
  %v398 = vpow.pop %v397
  %v399 = vmul.f32 %v373, 1.442695
  %v400 = vpow.pop %v399
  %v401 = vmul.f32 %v374, 1.442695
  %v402 = vpow.pop %v401
  %v403 = vmul.f32 %v375, 1.442695
  %v404 = vpow.pop %v403
  %v405 = vmul.f32 %v376, 1.442695
  %v406 = vpow.pop %v405
  %v407 = vmul.f32 %v377, 1.442695
  %v408 = vpow.pop %v407
  %v409 = vmul.f32 %v378, 1.442695
  %v410 = vpow.pop %v409
  %411 = vadd.xlane.f32.xlu0 %v380
  %v412 = vpop.xlane.xlu0 %411
  %413 = vadd.xlane.f32.xlu0 %v382
  %v414 = vpop.xlane.xlu0 %413
  %415 = vadd.xlane.f32.xlu0 %v384
  %v416 = vpop.xlane.xlu0 %415
  %417 = vadd.xlane.f32.xlu0 %v386
  %v418 = vpop.xlane.xlu0 %417
  %419 = vadd.xlane.f32.xlu0 %v388
  %v420 = vpop.xlane.xlu0 %419
  %421 = vadd.xlane.f32.xlu0 %v390
  %v422 = vpop.xlane.xlu0 %421
  %423 = vadd.xlane.f32.xlu0 %v392
  %v424 = vpop.xlane.xlu0 %423
  %425 = vadd.xlane.f32.xlu0 %v394
  %v426 = vpop.xlane.xlu0 %425
  %427 = vadd.xlane.f32.xlu0 %v396
  %v428 = vpop.xlane.xlu0 %427
  %429 = vadd.xlane.f32.xlu0 %v398
  %v430 = vpop.xlane.xlu0 %429
  %431 = vadd.xlane.f32.xlu0 %v400
  %v432 = vpop.xlane.xlu0 %431
  %433 = vadd.xlane.f32.xlu0 %v402
  %v434 = vpop.xlane.xlu0 %433
  %435 = vadd.xlane.f32.xlu0 %v404
  %v436 = vpop.xlane.xlu0 %435
  %437 = vadd.xlane.f32.xlu0 %v406
  %v438 = vpop.xlane.xlu0 %437
  %439 = vadd.xlane.f32.xlu0 %v408
  %v440 = vpop.xlane.xlu0 %439
  %441 = vadd.xlane.f32.xlu0 %v410
  %v442 = vpop.xlane.xlu0 %441
  %v443 = vrcp.pop %v412
  %v444 = vmul.f32 %v412, %v443
  %v445 = vsub.f32 1.0, %v444
  %v446 = vmul.f32 %v443, %v445
  %v447 = vadd.f32 %v443, %v446
  %vm448 = vweird.f32 %v412
  %vm449 = vweird.f32 %v443
  %vm450 = vmor %vm448, %vm449
  %v451 = vsel %vm450, %v443, %v447
  %v452 = vand.u32 2147483647, %v412
  %vm453 = vcmp.eq.f32.partialorder %v452, 8.507059e+37
  %v454 = vand.u32 %v412, 2147483648
  %v455 = vor.u32 1.1754944e-38, %v454
  %v456 = vsel %vm453, %v455, %v451
  %v457 = vmul.f32 1.0, %v456
  %v458 = vrcp.pop %v414
  %v459 = vmul.f32 %v414, %v458
  %v460 = vsub.f32 1.0, %v459
  %v461 = vmul.f32 %v458, %v460
  %v462 = vadd.f32 %v458, %v461
  %vm463 = vweird.f32 %v414
  %vm464 = vweird.f32 %v458
  %vm465 = vmor %vm463, %vm464
  %v466 = vsel %vm465, %v458, %v462
  %v467 = vand.u32 2147483647, %v414
  %vm468 = vcmp.eq.f32.partialorder %v467, 8.507059e+37
  %v469 = vand.u32 %v414, 2147483648
  %v470 = vor.u32 1.1754944e-38, %v469
  %v471 = vsel %vm468, %v470, %v466
  %v472 = vmul.f32 1.0, %v471
  %v473 = vrcp.pop %v416
  %v474 = vmul.f32 %v416, %v473
  %v475 = vsub.f32 1.0, %v474
  %v476 = vmul.f32 %v473, %v475
  %v477 = vadd.f32 %v473, %v476
  %vm478 = vweird.f32 %v416
  %vm479 = vweird.f32 %v473
  %vm480 = vmor %vm478, %vm479
  %v481 = vsel %vm480, %v473, %v477
  %v482 = vand.u32 2147483647, %v416
  %vm483 = vcmp.eq.f32.partialorder %v482, 8.507059e+37
  %v484 = vand.u32 %v416, 2147483648
  %v485 = vor.u32 1.1754944e-38, %v484
  %v486 = vsel %vm483, %v485, %v481
  %v487 = vmul.f32 1.0, %v486
  %v488 = vrcp.pop %v418
  %v489 = vmul.f32 %v418, %v488
  %v490 = vsub.f32 1.0, %v489
  %v491 = vmul.f32 %v488, %v490
  %v492 = vadd.f32 %v488, %v491
  %vm493 = vweird.f32 %v418
  %vm494 = vweird.f32 %v488
  %vm495 = vmor %vm493, %vm494
  %v496 = vsel %vm495, %v488, %v492
  %v497 = vand.u32 2147483647, %v418
  %vm498 = vcmp.eq.f32.partialorder %v497, 8.507059e+37
  %v499 = vand.u32 %v418, 2147483648
  %v500 = vor.u32 1.1754944e-38, %v499
  %v501 = vsel %vm498, %v500, %v496
  %v502 = vmul.f32 1.0, %v501
  %v503 = vrcp.pop %v420
  %v504 = vmul.f32 %v420, %v503
  %v505 = vsub.f32 1.0, %v504
  %v506 = vmul.f32 %v503, %v505
  %v507 = vadd.f32 %v503, %v506
  %vm508 = vweird.f32 %v420
  %vm509 = vweird.f32 %v503
  %vm510 = vmor %vm508, %vm509
  %v511 = vsel %vm510, %v503, %v507
  %v512 = vand.u32 2147483647, %v420
  %vm513 = vcmp.eq.f32.partialorder %v512, 8.507059e+37
  %v514 = vand.u32 %v420, 2147483648
  %v515 = vor.u32 1.1754944e-38, %v514
  %v516 = vsel %vm513, %v515, %v511
  %v517 = vmul.f32 1.0, %v516
  %v518 = vrcp.pop %v422
  %v519 = vmul.f32 %v422, %v518
  %v520 = vsub.f32 1.0, %v519
  %v521 = vmul.f32 %v518, %v520
  %v522 = vadd.f32 %v518, %v521
  %vm523 = vweird.f32 %v422
  %vm524 = vweird.f32 %v518
  %vm525 = vmor %vm523, %vm524
  %v526 = vsel %vm525, %v518, %v522
  %v527 = vand.u32 2147483647, %v422
  %vm528 = vcmp.eq.f32.partialorder %v527, 8.507059e+37
  %v529 = vand.u32 %v422, 2147483648
  %v530 = vor.u32 1.1754944e-38, %v529
  %v531 = vsel %vm528, %v530, %v526
  %v532 = vmul.f32 1.0, %v531
  %v533 = vrcp.pop %v424
  %v534 = vmul.f32 %v424, %v533
  %v535 = vsub.f32 1.0, %v534
  %v536 = vmul.f32 %v533, %v535
  %v537 = vadd.f32 %v533, %v536
  %vm538 = vweird.f32 %v424
  %vm539 = vweird.f32 %v533
  %vm540 = vmor %vm538, %vm539
  %v541 = vsel %vm540, %v533, %v537
  %v542 = vand.u32 2147483647, %v424
  %vm543 = vcmp.eq.f32.partialorder %v542, 8.507059e+37
  %v544 = vand.u32 %v424, 2147483648
  %v545 = vor.u32 1.1754944e-38, %v544
  %v546 = vsel %vm543, %v545, %v541
  %v547 = vmul.f32 1.0, %v546
  %v548 = vrcp.pop %v426
  %v549 = vmul.f32 %v426, %v548
  %v550 = vsub.f32 1.0, %v549
  %v551 = vmul.f32 %v548, %v550
  %v552 = vadd.f32 %v548, %v551
  %vm553 = vweird.f32 %v426
  %vm554 = vweird.f32 %v548
  %vm555 = vmor %vm553, %vm554
  %v556 = vsel %vm555, %v548, %v552
  %v557 = vand.u32 2147483647, %v426
  %vm558 = vcmp.eq.f32.partialorder %v557, 8.507059e+37
  %v559 = vand.u32 %v426, 2147483648
  %v560 = vor.u32 1.1754944e-38, %v559
  %v561 = vsel %vm558, %v560, %v556
  %v562 = vmul.f32 1.0, %v561
  %v563 = vrcp.pop %v428
  %v564 = vmul.f32 %v428, %v563
  %v565 = vsub.f32 1.0, %v564
  %v566 = vmul.f32 %v563, %v565
  %v567 = vadd.f32 %v563, %v566
  %vm568 = vweird.f32 %v428
  %vm569 = vweird.f32 %v563
  %vm570 = vmor %vm568, %vm569
  %v571 = vsel %vm570, %v563, %v567
  %v572 = vand.u32 2147483647, %v428
  %vm573 = vcmp.eq.f32.partialorder %v572, 8.507059e+37
  %v574 = vand.u32 %v428, 2147483648
  %v575 = vor.u32 1.1754944e-38, %v574
  %v576 = vsel %vm573, %v575, %v571
  %v577 = vmul.f32 1.0, %v576
  %v578 = vrcp.pop %v430
  %v579 = vmul.f32 %v430, %v578
  %v580 = vsub.f32 1.0, %v579
  %v581 = vmul.f32 %v578, %v580
  %v582 = vadd.f32 %v578, %v581
  %vm583 = vweird.f32 %v430
  %vm584 = vweird.f32 %v578
  %vm585 = vmor %vm583, %vm584
  %v586 = vsel %vm585, %v578, %v582
  %v587 = vand.u32 2147483647, %v430
  %vm588 = vcmp.eq.f32.partialorder %v587, 8.507059e+37
  %v589 = vand.u32 %v430, 2147483648
  %v590 = vor.u32 1.1754944e-38, %v589
  %v591 = vsel %vm588, %v590, %v586
  %v592 = vmul.f32 1.0, %v591
  %v593 = vrcp.pop %v432
  %v594 = vmul.f32 %v432, %v593
  %v595 = vsub.f32 1.0, %v594
  %v596 = vmul.f32 %v593, %v595
  %v597 = vadd.f32 %v593, %v596
  %vm598 = vweird.f32 %v432
  %vm599 = vweird.f32 %v593
  %vm600 = vmor %vm598, %vm599
  %v601 = vsel %vm600, %v593, %v597
  %v602 = vand.u32 2147483647, %v432
  %vm603 = vcmp.eq.f32.partialorder %v602, 8.507059e+37
  %v604 = vand.u32 %v432, 2147483648
  %v605 = vor.u32 1.1754944e-38, %v604
  %v606 = vsel %vm603, %v605, %v601
  %v607 = vmul.f32 1.0, %v606
  %v608 = vrcp.pop %v434
  %v609 = vmul.f32 %v434, %v608
  %v610 = vsub.f32 1.0, %v609
  %v611 = vmul.f32 %v608, %v610
  %v612 = vadd.f32 %v608, %v611
  %vm613 = vweird.f32 %v434
  %vm614 = vweird.f32 %v608
  %vm615 = vmor %vm613, %vm614
  %v616 = vsel %vm615, %v608, %v612
  %v617 = vand.u32 2147483647, %v434
  %vm618 = vcmp.eq.f32.partialorder %v617, 8.507059e+37
  %v619 = vand.u32 %v434, 2147483648
  %v620 = vor.u32 1.1754944e-38, %v619
  %v621 = vsel %vm618, %v620, %v616
  %v622 = vmul.f32 1.0, %v621
  %v623 = vrcp.pop %v436
  %v624 = vmul.f32 %v436, %v623
  %v625 = vsub.f32 1.0, %v624
  %v626 = vmul.f32 %v623, %v625
  %v627 = vadd.f32 %v623, %v626
  %vm628 = vweird.f32 %v436
  %vm629 = vweird.f32 %v623
  %vm630 = vmor %vm628, %vm629
  %v631 = vsel %vm630, %v623, %v627
  %v632 = vand.u32 2147483647, %v436
  %vm633 = vcmp.eq.f32.partialorder %v632, 8.507059e+37
  %v634 = vand.u32 %v436, 2147483648
  %v635 = vor.u32 1.1754944e-38, %v634
  %v636 = vsel %vm633, %v635, %v631
  %v637 = vmul.f32 1.0, %v636
  %v638 = vrcp.pop %v438
  %v639 = vmul.f32 %v438, %v638
  %v640 = vsub.f32 1.0, %v639
  %v641 = vmul.f32 %v638, %v640
  %v642 = vadd.f32 %v638, %v641
  %vm643 = vweird.f32 %v438
  %vm644 = vweird.f32 %v638
  %vm645 = vmor %vm643, %vm644
  %v646 = vsel %vm645, %v638, %v642
  %v647 = vand.u32 2147483647, %v438
  %vm648 = vcmp.eq.f32.partialorder %v647, 8.507059e+37
  %v649 = vand.u32 %v438, 2147483648
  %v650 = vor.u32 1.1754944e-38, %v649
  %v651 = vsel %vm648, %v650, %v646
  %v652 = vmul.f32 1.0, %v651
  %v653 = vrcp.pop %v440
  %v654 = vmul.f32 %v440, %v653
  %v655 = vsub.f32 1.0, %v654
  %v656 = vmul.f32 %v653, %v655
  %v657 = vadd.f32 %v653, %v656
  %vm658 = vweird.f32 %v440
  %vm659 = vweird.f32 %v653
  %vm660 = vmor %vm658, %vm659
  %v661 = vsel %vm660, %v653, %v657
  %v662 = vand.u32 2147483647, %v440
  %vm663 = vcmp.eq.f32.partialorder %v662, 8.507059e+37
  %v664 = vand.u32 %v440, 2147483648
  %v665 = vor.u32 1.1754944e-38, %v664
  %v666 = vsel %vm663, %v665, %v661
  %v667 = vmul.f32 1.0, %v666
  %v668 = vrcp.pop %v442
  %v669 = vmul.f32 %v442, %v668
  %v670 = vsub.f32 1.0, %v669
  %v671 = vmul.f32 %v668, %v670
  %v672 = vadd.f32 %v668, %v671
  %vm673 = vweird.f32 %v442
  %vm674 = vweird.f32 %v668
  %vm675 = vmor %vm673, %vm674
  %v676 = vsel %vm675, %v668, %v672
  %v677 = vand.u32 2147483647, %v442
  %vm678 = vcmp.eq.f32.partialorder %v677, 8.507059e+37
  %v679 = vand.u32 %v442, 2147483648
  %v680 = vor.u32 1.1754944e-38, %v679
  %v681 = vsel %vm678, %v680, %v676
  %v682 = vmul.f32 1.0, %v681
  %v683 = vmul.f32 %v380, %v457
  %v684 = vmul.f32 %v382, %v472
  %v685 = vmul.f32 %v384, %v487
  %v686 = vmul.f32 %v386, %v502
  %v687 = vmul.f32 %v388, %v517
  %v688 = vmul.f32 %v390, %v532
  %v689 = vmul.f32 %v392, %v547
  %v690 = vmul.f32 %v394, %v562
  %v691 = vmul.f32 %v396, %v577
  %v692 = vmul.f32 %v398, %v592
  %v693 = vmul.f32 %v400, %v607
  %v694 = vmul.f32 %v402, %v622
  %v695 = vmul.f32 %v404, %v637
  %v696 = vmul.f32 %v406, %v652
  %v697 = vmul.f32 %v408, %v667
  %v698 = vmul.f32 %v410, %v682
  %699 = vst [vmem:[%s3] sm:$0xff] %v683
  %700 = vst [vmem:[%s3 + $0x8] sm:$0xff] %v684
  %701 = vst [vmem:[%s3 + $0x10] sm:$0xff] %v685
  %702 = vst [vmem:[%s3 + $0x18] sm:$0xff] %v686
  %703 = vst [vmem:[%s3 + $0x20] sm:$0xff] %v687
  %704 = vst [vmem:[%s3 + $0x28] sm:$0xff] %v688
  %705 = vst [vmem:[%s3 + $0x30] sm:$0xff] %v689
  %706 = vst [vmem:[%s3 + $0x38] sm:$0xff] %v690
  %707 = vst [vmem:[%s3 + $0x40] sm:$0xff] %v691
  %708 = vst [vmem:[%s3 + $0x48] sm:$0xff] %v692
  %709 = vst [vmem:[%s3 + $0x50] sm:$0xff] %v693
  %710 = vst [vmem:[%s3 + $0x58] sm:$0xff] %v694
  %711 = vst [vmem:[%s3 + $0x60] sm:$0xff] %v695
  %712 = vst [vmem:[%s3 + $0x68] sm:$0xff] %v696
  %713 = vst [vmem:[%s3 + $0x70] sm:$0xff] %v697
  %714 = vst [vmem:[%s3 + $0x78] sm:$0xff] %v698
  // Predicated region
  $region14: #{densenet2_forward.11} parent=0 // pred_check
    _
  $region15: #{densenet2_forward.11} parent=0 // pred_check_branch
    %716 = sbr.rel (0) target = $region17
  $region16: #{densenet2_forward.11} parent=0 // pred_region
    _
  $region17: #{densenet2_forward.11} parent=0 // pred_fallthru
    _
  // Predicated region
  $region18: #{densenet2_forward.11} parent=0 // pred_check
    _
  $region19: #{densenet2_forward.11} parent=0 // pred_check_branch
    %718 = sbr.rel (0) target = $region21
  $region20: #{densenet2_forward.11} parent=0 // pred_region
    _
  $region21: #{densenet2_forward.11} parent=0 // pred_fallthru
    _

// kernel: densenet2_forward.9
$region0: #{densenet2_forward.9}
  #allocation0 [shape = 'u32[]', space=smem, size = 0x4, offset = 0x4, fixed_abs, tag = 'smem constant byte address 0x4 - core index']
  #allocation1 [shape = 'u32[72,128]{1,0:T(1,128)}', space=vmem, size = 0x9000, scoped, tag = 'internal scratch']
  %s0 = inlined_call_operand.vmem [shape: bf16[128,128], index: 0, kind: input, shape index: {}, may-alias: {0,1}]
  %s1 = inlined_call_operand.vmem [shape: bf16[128,128], index: 1, kind: input, shape index: {}, may-alias: {0,1}]
  %s2 = inlined_call_operand.vmem [shape: bf16[128,128], index: 2, kind: output, shape index: {}]
  %s3 = sld [smem:[#allocation0]]
  $region18: #{densenet2_forward.9} parent=0
    _
  %s5 = ssub.s32 1, %s3
  %s6 = scalar_select 0, %s5, %s3
  // Predicated region
  $region2: #{densenet2_forward.9} parent=0 // pred_check
    _
  $region3: #{densenet2_forward.9} parent=0 // pred_check_branch
    %8 = sbr.rel (0) target = $region5
  $region4: #{densenet2_forward.9} parent=0 // pred_region
    _
  $region5: #{densenet2_forward.9} parent=0 // pred_fallthru
    _
  // Predicated region
  $region6: #{densenet2_forward.9} parent=0 // pred_check
    _
  $region7: #{densenet2_forward.9} parent=0 // pred_check_branch
    %10 = sbr.rel (0) target = $region9
  $region8: #{densenet2_forward.9} parent=0 // pred_region
    _
  $region9: #{densenet2_forward.9} parent=0 // pred_fallthru
    _
  %v11 = vld [vmem:[%s0] sm:$0xf]
  %v12 = vld [vmem:[%s0 + $0x4] sm:$0xf]
  %v13 = vld [vmem:[%s0 + $0x8] sm:$0xf]
  %v14 = vld [vmem:[%s0 + $0xc] sm:$0xf]
  %v15 = vld [vmem:[%s0 + $0x10] sm:$0xf]
  %v16 = vld [vmem:[%s0 + $0x14] sm:$0xf]
  %v17 = vld [vmem:[%s0 + $0x18] sm:$0xf]
  %v18 = vld [vmem:[%s0 + $0x1c] sm:$0xf]
  %v19 = vld [vmem:[%s0 + $0x20] sm:$0xf]
  %v20 = vld [vmem:[%s0 + $0x24] sm:$0xf]
  %v21 = vld [vmem:[%s0 + $0x28] sm:$0xf]
  %v22 = vld [vmem:[%s0 + $0x2c] sm:$0xf]
  %v23 = vld [vmem:[%s0 + $0x30] sm:$0xf]
  %v24 = vld [vmem:[%s0 + $0x34] sm:$0xf]
  %v25 = vld [vmem:[%s0 + $0x38] sm:$0xf]
  %v26 = vld [vmem:[%s0 + $0x3c] sm:$0xf]
  %v27 = vld [vmem:[%s1] sm:$0xf]
  %v28 = vld [vmem:[%s1 + $0x4] sm:$0xf]
  %v29 = vld [vmem:[%s1 + $0x8] sm:$0xf]
  %v30 = vld [vmem:[%s1 + $0xc] sm:$0xf]
  %v31 = vld [vmem:[%s1 + $0x10] sm:$0xf]
  %v32 = vld [vmem:[%s1 + $0x14] sm:$0xf]
  %v33 = vld [vmem:[%s1 + $0x18] sm:$0xf]
  %v34 = vld [vmem:[%s1 + $0x1c] sm:$0xf]
  %v35 = vld [vmem:[%s1 + $0x20] sm:$0xf]
  %v36 = vld [vmem:[%s1 + $0x24] sm:$0xf]
  %v37 = vld [vmem:[%s1 + $0x28] sm:$0xf]
  %v38 = vld [vmem:[%s1 + $0x2c] sm:$0xf]
  %v39 = vld [vmem:[%s1 + $0x30] sm:$0xf]
  %v40 = vld [vmem:[%s1 + $0x34] sm:$0xf]
  %v41 = vld [vmem:[%s1 + $0x38] sm:$0xf]
  %v42 = vld [vmem:[%s1 + $0x3c] sm:$0xf]
  %v59 = vunpack.c.l.b16 %v11
  %v60 = vunpack.c.l.b16 %v12
  %v61 = vunpack.c.l.b16 %v13
  %v62 = vunpack.c.l.b16 %v14
  %v63 = vunpack.c.l.b16 %v15
  %v64 = vunpack.c.l.b16 %v16
  %v65 = vunpack.c.l.b16 %v17
  %v66 = vunpack.c.l.b16 %v18
  %v67 = vunpack.c.l.b16 %v19
  %v68 = vunpack.c.l.b16 %v20
  %v69 = vunpack.c.l.b16 %v21
  %v70 = vunpack.c.l.b16 %v22
  %v71 = vunpack.c.l.b16 %v23
  %v72 = vunpack.c.l.b16 %v24
  %v73 = vunpack.c.l.b16 %v25
  %v74 = vunpack.c.l.b16 %v26
  %v75 = vpack.c.b16 %v60, %v59
  %v76 = vpack.c.b16 %v62, %v61
  %v77 = vpack.c.b16 %v64, %v63
  %v78 = vpack.c.b16 %v66, %v65
  %v79 = vpack.c.b16 %v68, %v67
  %v80 = vpack.c.b16 %v70, %v69
  %v81 = vpack.c.b16 %v72, %v71
  %v82 = vpack.c.b16 %v74, %v73
  %v107 = vunpack.c.l.b16 %v27
  %v108 = vunpack.c.l.b16 %v28
  %v109 = vunpack.c.l.b16 %v29
  %v110 = vunpack.c.l.b16 %v30
  %v111 = vunpack.c.l.b16 %v31
  %v112 = vunpack.c.l.b16 %v32
  %v113 = vunpack.c.l.b16 %v33
  %v114 = vunpack.c.l.b16 %v34
  %v115 = vunpack.c.l.b16 %v35
  %v116 = vunpack.c.l.b16 %v36
  %v117 = vunpack.c.l.b16 %v37
  %v118 = vunpack.c.l.b16 %v38
  %v119 = vunpack.c.l.b16 %v39
  %v120 = vunpack.c.l.b16 %v40
  %v121 = vunpack.c.l.b16 %v41
  %v122 = vunpack.c.l.b16 %v42
  %v123 = vpack.c.b16 %v108, %v107
  %v124 = vpack.c.b16 %v110, %v109
  %v125 = vpack.c.b16 %v112, %v111
  %v126 = vpack.c.b16 %v114, %v113
  %v127 = vpack.c.b16 %v116, %v115
  %v128 = vpack.c.b16 %v118, %v117
  %v129 = vpack.c.b16 %v120, %v119
  %v130 = vpack.c.b16 %v122, %v121
  %139 = vmatpush.bf16.xpose.msra.mxu0 %v130
  %140 = vmatpush.bf16.xpose.msra.mxu0 %v129
  %141 = vmatpush.bf16.xpose.msra.mxu0 %v128
  %142 = vmatpush.bf16.xpose.msra.mxu0 %v127
  %143 = vmatpush.bf16.xpose.msra.mxu0 %v126
  %144 = vmatpush.bf16.xpose.msra.mxu0 %v125
  %145 = vmatpush.bf16.xpose.msra.mxu0 %v124
  %146 = vmatpush.bf16.xpose.msra.mxu0 %v123
  %147 = vmatmul.bf16.gmra.mxu0 %v75
  %v148 = vpop.f32.mrf.mxu0
  %v149 = vadd.f32 0.0, %v148
  %v150 = vpop.f32.mrf.mxu0
  %v151 = vadd.f32 0.0, %v150
  %152 = vmatmul.bf16.gmra.mxu0 %v76
  %v153 = vpop.f32.mrf.mxu0
  %v154 = vadd.f32 0.0, %v153
  %v155 = vpop.f32.mrf.mxu0
  %v156 = vadd.f32 0.0, %v155
  %157 = vmatmul.bf16.gmra.mxu0 %v77
  %v158 = vpop.f32.mrf.mxu0
  %v159 = vadd.f32 0.0, %v158
  %v160 = vpop.f32.mrf.mxu0
  %v161 = vadd.f32 0.0, %v160
  %162 = vmatmul.bf16.gmra.mxu0 %v78
  %v163 = vpop.f32.mrf.mxu0
  %v164 = vadd.f32 0.0, %v163
  %v165 = vpop.f32.mrf.mxu0
  %v166 = vadd.f32 0.0, %v165
  %167 = vmatmul.bf16.gmra.mxu0 %v79
  %v168 = vpop.f32.mrf.mxu0
  %v169 = vadd.f32 0.0, %v168
  %v170 = vpop.f32.mrf.mxu0
  %v171 = vadd.f32 0.0, %v170
  %172 = vmatmul.bf16.gmra.mxu0 %v80
  %v173 = vpop.f32.mrf.mxu0
  %v174 = vadd.f32 0.0, %v173
  %v175 = vpop.f32.mrf.mxu0
  %v176 = vadd.f32 0.0, %v175
  %177 = vmatmul.bf16.gmra.mxu0 %v81
  %v178 = vpop.f32.mrf.mxu0
  %v179 = vadd.f32 0.0, %v178
  %v180 = vpop.f32.mrf.mxu0
  %v181 = vadd.f32 0.0, %v180
  %182 = vmatmul.bf16.gmra.mxu0 %v82
  %v183 = vpop.f32.mrf.mxu0
  %v184 = vadd.f32 0.0, %v183
  %v185 = vpop.f32.mrf.mxu0
  %v186 = vadd.f32 0.0, %v185
  %187 = vdwg.mxu0
  %v188 = vmul.f32 %v149, 0.5
  %v189 = vmul.f32 %v151, 0.5
  %v190 = vmul.f32 %v154, 0.5
  %v191 = vmul.f32 %v156, 0.5
  %v192 = vmul.f32 %v159, 0.5
  %v193 = vmul.f32 %v161, 0.5
  %v194 = vmul.f32 %v164, 0.5
  %v195 = vmul.f32 %v166, 0.5
  %v196 = vmul.f32 %v169, 0.5
  %v197 = vmul.f32 %v171, 0.5
  %v198 = vmul.f32 %v174, 0.5
  %v199 = vmul.f32 %v176, 0.5
  %v200 = vmul.f32 %v179, 0.5
  %v201 = vmul.f32 %v181, 0.5
  %v202 = vmul.f32 %v184, 0.5
  %v203 = vmul.f32 %v186, 0.5
  %v204 = vtanh.pop %v188
  %v205 = vtanh.pop %v189
  %v206 = vtanh.pop %v190
  %v207 = vtanh.pop %v191
  %v208 = vtanh.pop %v192
  %v209 = vtanh.pop %v193
  %v210 = vtanh.pop %v194
  %v211 = vtanh.pop %v195
  %v212 = vtanh.pop %v196
  %v213 = vtanh.pop %v197
  %v214 = vtanh.pop %v198
  %v215 = vtanh.pop %v199
  %v216 = vtanh.pop %v200
  %v217 = vtanh.pop %v201
  %v218 = vtanh.pop %v202
  %v219 = vtanh.pop %v203
  %v220 = vmul.f32 %v204, 0.5
  %v221 = vmul.f32 %v205, 0.5
  %v222 = vmul.f32 %v206, 0.5
  %v223 = vmul.f32 %v207, 0.5
  %v224 = vmul.f32 %v208, 0.5
  %v225 = vmul.f32 %v209, 0.5
  %v226 = vmul.f32 %v210, 0.5
  %v227 = vmul.f32 %v211, 0.5
  %v228 = vmul.f32 %v212, 0.5
  %v229 = vmul.f32 %v213, 0.5
  %v230 = vmul.f32 %v214, 0.5
  %v231 = vmul.f32 %v215, 0.5
  %v232 = vmul.f32 %v216, 0.5
  %v233 = vmul.f32 %v217, 0.5
  %v234 = vmul.f32 %v218, 0.5
  %v235 = vmul.f32 %v219, 0.5
  %v236 = vadd.f32 %v220, 0.5
  %v237 = vadd.f32 %v221, 0.5
  %v238 = vadd.f32 %v222, 0.5
  %v239 = vadd.f32 %v223, 0.5
  %v240 = vadd.f32 %v224, 0.5
  %v241 = vadd.f32 %v225, 0.5
  %v242 = vadd.f32 %v226, 0.5
  %v243 = vadd.f32 %v227, 0.5
  %v244 = vadd.f32 %v228, 0.5
  %v245 = vadd.f32 %v229, 0.5
  %v246 = vadd.f32 %v230, 0.5
  %v247 = vadd.f32 %v231, 0.5
  %v248 = vadd.f32 %v232, 0.5
  %v249 = vadd.f32 %v233, 0.5
  %v250 = vadd.f32 %v234, 0.5
  %v251 = vadd.f32 %v235, 0.5
  %v252 = vpack.c.bf16 %v236, %v236
  %v253 = vpack.c.bf16 %v237, %v237
  %v254 = vpack.c.bf16 %v238, %v238
  %v255 = vpack.c.bf16 %v239, %v239
  %v256 = vpack.c.bf16 %v240, %v240
  %v257 = vpack.c.bf16 %v241, %v241
  %v258 = vpack.c.bf16 %v242, %v242
  %v259 = vpack.c.bf16 %v243, %v243
  %v260 = vpack.c.bf16 %v244, %v244
  %v261 = vpack.c.bf16 %v245, %v245
  %v262 = vpack.c.bf16 %v246, %v246
  %v263 = vpack.c.bf16 %v247, %v247
  %v264 = vpack.c.bf16 %v248, %v248
  %v265 = vpack.c.bf16 %v249, %v249
  %v266 = vpack.c.bf16 %v250, %v250
  %v267 = vpack.c.bf16 %v251, %v251
  %268 = vst [vmem:[%s2] sm:$0xf] %v252
  %269 = vst [vmem:[%s2 + $0x4] sm:$0xf] %v253
  %270 = vst [vmem:[%s2 + $0x8] sm:$0xf] %v254
  %271 = vst [vmem:[%s2 + $0xc] sm:$0xf] %v255
  %272 = vst [vmem:[%s2 + $0x10] sm:$0xf] %v256
  %273 = vst [vmem:[%s2 + $0x14] sm:$0xf] %v257
  %274 = vst [vmem:[%s2 + $0x18] sm:$0xf] %v258
  %275 = vst [vmem:[%s2 + $0x1c] sm:$0xf] %v259
  %276 = vst [vmem:[%s2 + $0x20] sm:$0xf] %v260
  %277 = vst [vmem:[%s2 + $0x24] sm:$0xf] %v261
  %278 = vst [vmem:[%s2 + $0x28] sm:$0xf] %v262
  %279 = vst [vmem:[%s2 + $0x2c] sm:$0xf] %v263
  %280 = vst [vmem:[%s2 + $0x30] sm:$0xf] %v264
  %281 = vst [vmem:[%s2 + $0x34] sm:$0xf] %v265
  %282 = vst [vmem:[%s2 + $0x38] sm:$0xf] %v266
  %283 = vst [vmem:[%s2 + $0x3c] sm:$0xf] %v267
  // Predicated region
  $region10: #{densenet2_forward.9} parent=0 // pred_check
    _
  $region11: #{densenet2_forward.9} parent=0 // pred_check_branch
    %285 = sbr.rel (0) target = $region13
  $region12: #{densenet2_forward.9} parent=0 // pred_region
    _
  $region13: #{densenet2_forward.9} parent=0 // pred_fallthru
    _
  // Predicated region
  $region14: #{densenet2_forward.9} parent=0 // pred_check
    _
  $region15: #{densenet2_forward.9} parent=0 // pred_check_branch
    %287 = sbr.rel (0) target = $region17
  $region16: #{densenet2_forward.9} parent=0 // pred_region
    _
  $region17: #{densenet2_forward.9} parent=0 // pred_fallthru
    _

</llo_original>
